<compile_context>
chip_gen: v7x
topology: tpu7x:2x2x1
jax: 0.10.0
libtpu: 0.0.40
codegen_flags: <defaults>
</compile_context>

<pallas_src>
import math

import jax
import jax.numpy as jnp
from jax.experimental import pallas as pl
from jax.experimental.pallas import tpu as pltpu

NUM_HEADS = 4
LN_EPS = 1e-5


def _layernorm(v, g, b):
    mu = jnp.mean(v, axis=-1, keepdims=True)
    var = jnp.mean((v - mu) ** 2, axis=-1, keepdims=True)
    return (v - mu) * jax.lax.rsqrt(var + LN_EPS) * g + b


def _gelu_exact(v):
    # nn.GELU() default in PyTorch is the exact (erf) form; kept exact for
    # numerical fidelity (tanh/EUP approximation would trade accuracy).
    return 0.5 * v * (1.0 + jax.lax.erf(v * (1.0 / math.sqrt(2.0))))


def self_attention_kernel(x_ref, wqkv_ref, bqkv_ref, wo_ref, w1_ref, w2_ref,
                          vec_ref, o_ref):
    Bblk, S, C = x_ref.shape
    Dh = C // NUM_HEADS
    M = Bblk * S

    # Packed per-channel vectors: one DMA stream instead of seven.
    ln1g = vec_ref[0:1, :]
    ln1b = vec_ref[1:2, :]
    bo   = vec_ref[2:3, :]
    ln2g = vec_ref[3:4, :]
    ln2b = vec_ref[4:5, :]
    b1   = vec_ref[5:6, :]
    b2   = vec_ref[6:7, :]

    x3 = x_ref[...]                       # (Bblk, S, C)
    x2 = x3.reshape(M, C)                 # fold batch into the matmul M dim

    # --- LayerNorm + fused QKV projection: one (M,C)@(C,3C) MXU op ---
    x_ln = _layernorm(x2, ln1g, ln1b)
    qkv = jnp.dot(x_ln, wqkv_ref[...],
                  preferred_element_type=jnp.float32) + bqkv_ref[...]

    # 1/sqrt(Dh) was folded into Wq/bq at pack time -> no in-kernel scaling.
    q = qkv[:, 0 * C:1 * C].reshape(Bblk, S, C)
    k = qkv[:, 1 * C:2 * C].reshape(Bblk, S, C)
    v = qkv[:, 2 * C:3 * C].reshape(Bblk, S, C)

    # --- multi-head attention, batched over the Bblk dim per head ---
    # TODO(synk): for large S (>=1024) switch to a streamed/flash-style K-loop
    # so the (S,S) score tile never exceeds the v7x VMEM budget.
    heads = []
    for h in range(NUM_HEADS):
        sl = slice(h * Dh, (h + 1) * Dh)
        qh, kh, vh = q[:, :, sl], k[:, :, sl], v[:, :, sl]
        s = jnp.einsum("bqd,bkd->bqk", qh, kh,
                       preferred_element_type=jnp.float32)        # (Bblk,S,S)
        s = s - jnp.max(s, axis=-1, keepdims=True)
        p = jnp.exp(s)
        # EUP reciprocal + VALU multiply instead of an (S,S) divide.
        p = p * pl.reciprocal(jnp.sum(p, axis=-1, keepdims=True), approx=True)
        heads.append(jnp.einsum("bqk,bkd->bqd", p, vh,
                                preferred_element_type=jnp.float32))

    # Materialize heads contiguously and do ONE K=C out-projection matmul.
    attn = jnp.concatenate(heads, axis=-1).reshape(M, C)
    attn = jnp.dot(attn, wo_ref[...],
                   preferred_element_type=jnp.float32) + bo

    # --- residual 1 ---
    av = attn + x2

    # --- feed-forward: LayerNorm -> Linear -> GELU -> Linear, residual 2 ---
    ff = _layernorm(av, ln2g, ln2b)
    ff = jnp.dot(ff, w1_ref[...], preferred_element_type=jnp.float32) + b1
    ff = _gelu_exact(ff)
    ff = jnp.dot(ff, w2_ref[...], preferred_element_type=jnp.float32) + b2

    o_ref[...] = (ff + av).reshape(Bblk, S, C)


def _dual_tensorcore():
    """True on chips with 2 TensorCores per device (v7x): keep B as a parallel
    grid axis there; on single-TC v5e/v6e fold B into one grid step."""
    try:
        kind = jax.devices()[0].device_kind.lower()
    except Exception:
        return False
    return "7" in kind


def pack_params(params):
    """Pack raw module params into MXU/DMA-friendly shapes (done once by XLA
    outside the kernel): fused pre-transposed QKV (with the attention scale
    folded into the Q slice), pre-transposed dense weights, and all
    per-channel vectors stacked into one (8, C) slab."""
    (ln1g, ln1b, wq, bq, wk, bk, wv, bv, wo, bo,
     ln2g, ln2b, w1, b1, w2, b2) = params
    C = wq.shape[0]
    scale = 1.0 / math.sqrt(C // NUM_HEADS)
    w_qkv_t = jnp.concatenate([wq * scale, wk, wv], axis=0).T     # (C, 3C)
    b_qkv = jnp.concatenate([bq * scale, bk, bv], axis=1)          # (1, 3C)
    wo_t, w1_t, w2_t = wo.T, w1.T, w2.T                            # (C, C) each
    vecs = jnp.concatenate(
        [ln1g, ln1b, bo, ln2g, ln2b, b1, b2,
         jnp.zeros((1, C), jnp.float32)], axis=0)                  # (8, C)
    packed = (w_qkv_t, b_qkv, wo_t, w1_t, w2_t, vecs)
    for p in packed:
        assert p.ndim == 2, "all packed params must be 2-D"
    return packed


def _cost_estimate(B, S, C):
    M = B * S
    flops = 2 * M * C * (3 * C)            # fused QKV projection
    flops += 2 * 2 * B * S * S * C         # scores + probs@V (all heads)
    flops += 3 * 2 * M * C * C             # out-proj + two FFN matmuls
    transcendentals = B * NUM_HEADS * S * S + M * C + 2 * M
    bytes_accessed = 4 * (2 * M * C + 6 * C * C + 3 * C + 8 * C)
    return pl.CostEstimate(flops=flops, transcendentals=transcendentals,
                           bytes_accessed=bytes_accessed)


def self_attention_forward(x, params):
    B, C, H, W = x.shape
    S = H * W
    x_seq = jnp.swapaxes(x.reshape(B, C, S), 1, 2)           # (B, S, C)

    packed = pack_params(params)

    bblk = 1 if (_dual_tensorcore() and B > 1) else B
    if B % bblk:
        bblk = 1
    grid = (B // bblk,)

    def w_spec(p):
        return pl.BlockSpec(p.shape, lambda b: (0, 0))

    in_specs = [pl.BlockSpec((bblk, S, C), lambda b: (b, 0, 0))]
    in_specs += [w_spec(p) for p in packed]

    out = pl.pallas_call(
        self_attention_kernel,
        out_shape=jax.ShapeDtypeStruct((B, S, C), jnp.float32),
        grid=grid,
        in_specs=in_specs,
        out_specs=pl.BlockSpec((bblk, S, C), lambda b: (b, 0, 0)),
        input_output_aliases={0: 0},   # donate the staging (B,S,C) buffer
        compiler_params=pltpu.CompilerParams(
            dimension_semantics=("parallel",)),
        cost_estimate=_cost_estimate(B, S, C),
    )(x_seq, *packed)

    return jnp.swapaxes(out, 1, 2).reshape(B, C, H, W)


def init_params(key, C):
    ks = jax.random.split(key, 12)
    w = lambda k, shape, s=0.05: (jax.random.normal(k, shape, jnp.float32) * s)

    in_proj_w = w(ks[0], (3 * C, C))
    in_proj_b = w(ks[1], (3 * C,))
    wq, wk, wv = in_proj_w[:C], in_proj_w[C:2 * C], in_proj_w[2 * C:]
    bq, bk, bv = in_proj_b[:C], in_proj_b[C:2 * C], in_proj_b[2 * C:]

    params = (
        1.0 + w(ks[2], (1, C), 0.1),      # ln1 gamma
        w(ks[3], (1, C), 0.1),            # ln1 beta
        wq, bq.reshape(1, C),
        wk, bk.reshape(1, C),
        wv, bv.reshape(1, C),
        w(ks[4], (C, C)),                 # out_proj weight
        w(ks[5], (1, C), 0.05),           # out_proj bias
        1.0 + w(ks[6], (1, C), 0.1),      # ln2 gamma (ff_self LayerNorm)
        w(ks[7], (1, C), 0.1),            # ln2 beta
        w(ks[8], (C, C)),                 # ff linear1 weight
        w(ks[9], (1, C), 0.05),           # ff linear1 bias
        w(ks[10], (C, C)),                # ff linear2 weight
        w(ks[11], (1, C), 0.05),          # ff linear2 bias
    )
    return params


def reference_forward(x, params):
    (ln1g, ln1b, wq, bq, wk, bk, wv, bv, wo, bo,
     ln2g, ln2b, w1, b1, w2, b2) = params
    B, C, H, W = x.shape
    S = H * W
    Dh = C // NUM_HEADS
    xs = jnp.swapaxes(x.reshape(B, C, S), 1, 2)               # (B, S, C)

    x_ln = _layernorm(xs, ln1g, ln1b)
    q = (x_ln @ wq.T + bq).reshape(B, S, NUM_HEADS, Dh).transpose(0, 2, 1, 3)
    k = (x_ln @ wk.T + bk).reshape(B, S, NUM_HEADS, Dh).transpose(0, 2, 1, 3)
    v = (x_ln @ wv.T + bv).reshape(B, S, NUM_HEADS, Dh).transpose(0, 2, 1, 3)
    s = jnp.einsum("bhqd,bhkd->bhqk", q, k) / math.sqrt(Dh)
    p = jax.nn.softmax(s, axis=-1)
    o = jnp.einsum("bhqk,bhkd->bhqd", p, v).transpose(0, 2, 1, 3).reshape(B, S, C)
    attn = o @ wo.T + bo
    av = attn + xs
    ff = _layernorm(av, ln2g, ln2b)
    ff = ff @ w1.T + b1
    ff = _gelu_exact(ff)
    ff = ff @ w2.T + b2
    out = ff + av
    return jnp.swapaxes(out, 1, 2).reshape(B, C, H, W)


if __name__ == "__main__":
    B, C, size = 2, 32, 8           # channels divisible by 4 heads
    key = jax.random.PRNGKey(0)
    kx, kp = jax.random.split(key)
    x = jax.random.normal(kx, (B, C, size, size), jnp.float32)
    params = init_params(kp, C)

    out = jax.block_until_ready(self_attention_forward(x, params))
    ref = reference_forward(x, params)

    assert out.shape == (B, C, size, size)
    if not bool(jnp.allclose(out, ref, rtol=2e-3, atol=2e-3)):
        raise AssertionError("Pallas kernel output does not match reference")
    print("KERNEL_OK")
</pallas_src>

<mosaic_0001>
module attributes {stable_mosaic.version = 11 : i64} {
  func.func @self_attention_kernel(%arg0: i32, %arg1: memref<2x64x32xf32, #tpu.memory_space<vmem>>, %arg2: memref<32x96xf32, #tpu.memory_space<vmem>>, %arg3: memref<1x96xf32, #tpu.memory_space<vmem>>, %arg4: memref<32x32xf32, #tpu.memory_space<vmem>>, %arg5: memref<32x32xf32, #tpu.memory_space<vmem>>, %arg6: memref<32x32xf32, #tpu.memory_space<vmem>>, %arg7: memref<8x32xf32, #tpu.memory_space<vmem>>, %arg8: memref<2x64x32xf32, #tpu.memory_space<vmem>>) attributes {dimension_semantics = [#tpu.dimension_semantics<parallel>], iteration_bounds = array<i64: 1>, scalar_prefetch = 0 : i64, scratch_operands = 0 : i64, tpu.core_type = #tpu.core_type<tc>, window_params = [{transform_indices = @transform_0, window_bounds = array<i64: 2, 64, 32>}, {pipeline_mode = #tpu.pipeline_mode<synchronous>, transform_indices = @transform_1, window_bounds = array<i64: 32, 96>}, {pipeline_mode = #tpu.pipeline_mode<synchronous>, transform_indices = @transform_2, window_bounds = array<i64: 1, 96>}, {pipeline_mode = #tpu.pipeline_mode<synchronous>, transform_indices = @transform_3, window_bounds = array<i64: 32, 32>}, {pipeline_mode = #tpu.pipeline_mode<synchronous>, transform_indices = @transform_4, window_bounds = array<i64: 32, 32>}, {pipeline_mode = #tpu.pipeline_mode<synchronous>, transform_indices = @transform_5, window_bounds = array<i64: 32, 32>}, {pipeline_mode = #tpu.pipeline_mode<synchronous>, transform_indices = @transform_6, window_bounds = array<i64: 8, 32>}, {transform_indices = @transform_7, window_bounds = array<i64: 2, 64, 32>}]} {
    %c0 = arith.constant 0 : index
    %c0_0 = arith.constant 0 : index
    %0 = vector.load %arg7[%c0, %c0_0] : memref<8x32xf32, #tpu.memory_space<vmem>>, vector<1x32xf32>
    %c1 = arith.constant 1 : index
    %c0_1 = arith.constant 0 : index
    %1 = vector.load %arg7[%c1, %c0_1] : memref<8x32xf32, #tpu.memory_space<vmem>>, vector<1x32xf32>
    %c2 = arith.constant 2 : index
    %c0_2 = arith.constant 0 : index
    %2 = vector.load %arg7[%c2, %c0_2] : memref<8x32xf32, #tpu.memory_space<vmem>>, vector<1x32xf32>
    %c3 = arith.constant 3 : index
    %c0_3 = arith.constant 0 : index
    %3 = vector.load %arg7[%c3, %c0_3] : memref<8x32xf32, #tpu.memory_space<vmem>>, vector<1x32xf32>
    %c4 = arith.constant 4 : index
    %c0_4 = arith.constant 0 : index
    %4 = vector.load %arg7[%c4, %c0_4] : memref<8x32xf32, #tpu.memory_space<vmem>>, vector<1x32xf32>
    %c5 = arith.constant 5 : index
    %c0_5 = arith.constant 0 : index
    %5 = vector.load %arg7[%c5, %c0_5] : memref<8x32xf32, #tpu.memory_space<vmem>>, vector<1x32xf32>
    %c6 = arith.constant 6 : index
    %c0_6 = arith.constant 0 : index
    %6 = vector.load %arg7[%c6, %c0_6] : memref<8x32xf32, #tpu.memory_space<vmem>>, vector<1x32xf32>
    %c0_7 = arith.constant 0 : index
    %c0_8 = arith.constant 0 : index
    %c0_9 = arith.constant 0 : index
    %7 = vector.load %arg1[%c0_7, %c0_8, %c0_9] : memref<2x64x32xf32, #tpu.memory_space<vmem>>, vector<2x64x32xf32>
    %8 = vector.shape_cast %7 : vector<2x64x32xf32> to vector<128x32xf32>
    %cst = arith.constant dense<0.000000e+00> : vector<128xf32>
    %9 = vector.multi_reduction <add>, %8, %cst [1] : vector<128x32xf32> to vector<128xf32>
    %10 = vector.shape_cast %9 : vector<128xf32> to vector<128x1xf32>
    %cst_10 = arith.constant 3.200000e+01 : f32
    %11 = vector.broadcast %cst_10 : f32 to vector<128x1xf32>
    %12 = arith.divf %10, %11 : vector<128x1xf32>
    %13 = vector.broadcast %12 : vector<128x1xf32> to vector<128x32xf32>
    %14 = arith.subf %8, %13 : vector<128x32xf32>
    %15 = arith.mulf %14, %14 : vector<128x32xf32>
    %cst_11 = arith.constant dense<0.000000e+00> : vector<128xf32>
    %16 = vector.multi_reduction <add>, %15, %cst_11 [1] : vector<128x32xf32> to vector<128xf32>
    %17 = vector.shape_cast %16 : vector<128xf32> to vector<128x1xf32>
    %cst_12 = arith.constant 3.200000e+01 : f32
    %18 = vector.broadcast %cst_12 : f32 to vector<128x1xf32>
    %19 = arith.divf %17, %18 : vector<128x1xf32>
    %20 = vector.broadcast %12 : vector<128x1xf32> to vector<128x32xf32>
    %21 = arith.subf %8, %20 : vector<128x32xf32>
    %cst_13 = arith.constant 9.99999974E-6 : f32
    %22 = vector.broadcast %cst_13 : f32 to vector<128x1xf32>
    %23 = arith.addf %19, %22 : vector<128x1xf32>
    %24 = math.rsqrt %23 : vector<128x1xf32>
    %25 = vector.broadcast %24 : vector<128x1xf32> to vector<128x32xf32>
    %26 = arith.mulf %21, %25 : vector<128x32xf32>
    %27 = vector.broadcast %0 : vector<1x32xf32> to vector<128x32xf32>
    %28 = arith.mulf %26, %27 : vector<128x32xf32>
    %29 = vector.broadcast %1 : vector<1x32xf32> to vector<128x32xf32>
    %30 = arith.addf %28, %29 : vector<128x32xf32>
    %c0_14 = arith.constant 0 : index
    %c0_15 = arith.constant 0 : index
    %31 = vector.load %arg2[%c0_14, %c0_15] : memref<32x96xf32, #tpu.memory_space<vmem>>, vector<32x96xf32>
    %cst_16 = arith.constant dense<0.000000e+00> : vector<128x96xf32>
    %32 = tpu.matmul %30, %31, %cst_16 {dimension_numbers = #tpu.dot_dimension_numbers<[1], [0], [0], [1], [0, 0, 1, 1], [], []>} : vector<128x32xf32>, vector<32x96xf32>, vector<128x96xf32> -> vector<128x96xf32>
    %c0_17 = arith.constant 0 : index
    %c0_18 = arith.constant 0 : index
    %33 = vector.load %arg3[%c0_17, %c0_18] : memref<1x96xf32, #tpu.memory_space<vmem>>, vector<1x96xf32>
    %34 = vector.broadcast %33 : vector<1x96xf32> to vector<128x96xf32>
    %35 = arith.addf %32, %34 : vector<128x96xf32>
    %36 = vector.extract_strided_slice %35 {offsets = [0, 0], sizes = [128, 32], strides = [1, 1]} : vector<128x96xf32> to vector<128x32xf32>
    %37 = vector.shape_cast %36 : vector<128x32xf32> to vector<2x64x32xf32>
    %38 = vector.extract_strided_slice %35 {offsets = [0, 32], sizes = [128, 32], strides = [1, 1]} : vector<128x96xf32> to vector<128x32xf32>
    %39 = vector.shape_cast %38 : vector<128x32xf32> to vector<2x64x32xf32>
    %40 = vector.extract_strided_slice %35 {offsets = [0, 64], sizes = [128, 32], strides = [1, 1]} : vector<128x96xf32> to vector<128x32xf32>
    %41 = vector.shape_cast %40 : vector<128x32xf32> to vector<2x64x32xf32>
    %42 = vector.extract_strided_slice %37 {offsets = [0, 0, 0], sizes = [2, 64, 8], strides = [1, 1, 1]} : vector<2x64x32xf32> to vector<2x64x8xf32>
    %43 = vector.extract_strided_slice %39 {offsets = [0, 0, 0], sizes = [2, 64, 8], strides = [1, 1, 1]} : vector<2x64x32xf32> to vector<2x64x8xf32>
    %44 = vector.extract_strided_slice %41 {offsets = [0, 0, 0], sizes = [2, 64, 8], strides = [1, 1, 1]} : vector<2x64x32xf32> to vector<2x64x8xf32>
    "tpu.trace_start"() <{level = 10 : i32, message = "bqd,bkd->bqk"}> : () -> ()
    %cst_19 = arith.constant dense<0.000000e+00> : vector<2x64x64xf32>
    %45 = tpu.matmul %42, %43, %cst_19 {dimension_numbers = #tpu.dot_dimension_numbers<[2], [2], [1], [1], [0, 0, 0, 1, 1, 1], [0], [0]>} : vector<2x64x8xf32>, vector<2x64x8xf32>, vector<2x64x64xf32> -> vector<2x64x64xf32>
    "tpu.trace_stop"() : () -> ()
    %cst_20 = arith.constant dense<0xFF800000> : vector<2x64xf32>
    %46 = vector.multi_reduction <maximumf>, %45, %cst_20 [2] : vector<2x64x64xf32> to vector<2x64xf32>
    %47 = vector.shape_cast %46 : vector<2x64xf32> to vector<2x64x1xf32>
    %48 = vector.broadcast %47 : vector<2x64x1xf32> to vector<2x64x64xf32>
    %49 = arith.subf %45, %48 : vector<2x64x64xf32>
    %50 = math.exp %49 : vector<2x64x64xf32>
    %cst_21 = arith.constant dense<0.000000e+00> : vector<2x64xf32>
    %51 = vector.multi_reduction <add>, %50, %cst_21 [2] : vector<2x64x64xf32> to vector<2x64xf32>
    %52 = vector.shape_cast %51 : vector<2x64xf32> to vector<2x64x1xf32>
    %53 = tpu.reciprocal %52 {approx = true} : vector<2x64x1xf32> -> vector<2x64x1xf32>
    %54 = vector.broadcast %53 : vector<2x64x1xf32> to vector<2x64x64xf32>
    %55 = arith.mulf %50, %54 : vector<2x64x64xf32>
    "tpu.trace_start"() <{level = 10 : i32, message = "bqk,bkd->bqd"}> : () -> ()
    %cst_22 = arith.constant dense<0.000000e+00> : vector<2x64x8xf32>
    %56 = tpu.matmul %55, %44, %cst_22 {dimension_numbers = #tpu.dot_dimension_numbers<[2], [1], [1], [2], [0, 0, 0, 1, 1, 2], [0], [0]>} : vector<2x64x64xf32>, vector<2x64x8xf32>, vector<2x64x8xf32> -> vector<2x64x8xf32>
    "tpu.trace_stop"() : () -> ()
    %57 = vector.extract_strided_slice %37 {offsets = [0, 0, 8], sizes = [2, 64, 8], strides = [1, 1, 1]} : vector<2x64x32xf32> to vector<2x64x8xf32>
    %58 = vector.extract_strided_slice %39 {offsets = [0, 0, 8], sizes = [2, 64, 8], strides = [1, 1, 1]} : vector<2x64x32xf32> to vector<2x64x8xf32>
    %59 = vector.extract_strided_slice %41 {offsets = [0, 0, 8], sizes = [2, 64, 8], strides = [1, 1, 1]} : vector<2x64x32xf32> to vector<2x64x8xf32>
    "tpu.trace_start"() <{level = 10 : i32, message = "bqd,bkd->bqk"}> : () -> ()
    %cst_23 = arith.constant dense<0.000000e+00> : vector<2x64x64xf32>
    %60 = tpu.matmul %57, %58, %cst_23 {dimension_numbers = #tpu.dot_dimension_numbers<[2], [2], [1], [1], [0, 0, 0, 1, 1, 1], [0], [0]>} : vector<2x64x8xf32>, vector<2x64x8xf32>, vector<2x64x64xf32> -> vector<2x64x64xf32>
    "tpu.trace_stop"() : () -> ()
    %cst_24 = arith.constant dense<0xFF800000> : vector<2x64xf32>
    %61 = vector.multi_reduction <maximumf>, %60, %cst_24 [2] : vector<2x64x64xf32> to vector<2x64xf32>
    %62 = vector.shape_cast %61 : vector<2x64xf32> to vector<2x64x1xf32>
    %63 = vector.broadcast %62 : vector<2x64x1xf32> to vector<2x64x64xf32>
    %64 = arith.subf %60, %63 : vector<2x64x64xf32>
    %65 = math.exp %64 : vector<2x64x64xf32>
    %cst_25 = arith.constant dense<0.000000e+00> : vector<2x64xf32>
    %66 = vector.multi_reduction <add>, %65, %cst_25 [2] : vector<2x64x64xf32> to vector<2x64xf32>
    %67 = vector.shape_cast %66 : vector<2x64xf32> to vector<2x64x1xf32>
    %68 = tpu.reciprocal %67 {approx = true} : vector<2x64x1xf32> -> vector<2x64x1xf32>
    %69 = vector.broadcast %68 : vector<2x64x1xf32> to vector<2x64x64xf32>
    %70 = arith.mulf %65, %69 : vector<2x64x64xf32>
    "tpu.trace_start"() <{level = 10 : i32, message = "bqk,bkd->bqd"}> : () -> ()
    %cst_26 = arith.constant dense<0.000000e+00> : vector<2x64x8xf32>
    %71 = tpu.matmul %70, %59, %cst_26 {dimension_numbers = #tpu.dot_dimension_numbers<[2], [1], [1], [2], [0, 0, 0, 1, 1, 2], [0], [0]>} : vector<2x64x64xf32>, vector<2x64x8xf32>, vector<2x64x8xf32> -> vector<2x64x8xf32>
    "tpu.trace_stop"() : () -> ()
    %72 = vector.extract_strided_slice %37 {offsets = [0, 0, 16], sizes = [2, 64, 8], strides = [1, 1, 1]} : vector<2x64x32xf32> to vector<2x64x8xf32>
    %73 = vector.extract_strided_slice %39 {offsets = [0, 0, 16], sizes = [2, 64, 8], strides = [1, 1, 1]} : vector<2x64x32xf32> to vector<2x64x8xf32>
    %74 = vector.extract_strided_slice %41 {offsets = [0, 0, 16], sizes = [2, 64, 8], strides = [1, 1, 1]} : vector<2x64x32xf32> to vector<2x64x8xf32>
    "tpu.trace_start"() <{level = 10 : i32, message = "bqd,bkd->bqk"}> : () -> ()
    %cst_27 = arith.constant dense<0.000000e+00> : vector<2x64x64xf32>
    %75 = tpu.matmul %72, %73, %cst_27 {dimension_numbers = #tpu.dot_dimension_numbers<[2], [2], [1], [1], [0, 0, 0, 1, 1, 1], [0], [0]>} : vector<2x64x8xf32>, vector<2x64x8xf32>, vector<2x64x64xf32> -> vector<2x64x64xf32>
    "tpu.trace_stop"() : () -> ()
    %cst_28 = arith.constant dense<0xFF800000> : vector<2x64xf32>
    %76 = vector.multi_reduction <maximumf>, %75, %cst_28 [2] : vector<2x64x64xf32> to vector<2x64xf32>
    %77 = vector.shape_cast %76 : vector<2x64xf32> to vector<2x64x1xf32>
    %78 = vector.broadcast %77 : vector<2x64x1xf32> to vector<2x64x64xf32>
    %79 = arith.subf %75, %78 : vector<2x64x64xf32>
    %80 = math.exp %79 : vector<2x64x64xf32>
    %cst_29 = arith.constant dense<0.000000e+00> : vector<2x64xf32>
    %81 = vector.multi_reduction <add>, %80, %cst_29 [2] : vector<2x64x64xf32> to vector<2x64xf32>
    %82 = vector.shape_cast %81 : vector<2x64xf32> to vector<2x64x1xf32>
    %83 = tpu.reciprocal %82 {approx = true} : vector<2x64x1xf32> -> vector<2x64x1xf32>
    %84 = vector.broadcast %83 : vector<2x64x1xf32> to vector<2x64x64xf32>
    %85 = arith.mulf %80, %84 : vector<2x64x64xf32>
    "tpu.trace_start"() <{level = 10 : i32, message = "bqk,bkd->bqd"}> : () -> ()
    %cst_30 = arith.constant dense<0.000000e+00> : vector<2x64x8xf32>
    %86 = tpu.matmul %85, %74, %cst_30 {dimension_numbers = #tpu.dot_dimension_numbers<[2], [1], [1], [2], [0, 0, 0, 1, 1, 2], [0], [0]>} : vector<2x64x64xf32>, vector<2x64x8xf32>, vector<2x64x8xf32> -> vector<2x64x8xf32>
    "tpu.trace_stop"() : () -> ()
    %87 = vector.extract_strided_slice %37 {offsets = [0, 0, 24], sizes = [2, 64, 8], strides = [1, 1, 1]} : vector<2x64x32xf32> to vector<2x64x8xf32>
    %88 = vector.extract_strided_slice %39 {offsets = [0, 0, 24], sizes = [2, 64, 8], strides = [1, 1, 1]} : vector<2x64x32xf32> to vector<2x64x8xf32>
    %89 = vector.extract_strided_slice %41 {offsets = [0, 0, 24], sizes = [2, 64, 8], strides = [1, 1, 1]} : vector<2x64x32xf32> to vector<2x64x8xf32>
    "tpu.trace_start"() <{level = 10 : i32, message = "bqd,bkd->bqk"}> : () -> ()
    %cst_31 = arith.constant dense<0.000000e+00> : vector<2x64x64xf32>
    %90 = tpu.matmul %87, %88, %cst_31 {dimension_numbers = #tpu.dot_dimension_numbers<[2], [2], [1], [1], [0, 0, 0, 1, 1, 1], [0], [0]>} : vector<2x64x8xf32>, vector<2x64x8xf32>, vector<2x64x64xf32> -> vector<2x64x64xf32>
    "tpu.trace_stop"() : () -> ()
    %cst_32 = arith.constant dense<0xFF800000> : vector<2x64xf32>
    %91 = vector.multi_reduction <maximumf>, %90, %cst_32 [2] : vector<2x64x64xf32> to vector<2x64xf32>
    %92 = vector.shape_cast %91 : vector<2x64xf32> to vector<2x64x1xf32>
    %93 = vector.broadcast %92 : vector<2x64x1xf32> to vector<2x64x64xf32>
    %94 = arith.subf %90, %93 : vector<2x64x64xf32>
    %95 = math.exp %94 : vector<2x64x64xf32>
    %cst_33 = arith.constant dense<0.000000e+00> : vector<2x64xf32>
    %96 = vector.multi_reduction <add>, %95, %cst_33 [2] : vector<2x64x64xf32> to vector<2x64xf32>
    %97 = vector.shape_cast %96 : vector<2x64xf32> to vector<2x64x1xf32>
    %98 = tpu.reciprocal %97 {approx = true} : vector<2x64x1xf32> -> vector<2x64x1xf32>
    %99 = vector.broadcast %98 : vector<2x64x1xf32> to vector<2x64x64xf32>
    %100 = arith.mulf %95, %99 : vector<2x64x64xf32>
    "tpu.trace_start"() <{level = 10 : i32, message = "bqk,bkd->bqd"}> : () -> ()
    %cst_34 = arith.constant dense<0.000000e+00> : vector<2x64x8xf32>
    %101 = tpu.matmul %100, %89, %cst_34 {dimension_numbers = #tpu.dot_dimension_numbers<[2], [1], [1], [2], [0, 0, 0, 1, 1, 2], [0], [0]>} : vector<2x64x64xf32>, vector<2x64x8xf32>, vector<2x64x8xf32> -> vector<2x64x8xf32>
    "tpu.trace_stop"() : () -> ()
    %102 = tpu.concatenate %56, %71, %86, %101 in 2 : vector<2x64x8xf32>, vector<2x64x8xf32>, vector<2x64x8xf32>, vector<2x64x8xf32> -> vector<2x64x32xf32>
    %103 = vector.shape_cast %102 : vector<2x64x32xf32> to vector<128x32xf32>
    %c0_35 = arith.constant 0 : index
    %c0_36 = arith.constant 0 : index
    %104 = vector.load %arg4[%c0_35, %c0_36] : memref<32x32xf32, #tpu.memory_space<vmem>>, vector<32x32xf32>
    %cst_37 = arith.constant dense<0.000000e+00> : vector<128x32xf32>
    %105 = tpu.matmul %103, %104, %cst_37 {dimension_numbers = #tpu.dot_dimension_numbers<[1], [0], [0], [1], [0, 0, 1, 1], [], []>} : vector<128x32xf32>, vector<32x32xf32>, vector<128x32xf32> -> vector<128x32xf32>
    %106 = vector.broadcast %2 : vector<1x32xf32> to vector<128x32xf32>
    %107 = arith.addf %105, %106 : vector<128x32xf32>
    %108 = arith.addf %107, %8 : vector<128x32xf32>
    %cst_38 = arith.constant dense<0.000000e+00> : vector<128xf32>
    %109 = vector.multi_reduction <add>, %108, %cst_38 [1] : vector<128x32xf32> to vector<128xf32>
    %110 = vector.shape_cast %109 : vector<128xf32> to vector<128x1xf32>
    %cst_39 = arith.constant 3.200000e+01 : f32
    %111 = vector.broadcast %cst_39 : f32 to vector<128x1xf32>
    %112 = arith.divf %110, %111 : vector<128x1xf32>
    %113 = vector.broadcast %112 : vector<128x1xf32> to vector<128x32xf32>
    %114 = arith.subf %108, %113 : vector<128x32xf32>
    %115 = arith.mulf %114, %114 : vector<128x32xf32>
    %cst_40 = arith.constant dense<0.000000e+00> : vector<128xf32>
    %116 = vector.multi_reduction <add>, %115, %cst_40 [1] : vector<128x32xf32> to vector<128xf32>
    %117 = vector.shape_cast %116 : vector<128xf32> to vector<128x1xf32>
    %cst_41 = arith.constant 3.200000e+01 : f32
    %118 = vector.broadcast %cst_41 : f32 to vector<128x1xf32>
    %119 = arith.divf %117, %118 : vector<128x1xf32>
    %120 = vector.broadcast %112 : vector<128x1xf32> to vector<128x32xf32>
    %121 = arith.subf %108, %120 : vector<128x32xf32>
    %cst_42 = arith.constant 9.99999974E-6 : f32
    %122 = vector.broadcast %cst_42 : f32 to vector<128x1xf32>
    %123 = arith.addf %119, %122 : vector<128x1xf32>
    %124 = math.rsqrt %123 : vector<128x1xf32>
    %125 = vector.broadcast %124 : vector<128x1xf32> to vector<128x32xf32>
    %126 = arith.mulf %121, %125 : vector<128x32xf32>
    %127 = vector.broadcast %3 : vector<1x32xf32> to vector<128x32xf32>
    %128 = arith.mulf %126, %127 : vector<128x32xf32>
    %129 = vector.broadcast %4 : vector<1x32xf32> to vector<128x32xf32>
    %130 = arith.addf %128, %129 : vector<128x32xf32>
    %c0_43 = arith.constant 0 : index
    %c0_44 = arith.constant 0 : index
    %131 = vector.load %arg5[%c0_43, %c0_44] : memref<32x32xf32, #tpu.memory_space<vmem>>, vector<32x32xf32>
    %cst_45 = arith.constant dense<0.000000e+00> : vector<128x32xf32>
    %132 = tpu.matmul %130, %131, %cst_45 {dimension_numbers = #tpu.dot_dimension_numbers<[1], [0], [0], [1], [0, 0, 1, 1], [], []>} : vector<128x32xf32>, vector<32x32xf32>, vector<128x32xf32> -> vector<128x32xf32>
    %133 = vector.broadcast %5 : vector<1x32xf32> to vector<128x32xf32>
    %134 = arith.addf %132, %133 : vector<128x32xf32>
    %cst_46 = arith.constant 5.000000e-01 : f32
    %135 = vector.broadcast %cst_46 : f32 to vector<128x32xf32>
    %136 = arith.mulf %135, %134 : vector<128x32xf32>
    %cst_47 = arith.constant 0.707106769 : f32
    %137 = vector.broadcast %cst_47 : f32 to vector<128x32xf32>
    %138 = arith.mulf %134, %137 : vector<128x32xf32>
    %139 = math.erf %138 : vector<128x32xf32>
    %cst_48 = arith.constant 1.000000e+00 : f32
    %140 = vector.broadcast %cst_48 : f32 to vector<128x32xf32>
    %141 = arith.addf %140, %139 : vector<128x32xf32>
    %142 = arith.mulf %136, %141 : vector<128x32xf32>
    %c0_49 = arith.constant 0 : index
    %c0_50 = arith.constant 0 : index
    %143 = vector.load %arg6[%c0_49, %c0_50] : memref<32x32xf32, #tpu.memory_space<vmem>>, vector<32x32xf32>
    %cst_51 = arith.constant dense<0.000000e+00> : vector<128x32xf32>
    %144 = tpu.matmul %142, %143, %cst_51 {dimension_numbers = #tpu.dot_dimension_numbers<[1], [0], [0], [1], [0, 0, 1, 1], [], []>} : vector<128x32xf32>, vector<32x32xf32>, vector<128x32xf32> -> vector<128x32xf32>
    %145 = vector.broadcast %6 : vector<1x32xf32> to vector<128x32xf32>
    %146 = arith.addf %144, %145 : vector<128x32xf32>
    %147 = arith.addf %146, %108 : vector<128x32xf32>
    %148 = vector.shape_cast %147 : vector<128x32xf32> to vector<2x64x32xf32>
    %c0_52 = arith.constant 0 : index
    %c0_53 = arith.constant 0 : index
    %c0_54 = arith.constant 0 : index
    %149 = vector.load %arg8[%c0_52, %c0_53, %c0_54] : memref<2x64x32xf32, #tpu.memory_space<vmem>>, vector<2x64x32xf32>
    tpu.vector_store %arg8[%c0_52, %c0_53, %c0_54], %148 {strides = array<i32>} : memref<2x64x32xf32, #tpu.memory_space<vmem>>, vector<2x64x32xf32>,
    return
  }
  func.func @transform_0(%arg0: i32) -> (i32, i32, i32) {
    %c0_i32 = arith.constant 0 : i32
    %c0_i32_0 = arith.constant 0 : i32
    %c0_i32_1 = arith.constant 0 : i32
    return %arg0, %c0_i32, %c0_i32_0 : i32, i32, i32
  }
  func.func @transform_1(%arg0: i32) -> (i32, i32) {
    %c0_i32 = arith.constant 0 : i32
    %c0_i32_0 = arith.constant 0 : i32
    %c0_i32_1 = arith.constant 0 : i32
    return %c0_i32, %c0_i32_0 : i32, i32
  }
  func.func @transform_2(%arg0: i32) -> (i32, i32) {
    %c0_i32 = arith.constant 0 : i32
    %c0_i32_0 = arith.constant 0 : i32
    %c0_i32_1 = arith.constant 0 : i32
    return %c0_i32, %c0_i32_0 : i32, i32
  }
  func.func @transform_3(%arg0: i32) -> (i32, i32) {
    %c0_i32 = arith.constant 0 : i32
    %c0_i32_0 = arith.constant 0 : i32
    %c0_i32_1 = arith.constant 0 : i32
    return %c0_i32, %c0_i32_0 : i32, i32
  }
  func.func @transform_4(%arg0: i32) -> (i32, i32) {
    %c0_i32 = arith.constant 0 : i32
    %c0_i32_0 = arith.constant 0 : i32
    %c0_i32_1 = arith.constant 0 : i32
    return %c0_i32, %c0_i32_0 : i32, i32
  }
  func.func @transform_5(%arg0: i32) -> (i32, i32) {
    %c0_i32 = arith.constant 0 : i32
    %c0_i32_0 = arith.constant 0 : i32
    %c0_i32_1 = arith.constant 0 : i32
    return %c0_i32, %c0_i32_0 : i32, i32
  }
  func.func @transform_6(%arg0: i32) -> (i32, i32) {
    %c0_i32 = arith.constant 0 : i32
    %c0_i32_0 = arith.constant 0 : i32
    %c0_i32_1 = arith.constant 0 : i32
    return %c0_i32, %c0_i32_0 : i32, i32
  }
  func.func @transform_7(%arg0: i32) -> (i32, i32, i32) {
    %c0_i32 = arith.constant 0 : i32
    %c0_i32_0 = arith.constant 0 : i32
    %c0_i32_1 = arith.constant 0 : i32
    return %arg0, %c0_i32, %c0_i32_0 : i32, i32, i32
  }
}

</mosaic_0001>

<llo_original>
// kernel: tpu_custom_call.1
$region0: #{tpu_custom_call.1}
  #allocation0 [shape = 'u32[]', space=smem, size = 0x4, offset = 0x4, fixed_abs, tag = 'smem constant byte address 0x4 - core index']
  #allocation1 [shape = 'u32[144,128]{1,0:T(1,128)}', space=vmem, size = 0x12000, scoped, tag = 'internal scratch']
  %s0 = inlined_call_operand.vmem [shape: f32[2,64,32], index: 0, kind: input, shape index: {}, may-alias: {0,7}]
  %s1 = inlined_call_operand.vmem [shape: f32[32,96], index: 1, kind: input, shape index: {}]
  %s2 = inlined_call_operand.vmem [shape: f32[1,96], index: 2, kind: input, shape index: {}]
  %s3 = inlined_call_operand.vmem [shape: f32[32,32], index: 3, kind: input, shape index: {}]
  %s4 = inlined_call_operand.vmem [shape: f32[32,32], index: 4, kind: input, shape index: {}]
  %s5 = inlined_call_operand.vmem [shape: f32[32,32], index: 5, kind: input, shape index: {}]
  %s6 = inlined_call_operand.vmem [shape: f32[8,32], index: 6, kind: input, shape index: {}]
  %s7 = inlined_call_operand.vmem [shape: f32[2,64,32], index: 7, kind: output, shape index: {}, may-alias: {0,7}]
  %s8 = sld [smem:[#allocation0]]
  $region38: #{tpu_custom_call.1} parent=0
    _
  %s10 = ssub.s32 1, %s8
  %s11 = scalar_select 0, %s10, %s8
  // Predicated region
  $region2: #{tpu_custom_call.1} parent=0 // pred_check
    _
  $region3: #{tpu_custom_call.1} parent=0 // pred_check_branch
    %13 = sbr.rel (0) target = $region5
  $region4: #{tpu_custom_call.1} parent=0 // pred_region
    _
  $region5: #{tpu_custom_call.1} parent=0 // pred_fallthru
    _
  // Predicated region
  $region6: #{tpu_custom_call.1} parent=0 // pred_check
    _
  $region7: #{tpu_custom_call.1} parent=0 // pred_check_branch
    %15 = sbr.rel (0) target = $region9
  $region8: #{tpu_custom_call.1} parent=0 // pred_region
    _
  $region9: #{tpu_custom_call.1} parent=0 // pred_fallthru
    _
  // Predicated region
  $region10: #{tpu_custom_call.1} parent=0 // pred_check
    _
  $region11: #{tpu_custom_call.1} parent=0 // pred_check_branch
    %17 = sbr.rel (0) target = $region13
  $region12: #{tpu_custom_call.1} parent=0 // pred_region
    _
  $region13: #{tpu_custom_call.1} parent=0 // pred_fallthru
    _
  // Predicated region
  $region14: #{tpu_custom_call.1} parent=0 // pred_check
    _
  $region15: #{tpu_custom_call.1} parent=0 // pred_check_branch
    %19 = sbr.rel (0) target = $region17
  $region16: #{tpu_custom_call.1} parent=0 // pred_region
    _
  $region17: #{tpu_custom_call.1} parent=0 // pred_fallthru
    _
  // Predicated region
  $region18: #{tpu_custom_call.1} parent=0 // pred_check
    _
  $region19: #{tpu_custom_call.1} parent=0 // pred_check_branch
    %21 = sbr.rel (0) target = $region21
  $region20: #{tpu_custom_call.1} parent=0 // pred_region
    _
  $region21: #{tpu_custom_call.1} parent=0 // pred_fallthru
    _
  // Predicated region
  $region22: #{tpu_custom_call.1} parent=0 // pred_check
    _
  $region23: #{tpu_custom_call.1} parent=0 // pred_check_branch
    %23 = sbr.rel (0) target = $region25
  $region24: #{tpu_custom_call.1} parent=0 // pred_region
    _
  $region25: #{tpu_custom_call.1} parent=0 // pred_fallthru
    _
  // Predicated region
  $region26: #{tpu_custom_call.1} parent=0 // pred_check
    _
  $region27: #{tpu_custom_call.1} parent=0 // pred_check_branch
    %25 = sbr.rel (0) target = $region29
  $region28: #{tpu_custom_call.1} parent=0 // pred_region
    _
  $region29: #{tpu_custom_call.1} parent=0 // pred_fallthru
    _
  %v26 = vld [vmem:[%s6] sm:$0x1]
  %v27 = vld [vmem:[%s6 + $0x1] sm:$0x1]
  %v28 = vld [vmem:[%s6 + $0x2] sm:$0x1]
  %v29 = vld [vmem:[%s6 + $0x3] sm:$0x1]
  %v30 = vld [vmem:[%s6 + $0x4] sm:$0x1]
  %v31 = vld [vmem:[%s6 + $0x5] sm:$0x1]
  %v32 = vld [vmem:[%s6 + $0x6] sm:$0x1]
  %v33 = vld [vmem:[%s0] sm:$0xff]
  %v34 = vld [vmem:[%s0 + $0x8] sm:$0xff]
  %v35 = vld [vmem:[%s0 + $0x10] sm:$0xff]
  %v36 = vld [vmem:[%s0 + $0x18] sm:$0xff]
  %v37 = vld [vmem:[%s0 + $0x20] sm:$0xff]
  %v38 = vld [vmem:[%s0 + $0x28] sm:$0xff]
  %v39 = vld [vmem:[%s0 + $0x30] sm:$0xff]
  %v40 = vld [vmem:[%s0 + $0x38] sm:$0xff]
  %v41 = vld [vmem:[%s0 + $0x40] sm:$0xff]
  %v42 = vld [vmem:[%s0 + $0x48] sm:$0xff]
  %v43 = vld [vmem:[%s0 + $0x50] sm:$0xff]
  %v44 = vld [vmem:[%s0 + $0x58] sm:$0xff]
  %v45 = vld [vmem:[%s0 + $0x60] sm:$0xff]
  %v46 = vld [vmem:[%s0 + $0x68] sm:$0xff]
  %v47 = vld [vmem:[%s0 + $0x70] sm:$0xff]
  %v48 = vld [vmem:[%s0 + $0x78] sm:$0xff]
  %vm49 = vcmask 261120
  %v50 = vsel %vm49, %v33, 0.0
  %51 = vadd.xlane.f32.xlu0 %v50
  %v52 = vpop.xlane.xlu0 %51
  %v53 = vsel %vm49, %v34, 0.0
  %54 = vadd.xlane.f32.xlu0 %v53
  %v55 = vpop.xlane.xlu0 %54
  %v56 = vsel %vm49, %v35, 0.0
  %57 = vadd.xlane.f32.xlu0 %v56
  %v58 = vpop.xlane.xlu0 %57
  %v59 = vsel %vm49, %v36, 0.0
  %60 = vadd.xlane.f32.xlu0 %v59
  %v61 = vpop.xlane.xlu0 %60
  %v62 = vsel %vm49, %v37, 0.0
  %63 = vadd.xlane.f32.xlu0 %v62
  %v64 = vpop.xlane.xlu0 %63
  %v65 = vsel %vm49, %v38, 0.0
  %66 = vadd.xlane.f32.xlu0 %v65
  %v67 = vpop.xlane.xlu0 %66
  %v68 = vsel %vm49, %v39, 0.0
  %69 = vadd.xlane.f32.xlu0 %v68
  %v70 = vpop.xlane.xlu0 %69
  %v71 = vsel %vm49, %v40, 0.0
  %72 = vadd.xlane.f32.xlu0 %v71
  %v73 = vpop.xlane.xlu0 %72
  %v74 = vsel %vm49, %v41, 0.0
  %75 = vadd.xlane.f32.xlu0 %v74
  %v76 = vpop.xlane.xlu0 %75
  %v77 = vsel %vm49, %v42, 0.0
  %78 = vadd.xlane.f32.xlu0 %v77
  %v79 = vpop.xlane.xlu0 %78
  %v80 = vsel %vm49, %v43, 0.0
  %81 = vadd.xlane.f32.xlu0 %v80
  %v82 = vpop.xlane.xlu0 %81
  %v83 = vsel %vm49, %v44, 0.0
  %84 = vadd.xlane.f32.xlu0 %v83
  %v85 = vpop.xlane.xlu0 %84
  %v86 = vsel %vm49, %v45, 0.0
  %87 = vadd.xlane.f32.xlu0 %v86
  %v88 = vpop.xlane.xlu0 %87
  %v89 = vsel %vm49, %v46, 0.0
  %90 = vadd.xlane.f32.xlu0 %v89
  %v91 = vpop.xlane.xlu0 %90
  %v92 = vsel %vm49, %v47, 0.0
  %93 = vadd.xlane.f32.xlu0 %v92
  %v94 = vpop.xlane.xlu0 %93
  %v95 = vsel %vm49, %v48, 0.0
  %96 = vadd.xlane.f32.xlu0 %v95
  %v97 = vpop.xlane.xlu0 %96
  %v98 = vrcp.pop 32.0
  %v99 = vmul.f32 %v52, %v98
  %v100 = vmul.f32 %v55, %v98
  %v101 = vmul.f32 %v58, %v98
  %v102 = vmul.f32 %v61, %v98
  %v103 = vmul.f32 %v64, %v98
  %v104 = vmul.f32 %v67, %v98
  %v105 = vmul.f32 %v70, %v98
  %v106 = vmul.f32 %v73, %v98
  %v107 = vmul.f32 %v76, %v98
  %v108 = vmul.f32 %v79, %v98
  %v109 = vmul.f32 %v82, %v98
  %v110 = vmul.f32 %v85, %v98
  %v111 = vmul.f32 %v88, %v98
  %v112 = vmul.f32 %v91, %v98
  %v113 = vmul.f32 %v94, %v98
  %v114 = vmul.f32 %v97, %v98
  %v115 = vsub.f32 %v33, %v99
  %v116 = vsub.f32 %v34, %v100
  %v117 = vsub.f32 %v35, %v101
  %v118 = vsub.f32 %v36, %v102
  %v119 = vsub.f32 %v37, %v103
  %v120 = vsub.f32 %v38, %v104
  %v121 = vsub.f32 %v39, %v105
  %v122 = vsub.f32 %v40, %v106
  %v123 = vsub.f32 %v41, %v107
  %v124 = vsub.f32 %v42, %v108
  %v125 = vsub.f32 %v43, %v109
  %v126 = vsub.f32 %v44, %v110
  %v127 = vsub.f32 %v45, %v111
  %v128 = vsub.f32 %v46, %v112
  %v129 = vsub.f32 %v47, %v113
  %v130 = vsub.f32 %v48, %v114
  %v131 = vmul.f32 %v115, %v115
  %v132 = vmul.f32 %v116, %v116
  %v133 = vmul.f32 %v117, %v117
  %v134 = vmul.f32 %v118, %v118
  %v135 = vmul.f32 %v119, %v119
  %v136 = vmul.f32 %v120, %v120
  %v137 = vmul.f32 %v121, %v121
  %v138 = vmul.f32 %v122, %v122
  %v139 = vmul.f32 %v123, %v123
  %v140 = vmul.f32 %v124, %v124
  %v141 = vmul.f32 %v125, %v125
  %v142 = vmul.f32 %v126, %v126
  %v143 = vmul.f32 %v127, %v127
  %v144 = vmul.f32 %v128, %v128
  %v145 = vmul.f32 %v129, %v129
  %v146 = vmul.f32 %v130, %v130
  %v147 = vsel %vm49, %v131, 0.0
  %148 = vadd.xlane.f32.xlu0 %v147
  %v149 = vpop.xlane.xlu0 %148
  %v150 = vsel %vm49, %v132, 0.0
  %151 = vadd.xlane.f32.xlu0 %v150
  %v152 = vpop.xlane.xlu0 %151
  %v153 = vsel %vm49, %v133, 0.0
  %154 = vadd.xlane.f32.xlu0 %v153
  %v155 = vpop.xlane.xlu0 %154
  %v156 = vsel %vm49, %v134, 0.0
  %157 = vadd.xlane.f32.xlu0 %v156
  %v158 = vpop.xlane.xlu0 %157
  %v159 = vsel %vm49, %v135, 0.0
  %160 = vadd.xlane.f32.xlu0 %v159
  %v161 = vpop.xlane.xlu0 %160
  %v162 = vsel %vm49, %v136, 0.0
  %163 = vadd.xlane.f32.xlu0 %v162
  %v164 = vpop.xlane.xlu0 %163
  %v165 = vsel %vm49, %v137, 0.0
  %166 = vadd.xlane.f32.xlu0 %v165
  %v167 = vpop.xlane.xlu0 %166
  %v168 = vsel %vm49, %v138, 0.0
  %169 = vadd.xlane.f32.xlu0 %v168
  %v170 = vpop.xlane.xlu0 %169
  %v171 = vsel %vm49, %v139, 0.0
  %172 = vadd.xlane.f32.xlu0 %v171
  %v173 = vpop.xlane.xlu0 %172
  %v174 = vsel %vm49, %v140, 0.0
  %175 = vadd.xlane.f32.xlu0 %v174
  %v176 = vpop.xlane.xlu0 %175
  %v177 = vsel %vm49, %v141, 0.0
  %178 = vadd.xlane.f32.xlu0 %v177
  %v179 = vpop.xlane.xlu0 %178
  %v180 = vsel %vm49, %v142, 0.0
  %181 = vadd.xlane.f32.xlu0 %v180
  %v182 = vpop.xlane.xlu0 %181
  %v183 = vsel %vm49, %v143, 0.0
  %184 = vadd.xlane.f32.xlu0 %v183
  %v185 = vpop.xlane.xlu0 %184
  %v186 = vsel %vm49, %v144, 0.0
  %187 = vadd.xlane.f32.xlu0 %v186
  %v188 = vpop.xlane.xlu0 %187
  %v189 = vsel %vm49, %v145, 0.0
  %190 = vadd.xlane.f32.xlu0 %v189
  %v191 = vpop.xlane.xlu0 %190
  %v192 = vsel %vm49, %v146, 0.0
  %193 = vadd.xlane.f32.xlu0 %v192
  %v194 = vpop.xlane.xlu0 %193
  %v195 = vmul.f32 %v149, %v98
  %v196 = vmul.f32 %v152, %v98
  %v197 = vmul.f32 %v155, %v98
  %v198 = vmul.f32 %v158, %v98
  %v199 = vmul.f32 %v161, %v98
  %v200 = vmul.f32 %v164, %v98
  %v201 = vmul.f32 %v167, %v98
  %v202 = vmul.f32 %v170, %v98
  %v203 = vmul.f32 %v173, %v98
  %v204 = vmul.f32 %v176, %v98
  %v205 = vmul.f32 %v179, %v98
  %v206 = vmul.f32 %v182, %v98
  %v207 = vmul.f32 %v185, %v98
  %v208 = vmul.f32 %v188, %v98
  %v209 = vmul.f32 %v191, %v98
  %v210 = vmul.f32 %v194, %v98
  %v211 = vadd.f32 %v195, 1e-05
  %v212 = vadd.f32 %v196, 1e-05
  %v213 = vadd.f32 %v197, 1e-05
  %v214 = vadd.f32 %v198, 1e-05
  %v215 = vadd.f32 %v199, 1e-05
  %v216 = vadd.f32 %v200, 1e-05
  %v217 = vadd.f32 %v201, 1e-05
  %v218 = vadd.f32 %v202, 1e-05
  %v219 = vadd.f32 %v203, 1e-05
  %v220 = vadd.f32 %v204, 1e-05
  %v221 = vadd.f32 %v205, 1e-05
  %v222 = vadd.f32 %v206, 1e-05
  %v223 = vadd.f32 %v207, 1e-05
  %v224 = vadd.f32 %v208, 1e-05
  %v225 = vadd.f32 %v209, 1e-05
  %v226 = vadd.f32 %v210, 1e-05
  %v227 = vrsqrt.pop %v211
  %v228 = vrsqrt.pop %v212
  %v229 = vrsqrt.pop %v213
  %v230 = vrsqrt.pop %v214
  %v231 = vrsqrt.pop %v215
  %v232 = vrsqrt.pop %v216
  %v233 = vrsqrt.pop %v217
  %v234 = vrsqrt.pop %v218
  %v235 = vrsqrt.pop %v219
  %v236 = vrsqrt.pop %v220
  %v237 = vrsqrt.pop %v221
  %v238 = vrsqrt.pop %v222
  %v239 = vrsqrt.pop %v223
  %v240 = vrsqrt.pop %v224
  %v241 = vrsqrt.pop %v225
  %v242 = vrsqrt.pop %v226
  %v243 = vmul.f32 %v115, %v227
  %v244 = vmul.f32 %v116, %v228
  %v245 = vmul.f32 %v117, %v229
  %v246 = vmul.f32 %v118, %v230
  %v247 = vmul.f32 %v119, %v231
  %v248 = vmul.f32 %v120, %v232
  %v249 = vmul.f32 %v121, %v233
  %v250 = vmul.f32 %v122, %v234
  %v251 = vmul.f32 %v123, %v235
  %v252 = vmul.f32 %v124, %v236
  %v253 = vmul.f32 %v125, %v237
  %v254 = vmul.f32 %v126, %v238
  %v255 = vmul.f32 %v127, %v239
  %v256 = vmul.f32 %v128, %v240
  %v257 = vmul.f32 %v129, %v241
  %v258 = vmul.f32 %v130, %v242
  %v259 = vlaneseq
  %v260 = vshrl.u32 %v259, 7
  %v261 = vsub.s32 0, %v260
  %v262 = vrot.slane %v26, %v261
  %v263 = vmul.f32 %v243, %v262
  %v264 = vmul.f32 %v244, %v262
  %v265 = vmul.f32 %v245, %v262
  %v266 = vmul.f32 %v246, %v262
  %v267 = vmul.f32 %v247, %v262
  %v268 = vmul.f32 %v248, %v262
  %v269 = vmul.f32 %v249, %v262
  %v270 = vmul.f32 %v250, %v262
  %v271 = vmul.f32 %v251, %v262
  %v272 = vmul.f32 %v252, %v262
  %v273 = vmul.f32 %v253, %v262
  %v274 = vmul.f32 %v254, %v262
  %v275 = vmul.f32 %v255, %v262
  %v276 = vmul.f32 %v256, %v262
  %v277 = vmul.f32 %v257, %v262
  %v278 = vmul.f32 %v258, %v262
  %v279 = vlaneseq
  %v280 = vshrl.u32 %v279, 7
  %v281 = vsub.s32 0, %v280
  %v282 = vrot.slane %v27, %v281
  %v283 = vadd.f32 %v263, %v282
  %v284 = vadd.f32 %v264, %v282
  %v285 = vadd.f32 %v265, %v282
  %v286 = vadd.f32 %v266, %v282
  %v287 = vadd.f32 %v267, %v282
  %v288 = vadd.f32 %v268, %v282
  %v289 = vadd.f32 %v269, %v282
  %v290 = vadd.f32 %v270, %v282
  %v291 = vadd.f32 %v271, %v282
  %v292 = vadd.f32 %v272, %v282
  %v293 = vadd.f32 %v273, %v282
  %v294 = vadd.f32 %v274, %v282
  %v295 = vadd.f32 %v275, %v282
  %v296 = vadd.f32 %v276, %v282
  %v297 = vadd.f32 %v277, %v282
  %v298 = vadd.f32 %v278, %v282
  %v299 = vld [vmem:[%s1] sm:$0xff]
  %v300 = vld [vmem:[%s1 + $0x8] sm:$0xff]
  %v301 = vld [vmem:[%s1 + $0x10] sm:$0xff]
  %v302 = vld [vmem:[%s1 + $0x18] sm:$0xff]
  %v303 = vld [vmem:[%s2] sm:$0x1]
  %v305 = vlaneseq
  %v306 = vshrl.u32 %v305, 7
  %v307 = vsub.s32 0, %v306
  %v308 = vrot.slane %v303, %v307
  %v311 = vsel %vm49, %v283, 0
  %v314 = vsel %vm49, %v284, 0
  %v317 = vsel %vm49, %v285, 0
  %v320 = vsel %vm49, %v286, 0
  %v323 = vsel %vm49, %v287, 0
  %v326 = vsel %vm49, %v288, 0
  %v329 = vsel %vm49, %v289, 0
  %v332 = vsel %vm49, %v290, 0
  %v335 = vsel %vm49, %v291, 0
  %v338 = vsel %vm49, %v292, 0
  %v341 = vsel %vm49, %v293, 0
  %v344 = vsel %vm49, %v294, 0
  %v347 = vsel %vm49, %v295, 0
  %v350 = vsel %vm49, %v296, 0
  %v353 = vsel %vm49, %v297, 0
  %v356 = vsel %vm49, %v298, 0
  %358 = vmatprep.subr.mxu0 0.0
  %359 = vmatpush1.msra.mxu0 %v299
  %360 = vmatprep.subr.mxu0 0.0
  %361 = vmatpush1.msra.mxu0 %v300
  %362 = vmatprep.subr.mxu0 0.0
  %363 = vmatpush1.msra.mxu0 %v301
  %364 = vmatprep.subr.mxu0 0.0
  %365 = vmatpush1.msra.mxu0 %v302
  %366 = vmatprep.subr.mxu0 0.0
  %367 = vmatpush1.msra.mxu0 0.0
  %368 = vmatprep.subr.mxu0 0.0
  %369 = vmatpush1.msra.mxu0 0.0
  %370 = vmatprep.subr.mxu0 0.0
  %371 = vmatpush1.msra.mxu0 0.0
  %372 = vmatprep.subr.mxu0 0.0
  %373 = vmatpush1.msra.mxu0 0.0
  %374 = vmatprep.subr.mxu0 0.0
  %375 = vmatpush1.msra.mxu0 0.0
  %376 = vmatprep.subr.mxu0 0.0
  %377 = vmatpush1.msra.mxu0 0.0
  %378 = vmatprep.subr.mxu0 0.0
  %379 = vmatpush1.msra.mxu0 0.0
  %380 = vmatprep.subr.mxu0 0.0
  %381 = vmatpush1.msra.mxu0 0.0
  %382 = vmatprep.subr.mxu0 0.0
  %383 = vmatpush1.msra.mxu0 0.0
  %384 = vmatprep.subr.mxu0 0.0
  %385 = vmatpush1.msra.mxu0 0.0
  %386 = vmatprep.subr.mxu0 0.0
  %387 = vmatpush1.msra.mxu0 0.0
  %388 = vmatprep.subr.mxu0 0.0
  %389 = vmatpush1.msra.mxu0 0.0
  %390 = vmatprep.subr.mxu0 0.0
  %391 = vmatpush1.msra.mxu0 0.0
  %392 = vmatprep.subr.mxu0 0.0
  %393 = vmatpush1.msra.mxu0 0.0
  %394 = vmatprep.subr.mxu0 0.0
  %395 = vmatpush1.msra.mxu0 0.0
  %396 = vmatprep.subr.mxu0 0.0
  %397 = vmatpush1.msra.mxu0 0.0
  %398 = vmatprep.subr.mxu0 0.0
  %399 = vmatpush1.msra.mxu0 0.0
  %400 = vmatprep.subr.mxu0 0.0
  %401 = vmatpush1.msra.mxu0 0.0
  %402 = vmatprep.subr.mxu0 0.0
  %403 = vmatpush1.msra.mxu0 0.0
  %404 = vmatprep.subr.mxu0 0.0
  %405 = vmatpush1.msra.mxu0 0.0
  %406 = vmatprep.subr.mxu0 0.0
  %407 = vmatpush1.msra.mxu0 0.0
  %408 = vmatprep.subr.mxu0 0.0
  %409 = vmatpush1.msra.mxu0 0.0
  %410 = vmatprep.subr.mxu0 0.0
  %411 = vmatpush1.msra.mxu0 0.0
  %412 = vmatprep.subr.mxu0 0.0
  %413 = vmatpush1.msra.mxu0 0.0
  %414 = vmatprep.subr.mxu0 0.0
  %415 = vmatpush1.msra.mxu0 0.0
  %416 = vmatprep.subr.mxu0 0.0
  %417 = vmatpush1.msra.mxu0 0.0
  %418 = vmatprep.subr.mxu0 0.0
  %419 = vmatpush1.msra.mxu0 0.0
  %420 = vmatprep.subr.mxu0 0.0
  %421 = vmatpush1.msra.mxu0 0.0
  %422 = vmatprep.mubr.f32.mxu0 0.0
  %423 = vmatmul.mubr.f32.gmra.mrb[0].mxu0 %v311
  %v424 = vpop.f32.mrb[0].mxu0
  %v425 = vadd.f32 %v308, %v424
  %v426 = vpop.f32.mrb[0].mxu0
  %427 = vmatprep.mubr.f32.mxu0 0.0
  %428 = vmatmul.mubr.f32.gmra.mrb[0].mxu0 %v314
  %v429 = vpop.f32.mrb[0].mxu0
  %v430 = vadd.f32 %v308, %v429
  %v431 = vpop.f32.mrb[0].mxu0
  %432 = vmatprep.mubr.f32.mxu0 0.0
  %433 = vmatmul.mubr.f32.gmra.mrb[0].mxu0 %v317
  %v434 = vpop.f32.mrb[0].mxu0
  %v435 = vadd.f32 %v308, %v434
  %v436 = vpop.f32.mrb[0].mxu0
  %437 = vmatprep.mubr.f32.mxu0 0.0
  %438 = vmatmul.mubr.f32.gmra.mrb[0].mxu0 %v320
  %v439 = vpop.f32.mrb[0].mxu0
  %v440 = vadd.f32 %v308, %v439
  %v441 = vpop.f32.mrb[0].mxu0
  %442 = vmatprep.mubr.f32.mxu0 0.0
  %443 = vmatmul.mubr.f32.gmra.mrb[0].mxu0 %v323
  %v444 = vpop.f32.mrb[0].mxu0
  %v445 = vadd.f32 %v308, %v444
  %v446 = vpop.f32.mrb[0].mxu0
  %447 = vmatprep.mubr.f32.mxu0 0.0
  %448 = vmatmul.mubr.f32.gmra.mrb[0].mxu0 %v326
  %v449 = vpop.f32.mrb[0].mxu0
  %v450 = vadd.f32 %v308, %v449
  %v451 = vpop.f32.mrb[0].mxu0
  %452 = vmatprep.mubr.f32.mxu0 0.0
  %453 = vmatmul.mubr.f32.gmra.mrb[0].mxu0 %v329
  %v454 = vpop.f32.mrb[0].mxu0
  %v455 = vadd.f32 %v308, %v454
  %v456 = vpop.f32.mrb[0].mxu0
  %457 = vmatprep.mubr.f32.mxu0 0.0
  %458 = vmatmul.mubr.f32.gmra.mrb[0].mxu0 %v332
  %v459 = vpop.f32.mrb[0].mxu0
  %v460 = vadd.f32 %v308, %v459
  %v461 = vpop.f32.mrb[0].mxu0
  %462 = vmatprep.mubr.f32.mxu0 0.0
  %463 = vmatmul.mubr.f32.gmra.mrb[0].mxu0 %v335
  %v464 = vpop.f32.mrb[0].mxu0
  %v465 = vadd.f32 %v308, %v464
  %v466 = vpop.f32.mrb[0].mxu0
  %467 = vmatprep.mubr.f32.mxu0 0.0
  %468 = vmatmul.mubr.f32.gmra.mrb[0].mxu0 %v338
  %v469 = vpop.f32.mrb[0].mxu0
  %v470 = vadd.f32 %v308, %v469
  %v471 = vpop.f32.mrb[0].mxu0
  %472 = vmatprep.mubr.f32.mxu0 0.0
  %473 = vmatmul.mubr.f32.gmra.mrb[0].mxu0 %v341
  %v474 = vpop.f32.mrb[0].mxu0
  %v475 = vadd.f32 %v308, %v474
  %v476 = vpop.f32.mrb[0].mxu0
  %477 = vmatprep.mubr.f32.mxu0 0.0
  %478 = vmatmul.mubr.f32.gmra.mrb[0].mxu0 %v344
  %v479 = vpop.f32.mrb[0].mxu0
  %v480 = vadd.f32 %v308, %v479
  %v481 = vpop.f32.mrb[0].mxu0
  %482 = vmatprep.mubr.f32.mxu0 0.0
  %483 = vmatmul.mubr.f32.gmra.mrb[0].mxu0 %v347
  %v484 = vpop.f32.mrb[0].mxu0
  %v485 = vadd.f32 %v308, %v484
  %v486 = vpop.f32.mrb[0].mxu0
  %487 = vmatprep.mubr.f32.mxu0 0.0
  %488 = vmatmul.mubr.f32.gmra.mrb[0].mxu0 %v350
  %v489 = vpop.f32.mrb[0].mxu0
  %v490 = vadd.f32 %v308, %v489
  %v491 = vpop.f32.mrb[0].mxu0
  %492 = vmatprep.mubr.f32.mxu0 0.0
  %493 = vmatmul.mubr.f32.gmra.mrb[0].mxu0 %v353
  %v494 = vpop.f32.mrb[0].mxu0
  %v495 = vadd.f32 %v308, %v494
  %v496 = vpop.f32.mrb[0].mxu0
  %497 = vmatprep.mubr.f32.mxu0 0.0
  %498 = vmatmul.mubr.f32.gmra.mrb[0].mxu0 %v356
  %v499 = vpop.f32.mrb[0].mxu0
  %v500 = vadd.f32 %v308, %v499
  %v501 = vpop.f32.mrb[0].mxu0
  %502 = vdwg.mxu0
  %511 = vrot.lane.b32.xlu0 %v425, 96
  %v512 = vpop.permute.xlu0 %511
  %513 = vrot.lane.b32.xlu0 %v430, 96
  %v514 = vpop.permute.xlu0 %513
  %515 = vrot.lane.b32.xlu0 %v435, 96
  %v516 = vpop.permute.xlu0 %515
  %517 = vrot.lane.b32.xlu0 %v440, 96
  %v518 = vpop.permute.xlu0 %517
  %519 = vrot.lane.b32.xlu0 %v445, 96
  %v520 = vpop.permute.xlu0 %519
  %521 = vrot.lane.b32.xlu0 %v450, 96
  %v522 = vpop.permute.xlu0 %521
  %523 = vrot.lane.b32.xlu0 %v455, 96
  %v524 = vpop.permute.xlu0 %523
  %525 = vrot.lane.b32.xlu0 %v460, 96
  %v526 = vpop.permute.xlu0 %525
  %vm527 = vcmask 64512
  %v528 = vsel %vm527, %v425, 0
  %v530 = vsel %vm527, %v430, 0
  %v532 = vsel %vm527, %v435, 0
  %v534 = vsel %vm527, %v440, 0
  %v536 = vsel %vm527, %v445, 0
  %v538 = vsel %vm527, %v450, 0
  %v540 = vsel %vm527, %v455, 0
  %v542 = vsel %vm527, %v460, 0
  %v544 = vsel %vm527, %v512, 0
  %v546 = vsel %vm527, %v514, 0
  %v548 = vsel %vm527, %v516, 0
  %v550 = vsel %vm527, %v518, 0
  %v552 = vsel %vm527, %v520, 0
  %v554 = vsel %vm527, %v522, 0
  %v556 = vsel %vm527, %v524, 0
  %v558 = vsel %vm527, %v526, 0
  %560 = vmatprep.subr.mxu0 0.0
  %561 = vmatpush1.xpose.msra.mxu0 %v544
  %562 = vmatprep.subr.mxu0 0.0
  %563 = vmatpush1.xpose.msra.mxu0 %v546
  %564 = vmatprep.subr.mxu0 0.0
  %565 = vmatpush1.xpose.msra.mxu0 %v548
  %566 = vmatprep.subr.mxu0 0.0
  %567 = vmatpush1.xpose.msra.mxu0 %v550
  %568 = vmatprep.subr.mxu0 0.0
  %569 = vmatpush1.xpose.msra.mxu0 %v552
  %570 = vmatprep.subr.mxu0 0.0
  %571 = vmatpush1.xpose.msra.mxu0 %v554
  %572 = vmatprep.subr.mxu0 0.0
  %573 = vmatpush1.xpose.msra.mxu0 %v556
  %574 = vmatprep.subr.mxu0 0.0
  %575 = vmatpush1.xpose.msra.mxu0 %v558
  %576 = vmatprep.subr.mxu0 0.0
  %577 = vmatpush1.xpose.msra.mxu0 0.0
  %578 = vmatprep.subr.mxu0 0.0
  %579 = vmatpush1.xpose.msra.mxu0 0.0
  %580 = vmatprep.subr.mxu0 0.0
  %581 = vmatpush1.xpose.msra.mxu0 0.0
  %582 = vmatprep.subr.mxu0 0.0
  %583 = vmatpush1.xpose.msra.mxu0 0.0
  %584 = vmatprep.subr.mxu0 0.0
  %585 = vmatpush1.xpose.msra.mxu0 0.0
  %586 = vmatprep.subr.mxu0 0.0
  %587 = vmatpush1.xpose.msra.mxu0 0.0
  %588 = vmatprep.subr.mxu0 0.0
  %589 = vmatpush1.xpose.msra.mxu0 0.0
  %590 = vmatprep.subr.mxu0 0.0
  %591 = vmatpush1.xpose.msra.mxu0 0.0
  %592 = vmatprep.subr.mxu0 0.0
  %593 = vmatpush1.xpose.msra.mxu0 0.0
  %594 = vmatprep.subr.mxu0 0.0
  %595 = vmatpush1.xpose.msra.mxu0 0.0
  %596 = vmatprep.subr.mxu0 0.0
  %597 = vmatpush1.xpose.msra.mxu0 0.0
  %598 = vmatprep.subr.mxu0 0.0
  %599 = vmatpush1.xpose.msra.mxu0 0.0
  %600 = vmatprep.subr.mxu0 0.0
  %601 = vmatpush1.xpose.msra.mxu0 0.0
  %602 = vmatprep.subr.mxu0 0.0
  %603 = vmatpush1.xpose.msra.mxu0 0.0
  %604 = vmatprep.subr.mxu0 0.0
  %605 = vmatpush1.xpose.msra.mxu0 0.0
  %606 = vmatprep.subr.mxu0 0.0
  %607 = vmatpush1.xpose.msra.mxu0 0.0
  %608 = vmatprep.subr.mxu0 0.0
  %609 = vmatpush1.xpose.msra.mxu0 0.0
  %610 = vmatprep.subr.mxu0 0.0
  %611 = vmatpush1.xpose.msra.mxu0 0.0
  %612 = vmatprep.subr.mxu0 0.0
  %613 = vmatpush1.xpose.msra.mxu0 0.0
  %614 = vmatprep.subr.mxu0 0.0
  %615 = vmatpush1.xpose.msra.mxu0 0.0
  %616 = vmatprep.subr.mxu0 0.0
  %617 = vmatpush1.xpose.msra.mxu0 0.0
  %618 = vmatprep.subr.mxu0 0.0
  %619 = vmatpush1.xpose.msra.mxu0 0.0
  %620 = vmatprep.subr.mxu0 0.0
  %621 = vmatpush1.xpose.msra.mxu0 0.0
  %622 = vmatprep.subr.mxu0 0.0
  %623 = vmatpush1.xpose.msra.mxu0 0.0
  %624 = vmatprep.mubr.f32.mxu0 0.0
  %625 = vmatmul.mubr.f32.gmra.mrb[0].mxu0 %v528
  %v626 = vpop.f32.mrb[0].mxu0
  %v627 = vadd.f32 0.0, %v626
  %v628 = vpop.f32.mrb[0].mxu0
  %629 = vmatprep.mubr.f32.mxu0 0.0
  %630 = vmatmul.mubr.f32.gmra.mrb[0].mxu0 %v530
  %v631 = vpop.f32.mrb[0].mxu0
  %v632 = vadd.f32 0.0, %v631
  %v633 = vpop.f32.mrb[0].mxu0
  %634 = vmatprep.mubr.f32.mxu0 0.0
  %635 = vmatmul.mubr.f32.gmra.mrb[0].mxu0 %v532
  %v636 = vpop.f32.mrb[0].mxu0
  %v637 = vadd.f32 0.0, %v636
  %v638 = vpop.f32.mrb[0].mxu0
  %639 = vmatprep.mubr.f32.mxu0 0.0
  %640 = vmatmul.mubr.f32.gmra.mrb[0].mxu0 %v534
  %v641 = vpop.f32.mrb[0].mxu0
  %v642 = vadd.f32 0.0, %v641
  %v643 = vpop.f32.mrb[0].mxu0
  %644 = vmatprep.mubr.f32.mxu0 0.0
  %645 = vmatmul.mubr.f32.gmra.mrb[0].mxu0 %v536
  %v646 = vpop.f32.mrb[0].mxu0
  %v647 = vadd.f32 0.0, %v646
  %v648 = vpop.f32.mrb[0].mxu0
  %649 = vmatprep.mubr.f32.mxu0 0.0
  %650 = vmatmul.mubr.f32.gmra.mrb[0].mxu0 %v538
  %v651 = vpop.f32.mrb[0].mxu0
  %v652 = vadd.f32 0.0, %v651
  %v653 = vpop.f32.mrb[0].mxu0
  %654 = vmatprep.mubr.f32.mxu0 0.0
  %655 = vmatmul.mubr.f32.gmra.mrb[0].mxu0 %v540
  %v656 = vpop.f32.mrb[0].mxu0
  %v657 = vadd.f32 0.0, %v656
  %v658 = vpop.f32.mrb[0].mxu0
  %659 = vmatprep.mubr.f32.mxu0 0.0
  %660 = vmatmul.mubr.f32.gmra.mrb[0].mxu0 %v542
  %v661 = vpop.f32.mrb[0].mxu0
  %v662 = vadd.f32 0.0, %v661
  %v663 = vpop.f32.mrb[0].mxu0
  %664 = vdwg.mxu0
  %673 = vrot.lane.b32.xlu0 %v465, 96
  %v674 = vpop.permute.xlu0 %673
  %675 = vrot.lane.b32.xlu0 %v470, 96
  %v676 = vpop.permute.xlu0 %675
  %677 = vrot.lane.b32.xlu0 %v475, 96
  %v678 = vpop.permute.xlu0 %677
  %679 = vrot.lane.b32.xlu0 %v480, 96
  %v680 = vpop.permute.xlu0 %679
  %681 = vrot.lane.b32.xlu0 %v485, 96
  %v682 = vpop.permute.xlu0 %681
  %683 = vrot.lane.b32.xlu0 %v490, 96
  %v684 = vpop.permute.xlu0 %683
  %685 = vrot.lane.b32.xlu0 %v495, 96
  %v686 = vpop.permute.xlu0 %685
  %687 = vrot.lane.b32.xlu0 %v500, 96
  %v688 = vpop.permute.xlu0 %687
  %v689 = vsel %vm527, %v465, 0
  %v691 = vsel %vm527, %v470, 0
  %v693 = vsel %vm527, %v475, 0
  %v695 = vsel %vm527, %v480, 0
  %v697 = vsel %vm527, %v485, 0
  %v699 = vsel %vm527, %v490, 0
  %v701 = vsel %vm527, %v495, 0
  %v703 = vsel %vm527, %v500, 0
  %v705 = vsel %vm527, %v674, 0
  %v707 = vsel %vm527, %v676, 0
  %v709 = vsel %vm527, %v678, 0
  %v711 = vsel %vm527, %v680, 0
  %v713 = vsel %vm527, %v682, 0
  %v715 = vsel %vm527, %v684, 0
  %v717 = vsel %vm527, %v686, 0
  %v719 = vsel %vm527, %v688, 0
  %721 = vmatprep.subr.mxu0 0.0
  %722 = vmatpush1.xpose.msra.mxu0 %v705
  %723 = vmatprep.subr.mxu0 0.0
  %724 = vmatpush1.xpose.msra.mxu0 %v707
  %725 = vmatprep.subr.mxu0 0.0
  %726 = vmatpush1.xpose.msra.mxu0 %v709
  %727 = vmatprep.subr.mxu0 0.0
  %728 = vmatpush1.xpose.msra.mxu0 %v711
  %729 = vmatprep.subr.mxu0 0.0
  %730 = vmatpush1.xpose.msra.mxu0 %v713
  %731 = vmatprep.subr.mxu0 0.0
  %732 = vmatpush1.xpose.msra.mxu0 %v715
  %733 = vmatprep.subr.mxu0 0.0
  %734 = vmatpush1.xpose.msra.mxu0 %v717
  %735 = vmatprep.subr.mxu0 0.0
  %736 = vmatpush1.xpose.msra.mxu0 %v719
  %737 = vmatprep.subr.mxu0 0.0
  %738 = vmatpush1.xpose.msra.mxu0 0.0
  %739 = vmatprep.subr.mxu0 0.0
  %740 = vmatpush1.xpose.msra.mxu0 0.0
  %741 = vmatprep.subr.mxu0 0.0
  %742 = vmatpush1.xpose.msra.mxu0 0.0
  %743 = vmatprep.subr.mxu0 0.0
  %744 = vmatpush1.xpose.msra.mxu0 0.0
  %745 = vmatprep.subr.mxu0 0.0
  %746 = vmatpush1.xpose.msra.mxu0 0.0
  %747 = vmatprep.subr.mxu0 0.0
  %748 = vmatpush1.xpose.msra.mxu0 0.0
  %749 = vmatprep.subr.mxu0 0.0
  %750 = vmatpush1.xpose.msra.mxu0 0.0
  %751 = vmatprep.subr.mxu0 0.0
  %752 = vmatpush1.xpose.msra.mxu0 0.0
  %753 = vmatprep.subr.mxu0 0.0
  %754 = vmatpush1.xpose.msra.mxu0 0.0
  %755 = vmatprep.subr.mxu0 0.0
  %756 = vmatpush1.xpose.msra.mxu0 0.0
  %757 = vmatprep.subr.mxu0 0.0
  %758 = vmatpush1.xpose.msra.mxu0 0.0
  %759 = vmatprep.subr.mxu0 0.0
  %760 = vmatpush1.xpose.msra.mxu0 0.0
  %761 = vmatprep.subr.mxu0 0.0
  %762 = vmatpush1.xpose.msra.mxu0 0.0
  %763 = vmatprep.subr.mxu0 0.0
  %764 = vmatpush1.xpose.msra.mxu0 0.0
  %765 = vmatprep.subr.mxu0 0.0
  %766 = vmatpush1.xpose.msra.mxu0 0.0
  %767 = vmatprep.subr.mxu0 0.0
  %768 = vmatpush1.xpose.msra.mxu0 0.0
  %769 = vmatprep.subr.mxu0 0.0
  %770 = vmatpush1.xpose.msra.mxu0 0.0
  %771 = vmatprep.subr.mxu0 0.0
  %772 = vmatpush1.xpose.msra.mxu0 0.0
  %773 = vmatprep.subr.mxu0 0.0
  %774 = vmatpush1.xpose.msra.mxu0 0.0
  %775 = vmatprep.subr.mxu0 0.0
  %776 = vmatpush1.xpose.msra.mxu0 0.0
  %777 = vmatprep.subr.mxu0 0.0
  %778 = vmatpush1.xpose.msra.mxu0 0.0
  %779 = vmatprep.subr.mxu0 0.0
  %780 = vmatpush1.xpose.msra.mxu0 0.0
  %781 = vmatprep.subr.mxu0 0.0
  %782 = vmatpush1.xpose.msra.mxu0 0.0
  %783 = vmatprep.subr.mxu0 0.0
  %784 = vmatpush1.xpose.msra.mxu0 0.0
  %785 = vmatprep.mubr.f32.mxu0 0.0
  %786 = vmatmul.mubr.f32.gmra.mrb[0].mxu0 %v689
  %v787 = vpop.f32.mrb[0].mxu0
  %v788 = vadd.f32 0.0, %v787
  %v789 = vpop.f32.mrb[0].mxu0
  %790 = vmatprep.mubr.f32.mxu0 0.0
  %791 = vmatmul.mubr.f32.gmra.mrb[0].mxu0 %v691
  %v792 = vpop.f32.mrb[0].mxu0
  %v793 = vadd.f32 0.0, %v792
  %v794 = vpop.f32.mrb[0].mxu0
  %795 = vmatprep.mubr.f32.mxu0 0.0
  %796 = vmatmul.mubr.f32.gmra.mrb[0].mxu0 %v693
  %v797 = vpop.f32.mrb[0].mxu0
  %v798 = vadd.f32 0.0, %v797
  %v799 = vpop.f32.mrb[0].mxu0
  %800 = vmatprep.mubr.f32.mxu0 0.0
  %801 = vmatmul.mubr.f32.gmra.mrb[0].mxu0 %v695
  %v802 = vpop.f32.mrb[0].mxu0
  %v803 = vadd.f32 0.0, %v802
  %v804 = vpop.f32.mrb[0].mxu0
  %805 = vmatprep.mubr.f32.mxu0 0.0
  %806 = vmatmul.mubr.f32.gmra.mrb[0].mxu0 %v697
  %v807 = vpop.f32.mrb[0].mxu0
  %v808 = vadd.f32 0.0, %v807
  %v809 = vpop.f32.mrb[0].mxu0
  %810 = vmatprep.mubr.f32.mxu0 0.0
  %811 = vmatmul.mubr.f32.gmra.mrb[0].mxu0 %v699
  %v812 = vpop.f32.mrb[0].mxu0
  %v813 = vadd.f32 0.0, %v812
  %v814 = vpop.f32.mrb[0].mxu0
  %815 = vmatprep.mubr.f32.mxu0 0.0
  %816 = vmatmul.mubr.f32.gmra.mrb[0].mxu0 %v701
  %v817 = vpop.f32.mrb[0].mxu0
  %v818 = vadd.f32 0.0, %v817
  %v819 = vpop.f32.mrb[0].mxu0
  %820 = vmatprep.mubr.f32.mxu0 0.0
  %821 = vmatmul.mubr.f32.gmra.mrb[0].mxu0 %v703
  %v822 = vpop.f32.mrb[0].mxu0
  %v823 = vadd.f32 0.0, %v822
  %v824 = vpop.f32.mrb[0].mxu0
  %825 = vdwg.mxu0
  %vm826 = vcmask 523264
  %v827 = vsel %vm826, %v627, -inf
  %828 = vmax.xlane.f32.xlu0 %v827
  %v829 = vpop.xlane.xlu0 %828
  %v830 = vsel %vm826, %v632, -inf
  %831 = vmax.xlane.f32.xlu0 %v830
  %v832 = vpop.xlane.xlu0 %831
  %v833 = vsel %vm826, %v637, -inf
  %834 = vmax.xlane.f32.xlu0 %v833
  %v835 = vpop.xlane.xlu0 %834
  %v836 = vsel %vm826, %v642, -inf
  %837 = vmax.xlane.f32.xlu0 %v836
  %v838 = vpop.xlane.xlu0 %837
  %v839 = vsel %vm826, %v647, -inf
  %840 = vmax.xlane.f32.xlu0 %v839
  %v841 = vpop.xlane.xlu0 %840
  %v842 = vsel %vm826, %v652, -inf
  %843 = vmax.xlane.f32.xlu0 %v842
  %v844 = vpop.xlane.xlu0 %843
  %v845 = vsel %vm826, %v657, -inf
  %846 = vmax.xlane.f32.xlu0 %v845
  %v847 = vpop.xlane.xlu0 %846
  %v848 = vsel %vm826, %v662, -inf
  %849 = vmax.xlane.f32.xlu0 %v848
  %v850 = vpop.xlane.xlu0 %849
  %v851 = vsel %vm826, %v788, -inf
  %852 = vmax.xlane.f32.xlu0 %v851
  %v853 = vpop.xlane.xlu0 %852
  %v854 = vsel %vm826, %v793, -inf
  %855 = vmax.xlane.f32.xlu0 %v854
  %v856 = vpop.xlane.xlu0 %855
  %v857 = vsel %vm826, %v798, -inf
  %858 = vmax.xlane.f32.xlu0 %v857
  %v859 = vpop.xlane.xlu0 %858
  %v860 = vsel %vm826, %v803, -inf
  %861 = vmax.xlane.f32.xlu0 %v860
  %v862 = vpop.xlane.xlu0 %861
  %v863 = vsel %vm826, %v808, -inf
  %864 = vmax.xlane.f32.xlu0 %v863
  %v865 = vpop.xlane.xlu0 %864
  %v866 = vsel %vm826, %v813, -inf
  %867 = vmax.xlane.f32.xlu0 %v866
  %v868 = vpop.xlane.xlu0 %867
  %v869 = vsel %vm826, %v818, -inf
  %870 = vmax.xlane.f32.xlu0 %v869
  %v871 = vpop.xlane.xlu0 %870
  %v872 = vsel %vm826, %v823, -inf
  %873 = vmax.xlane.f32.xlu0 %v872
  %v874 = vpop.xlane.xlu0 %873
  %v875 = vsub.f32 %v627, %v829
  %v876 = vsub.f32 %v632, %v832
  %v877 = vsub.f32 %v637, %v835
  %v878 = vsub.f32 %v642, %v838
  %v879 = vsub.f32 %v647, %v841
  %v880 = vsub.f32 %v652, %v844
  %v881 = vsub.f32 %v657, %v847
  %v882 = vsub.f32 %v662, %v850
  %v883 = vsub.f32 %v788, %v853
  %v884 = vsub.f32 %v793, %v856
  %v885 = vsub.f32 %v798, %v859
  %v886 = vsub.f32 %v803, %v862
  %v887 = vsub.f32 %v808, %v865
  %v888 = vsub.f32 %v813, %v868
  %v889 = vsub.f32 %v818, %v871
  %v890 = vsub.f32 %v823, %v874
  %v891 = vmul.f32 %v875, 1.442695
  %v892 = vpow.pop %v891
  %v893 = vmul.f32 %v876, 1.442695
  %v894 = vpow.pop %v893
  %v895 = vmul.f32 %v877, 1.442695
  %v896 = vpow.pop %v895
  %v897 = vmul.f32 %v878, 1.442695
  %v898 = vpow.pop %v897
  %v899 = vmul.f32 %v879, 1.442695
  %v900 = vpow.pop %v899
  %v901 = vmul.f32 %v880, 1.442695
  %v902 = vpow.pop %v901
  %v903 = vmul.f32 %v881, 1.442695
  %v904 = vpow.pop %v903
  %v905 = vmul.f32 %v882, 1.442695
  %v906 = vpow.pop %v905
  %v907 = vmul.f32 %v883, 1.442695
  %v908 = vpow.pop %v907
  %v909 = vmul.f32 %v884, 1.442695
  %v910 = vpow.pop %v909
  %v911 = vmul.f32 %v885, 1.442695
  %v912 = vpow.pop %v911
  %v913 = vmul.f32 %v886, 1.442695
  %v914 = vpow.pop %v913
  %v915 = vmul.f32 %v887, 1.442695
  %v916 = vpow.pop %v915
  %v917 = vmul.f32 %v888, 1.442695
  %v918 = vpow.pop %v917
  %v919 = vmul.f32 %v889, 1.442695
  %v920 = vpow.pop %v919
  %v921 = vmul.f32 %v890, 1.442695
  %v922 = vpow.pop %v921
  %v923 = vsel %vm826, %v892, 0.0
  %924 = vadd.xlane.f32.xlu0 %v923
  %v925 = vpop.xlane.xlu0 %924
  %v926 = vsel %vm826, %v894, 0.0
  %927 = vadd.xlane.f32.xlu0 %v926
  %v928 = vpop.xlane.xlu0 %927
  %v929 = vsel %vm826, %v896, 0.0
  %930 = vadd.xlane.f32.xlu0 %v929
  %v931 = vpop.xlane.xlu0 %930
  %v932 = vsel %vm826, %v898, 0.0
  %933 = vadd.xlane.f32.xlu0 %v932
  %v934 = vpop.xlane.xlu0 %933
  %v935 = vsel %vm826, %v900, 0.0
  %936 = vadd.xlane.f32.xlu0 %v935
  %v937 = vpop.xlane.xlu0 %936
  %v938 = vsel %vm826, %v902, 0.0
  %939 = vadd.xlane.f32.xlu0 %v938
  %v940 = vpop.xlane.xlu0 %939
  %v941 = vsel %vm826, %v904, 0.0
  %942 = vadd.xlane.f32.xlu0 %v941
  %v943 = vpop.xlane.xlu0 %942
  %v944 = vsel %vm826, %v906, 0.0
  %945 = vadd.xlane.f32.xlu0 %v944
  %v946 = vpop.xlane.xlu0 %945
  %v947 = vsel %vm826, %v908, 0.0
  %948 = vadd.xlane.f32.xlu0 %v947
  %v949 = vpop.xlane.xlu0 %948
  %v950 = vsel %vm826, %v910, 0.0
  %951 = vadd.xlane.f32.xlu0 %v950
  %v952 = vpop.xlane.xlu0 %951
  %v953 = vsel %vm826, %v912, 0.0
  %954 = vadd.xlane.f32.xlu0 %v953
  %v955 = vpop.xlane.xlu0 %954
  %v956 = vsel %vm826, %v914, 0.0
  %957 = vadd.xlane.f32.xlu0 %v956
  %v958 = vpop.xlane.xlu0 %957
  %v959 = vsel %vm826, %v916, 0.0
  %960 = vadd.xlane.f32.xlu0 %v959
  %v961 = vpop.xlane.xlu0 %960
  %v962 = vsel %vm826, %v918, 0.0
  %963 = vadd.xlane.f32.xlu0 %v962
  %v964 = vpop.xlane.xlu0 %963
  %v965 = vsel %vm826, %v920, 0.0
  %966 = vadd.xlane.f32.xlu0 %v965
  %v967 = vpop.xlane.xlu0 %966
  %v968 = vsel %vm826, %v922, 0.0
  %969 = vadd.xlane.f32.xlu0 %v968
  %v970 = vpop.xlane.xlu0 %969
  %v971 = vrcp.pop %v925
  %v972 = vrcp.pop %v928
  %v973 = vrcp.pop %v931
  %v974 = vrcp.pop %v934
  %v975 = vrcp.pop %v937
  %v976 = vrcp.pop %v940
  %v977 = vrcp.pop %v943
  %v978 = vrcp.pop %v946
  %v979 = vrcp.pop %v949
  %v980 = vrcp.pop %v952
  %v981 = vrcp.pop %v955
  %v982 = vrcp.pop %v958
  %v983 = vrcp.pop %v961
  %v984 = vrcp.pop %v964
  %v985 = vrcp.pop %v967
  %v986 = vrcp.pop %v970
  %v987 = vmul.f32 %v892, %v971
  %v988 = vmul.f32 %v894, %v972
  %v989 = vmul.f32 %v896, %v973
  %v990 = vmul.f32 %v898, %v974
  %v991 = vmul.f32 %v900, %v975
  %v992 = vmul.f32 %v902, %v976
  %v993 = vmul.f32 %v904, %v977
  %v994 = vmul.f32 %v906, %v978
  %v995 = vmul.f32 %v908, %v979
  %v996 = vmul.f32 %v910, %v980
  %v997 = vmul.f32 %v912, %v981
  %v998 = vmul.f32 %v914, %v982
  %v999 = vmul.f32 %v916, %v983
  %v1000 = vmul.f32 %v918, %v984
  %v1001 = vmul.f32 %v920, %v985
  %v1002 = vmul.f32 %v922, %v986
  %1003 = vrot.lane.b32.xlu0 %v425, 64
  %v1004 = vpop.permute.xlu0 %1003
  %1005 = vrot.lane.b32.xlu0 %v430, 64
  %v1006 = vpop.permute.xlu0 %1005
  %1007 = vrot.lane.b32.xlu0 %v435, 64
  %v1008 = vpop.permute.xlu0 %1007
  %1009 = vrot.lane.b32.xlu0 %v440, 64
  %v1010 = vpop.permute.xlu0 %1009
  %1011 = vrot.lane.b32.xlu0 %v445, 64
  %v1012 = vpop.permute.xlu0 %1011
  %1013 = vrot.lane.b32.xlu0 %v450, 64
  %v1014 = vpop.permute.xlu0 %1013
  %1015 = vrot.lane.b32.xlu0 %v455, 64
  %v1016 = vpop.permute.xlu0 %1015
  %1017 = vrot.lane.b32.xlu0 %v460, 64
  %v1018 = vpop.permute.xlu0 %1017
  %v1028 = vsel %vm826, %v987, 0
  %v1031 = vsel %vm826, %v988, 0
  %v1034 = vsel %vm826, %v989, 0
  %v1037 = vsel %vm826, %v990, 0
  %v1040 = vsel %vm826, %v991, 0
  %v1043 = vsel %vm826, %v992, 0
  %v1046 = vsel %vm826, %v993, 0
  %v1049 = vsel %vm826, %v994, 0
  %1051 = vmatprep.subr.mxu0 0.0
  %1052 = vmatpush1.msra.mxu0 %v1004
  %1053 = vmatprep.subr.mxu0 0.0
  %1054 = vmatpush1.msra.mxu0 %v1006
  %1055 = vmatprep.subr.mxu0 0.0
  %1056 = vmatpush1.msra.mxu0 %v1008
  %1057 = vmatprep.subr.mxu0 0.0
  %1058 = vmatpush1.msra.mxu0 %v1010
  %1059 = vmatprep.subr.mxu0 0.0
  %1060 = vmatpush1.msra.mxu0 %v1012
  %1061 = vmatprep.subr.mxu0 0.0
  %1062 = vmatpush1.msra.mxu0 %v1014
  %1063 = vmatprep.subr.mxu0 0.0
  %1064 = vmatpush1.msra.mxu0 %v1016
  %1065 = vmatprep.subr.mxu0 0.0
  %1066 = vmatpush1.msra.mxu0 %v1018
  %1067 = vmatprep.subr.mxu0 0.0
  %1068 = vmatpush1.msra.mxu0 0.0
  %1069 = vmatprep.subr.mxu0 0.0
  %1070 = vmatpush1.msra.mxu0 0.0
  %1071 = vmatprep.subr.mxu0 0.0
  %1072 = vmatpush1.msra.mxu0 0.0
  %1073 = vmatprep.subr.mxu0 0.0
  %1074 = vmatpush1.msra.mxu0 0.0
  %1075 = vmatprep.subr.mxu0 0.0
  %1076 = vmatpush1.msra.mxu0 0.0
  %1077 = vmatprep.subr.mxu0 0.0
  %1078 = vmatpush1.msra.mxu0 0.0
  %1079 = vmatprep.subr.mxu0 0.0
  %1080 = vmatpush1.msra.mxu0 0.0
  %1081 = vmatprep.subr.mxu0 0.0
  %1082 = vmatpush1.msra.mxu0 0.0
  %1083 = vmatprep.subr.mxu0 0.0
  %1084 = vmatpush1.msra.mxu0 0.0
  %1085 = vmatprep.subr.mxu0 0.0
  %1086 = vmatpush1.msra.mxu0 0.0
  %1087 = vmatprep.subr.mxu0 0.0
  %1088 = vmatpush1.msra.mxu0 0.0
  %1089 = vmatprep.subr.mxu0 0.0
  %1090 = vmatpush1.msra.mxu0 0.0
  %1091 = vmatprep.subr.mxu0 0.0
  %1092 = vmatpush1.msra.mxu0 0.0
  %1093 = vmatprep.subr.mxu0 0.0
  %1094 = vmatpush1.msra.mxu0 0.0
  %1095 = vmatprep.subr.mxu0 0.0
  %1096 = vmatpush1.msra.mxu0 0.0
  %1097 = vmatprep.subr.mxu0 0.0
  %1098 = vmatpush1.msra.mxu0 0.0
  %1099 = vmatprep.subr.mxu0 0.0
  %1100 = vmatpush1.msra.mxu0 0.0
  %1101 = vmatprep.subr.mxu0 0.0
  %1102 = vmatpush1.msra.mxu0 0.0
  %1103 = vmatprep.subr.mxu0 0.0
  %1104 = vmatpush1.msra.mxu0 0.0
  %1105 = vmatprep.subr.mxu0 0.0
  %1106 = vmatpush1.msra.mxu0 0.0
  %1107 = vmatprep.subr.mxu0 0.0
  %1108 = vmatpush1.msra.mxu0 0.0
  %1109 = vmatprep.subr.mxu0 0.0
  %1110 = vmatpush1.msra.mxu0 0.0
  %1111 = vmatprep.subr.mxu0 0.0
  %1112 = vmatpush1.msra.mxu0 0.0
  %1113 = vmatprep.subr.mxu0 0.0
  %1114 = vmatpush1.msra.mxu0 0.0
  %1115 = vmatprep.mubr.f32.mxu0 0.0
  %1116 = vmatmul.mubr.f32.gmra.mrb[0].mxu0 %v1028
  %v1117 = vpop.f32.mrb[0].mxu0
  %v1118 = vadd.f32 0.0, %v1117
  %v1119 = vpop.f32.mrb[0].mxu0
  %1120 = vmatprep.mubr.f32.mxu0 0.0
  %1121 = vmatmul.mubr.f32.gmra.mrb[0].mxu0 %v1031
  %v1122 = vpop.f32.mrb[0].mxu0
  %v1123 = vadd.f32 0.0, %v1122
  %v1124 = vpop.f32.mrb[0].mxu0
  %1125 = vmatprep.mubr.f32.mxu0 0.0
  %1126 = vmatmul.mubr.f32.gmra.mrb[0].mxu0 %v1034
  %v1127 = vpop.f32.mrb[0].mxu0
  %v1128 = vadd.f32 0.0, %v1127
  %v1129 = vpop.f32.mrb[0].mxu0
  %1130 = vmatprep.mubr.f32.mxu0 0.0
  %1131 = vmatmul.mubr.f32.gmra.mrb[0].mxu0 %v1037
  %v1132 = vpop.f32.mrb[0].mxu0
  %v1133 = vadd.f32 0.0, %v1132
  %v1134 = vpop.f32.mrb[0].mxu0
  %1135 = vmatprep.mubr.f32.mxu0 0.0
  %1136 = vmatmul.mubr.f32.gmra.mrb[0].mxu0 %v1040
  %v1137 = vpop.f32.mrb[0].mxu0
  %v1138 = vadd.f32 0.0, %v1137
  %v1139 = vpop.f32.mrb[0].mxu0
  %1140 = vmatprep.mubr.f32.mxu0 0.0
  %1141 = vmatmul.mubr.f32.gmra.mrb[0].mxu0 %v1043
  %v1142 = vpop.f32.mrb[0].mxu0
  %v1143 = vadd.f32 0.0, %v1142
  %v1144 = vpop.f32.mrb[0].mxu0
  %1145 = vmatprep.mubr.f32.mxu0 0.0
  %1146 = vmatmul.mubr.f32.gmra.mrb[0].mxu0 %v1046
  %v1147 = vpop.f32.mrb[0].mxu0
  %v1148 = vadd.f32 0.0, %v1147
  %v1149 = vpop.f32.mrb[0].mxu0
  %1150 = vmatprep.mubr.f32.mxu0 0.0
  %1151 = vmatmul.mubr.f32.gmra.mrb[0].mxu0 %v1049
  %v1152 = vpop.f32.mrb[0].mxu0
  %v1153 = vadd.f32 0.0, %v1152
  %v1154 = vpop.f32.mrb[0].mxu0
  %1155 = vdwg.mxu0
  %1156 = vrot.lane.b32.xlu0 %v465, 64
  %v1157 = vpop.permute.xlu0 %1156
  %1158 = vrot.lane.b32.xlu0 %v470, 64
  %v1159 = vpop.permute.xlu0 %1158
  %1160 = vrot.lane.b32.xlu0 %v475, 64
  %v1161 = vpop.permute.xlu0 %1160
  %1162 = vrot.lane.b32.xlu0 %v480, 64
  %v1163 = vpop.permute.xlu0 %1162
  %1164 = vrot.lane.b32.xlu0 %v485, 64
  %v1165 = vpop.permute.xlu0 %1164
  %1166 = vrot.lane.b32.xlu0 %v490, 64
  %v1167 = vpop.permute.xlu0 %1166
  %1168 = vrot.lane.b32.xlu0 %v495, 64
  %v1169 = vpop.permute.xlu0 %1168
  %1170 = vrot.lane.b32.xlu0 %v500, 64
  %v1171 = vpop.permute.xlu0 %1170
  %v1181 = vsel %vm826, %v995, 0
  %v1184 = vsel %vm826, %v996, 0
  %v1187 = vsel %vm826, %v997, 0
  %v1190 = vsel %vm826, %v998, 0
  %v1193 = vsel %vm826, %v999, 0
  %v1196 = vsel %vm826, %v1000, 0
  %v1199 = vsel %vm826, %v1001, 0
  %v1202 = vsel %vm826, %v1002, 0
  %1204 = vmatprep.subr.mxu0 0.0
  %1205 = vmatpush1.msra.mxu0 %v1157
  %1206 = vmatprep.subr.mxu0 0.0
  %1207 = vmatpush1.msra.mxu0 %v1159
  %1208 = vmatprep.subr.mxu0 0.0
  %1209 = vmatpush1.msra.mxu0 %v1161
  %1210 = vmatprep.subr.mxu0 0.0
  %1211 = vmatpush1.msra.mxu0 %v1163
  %1212 = vmatprep.subr.mxu0 0.0
  %1213 = vmatpush1.msra.mxu0 %v1165
  %1214 = vmatprep.subr.mxu0 0.0
  %1215 = vmatpush1.msra.mxu0 %v1167
  %1216 = vmatprep.subr.mxu0 0.0
  %1217 = vmatpush1.msra.mxu0 %v1169
  %1218 = vmatprep.subr.mxu0 0.0
  %1219 = vmatpush1.msra.mxu0 %v1171
  %1220 = vmatprep.subr.mxu0 0.0
  %1221 = vmatpush1.msra.mxu0 0.0
  %1222 = vmatprep.subr.mxu0 0.0
  %1223 = vmatpush1.msra.mxu0 0.0
  %1224 = vmatprep.subr.mxu0 0.0
  %1225 = vmatpush1.msra.mxu0 0.0
  %1226 = vmatprep.subr.mxu0 0.0
  %1227 = vmatpush1.msra.mxu0 0.0
  %1228 = vmatprep.subr.mxu0 0.0
  %1229 = vmatpush1.msra.mxu0 0.0
  %1230 = vmatprep.subr.mxu0 0.0
  %1231 = vmatpush1.msra.mxu0 0.0
  %1232 = vmatprep.subr.mxu0 0.0
  %1233 = vmatpush1.msra.mxu0 0.0
  %1234 = vmatprep.subr.mxu0 0.0
  %1235 = vmatpush1.msra.mxu0 0.0
  %1236 = vmatprep.subr.mxu0 0.0
  %1237 = vmatpush1.msra.mxu0 0.0
  %1238 = vmatprep.subr.mxu0 0.0
  %1239 = vmatpush1.msra.mxu0 0.0
  %1240 = vmatprep.subr.mxu0 0.0
  %1241 = vmatpush1.msra.mxu0 0.0
  %1242 = vmatprep.subr.mxu0 0.0
  %1243 = vmatpush1.msra.mxu0 0.0
  %1244 = vmatprep.subr.mxu0 0.0
  %1245 = vmatpush1.msra.mxu0 0.0
  %1246 = vmatprep.subr.mxu0 0.0
  %1247 = vmatpush1.msra.mxu0 0.0
  %1248 = vmatprep.subr.mxu0 0.0
  %1249 = vmatpush1.msra.mxu0 0.0
  %1250 = vmatprep.subr.mxu0 0.0
  %1251 = vmatpush1.msra.mxu0 0.0
  %1252 = vmatprep.subr.mxu0 0.0
  %1253 = vmatpush1.msra.mxu0 0.0
  %1254 = vmatprep.subr.mxu0 0.0
  %1255 = vmatpush1.msra.mxu0 0.0
  %1256 = vmatprep.subr.mxu0 0.0
  %1257 = vmatpush1.msra.mxu0 0.0
  %1258 = vmatprep.subr.mxu0 0.0
  %1259 = vmatpush1.msra.mxu0 0.0
  %1260 = vmatprep.subr.mxu0 0.0
  %1261 = vmatpush1.msra.mxu0 0.0
  %1262 = vmatprep.subr.mxu0 0.0
  %1263 = vmatpush1.msra.mxu0 0.0
  %1264 = vmatprep.subr.mxu0 0.0
  %1265 = vmatpush1.msra.mxu0 0.0
  %1266 = vmatprep.subr.mxu0 0.0
  %1267 = vmatpush1.msra.mxu0 0.0
  %1268 = vmatprep.mubr.f32.mxu0 0.0
  %1269 = vmatmul.mubr.f32.gmra.mrb[0].mxu0 %v1181
  %v1270 = vpop.f32.mrb[0].mxu0
  %v1271 = vadd.f32 0.0, %v1270
  %v1272 = vpop.f32.mrb[0].mxu0
  %1273 = vmatprep.mubr.f32.mxu0 0.0
  %1274 = vmatmul.mubr.f32.gmra.mrb[0].mxu0 %v1184
  %v1275 = vpop.f32.mrb[0].mxu0
  %v1276 = vadd.f32 0.0, %v1275
  %v1277 = vpop.f32.mrb[0].mxu0
  %1278 = vmatprep.mubr.f32.mxu0 0.0
  %1279 = vmatmul.mubr.f32.gmra.mrb[0].mxu0 %v1187
  %v1280 = vpop.f32.mrb[0].mxu0
  %v1281 = vadd.f32 0.0, %v1280
  %v1282 = vpop.f32.mrb[0].mxu0
  %1283 = vmatprep.mubr.f32.mxu0 0.0
  %1284 = vmatmul.mubr.f32.gmra.mrb[0].mxu0 %v1190
  %v1285 = vpop.f32.mrb[0].mxu0
  %v1286 = vadd.f32 0.0, %v1285
  %v1287 = vpop.f32.mrb[0].mxu0
  %1288 = vmatprep.mubr.f32.mxu0 0.0
  %1289 = vmatmul.mubr.f32.gmra.mrb[0].mxu0 %v1193
  %v1290 = vpop.f32.mrb[0].mxu0
  %v1291 = vadd.f32 0.0, %v1290
  %v1292 = vpop.f32.mrb[0].mxu0
  %1293 = vmatprep.mubr.f32.mxu0 0.0
  %1294 = vmatmul.mubr.f32.gmra.mrb[0].mxu0 %v1196
  %v1295 = vpop.f32.mrb[0].mxu0
  %v1296 = vadd.f32 0.0, %v1295
  %v1297 = vpop.f32.mrb[0].mxu0
  %1298 = vmatprep.mubr.f32.mxu0 0.0
  %1299 = vmatmul.mubr.f32.gmra.mrb[0].mxu0 %v1199
  %v1300 = vpop.f32.mrb[0].mxu0
  %v1301 = vadd.f32 0.0, %v1300
  %v1302 = vpop.f32.mrb[0].mxu0
  %1303 = vmatprep.mubr.f32.mxu0 0.0
  %1304 = vmatmul.mubr.f32.gmra.mrb[0].mxu0 %v1202
  %v1305 = vpop.f32.mrb[0].mxu0
  %v1306 = vadd.f32 0.0, %v1305
  %v1307 = vpop.f32.mrb[0].mxu0
  %1308 = vdwg.mxu0
  %1309 = vrot.lane.b32.xlu0 %v425, 120
  %v1310 = vpop.permute.xlu0 %1309
  %1311 = vrot.lane.b32.xlu0 %v430, 120
  %v1312 = vpop.permute.xlu0 %1311
  %1313 = vrot.lane.b32.xlu0 %v435, 120
  %v1314 = vpop.permute.xlu0 %1313
  %1315 = vrot.lane.b32.xlu0 %v440, 120
  %v1316 = vpop.permute.xlu0 %1315
  %1317 = vrot.lane.b32.xlu0 %v445, 120
  %v1318 = vpop.permute.xlu0 %1317
  %1319 = vrot.lane.b32.xlu0 %v450, 120
  %v1320 = vpop.permute.xlu0 %1319
  %1321 = vrot.lane.b32.xlu0 %v455, 120
  %v1322 = vpop.permute.xlu0 %1321
  %1323 = vrot.lane.b32.xlu0 %v460, 120
  %v1324 = vpop.permute.xlu0 %1323
  %1325 = vrot.lane.b32.xlu0 %v425, 88
  %v1326 = vpop.permute.xlu0 %1325
  %1327 = vrot.lane.b32.xlu0 %v430, 88
  %v1328 = vpop.permute.xlu0 %1327
  %1329 = vrot.lane.b32.xlu0 %v435, 88
  %v1330 = vpop.permute.xlu0 %1329
  %1331 = vrot.lane.b32.xlu0 %v440, 88
  %v1332 = vpop.permute.xlu0 %1331
  %1333 = vrot.lane.b32.xlu0 %v445, 88
  %v1334 = vpop.permute.xlu0 %1333
  %1335 = vrot.lane.b32.xlu0 %v450, 88
  %v1336 = vpop.permute.xlu0 %1335
  %1337 = vrot.lane.b32.xlu0 %v455, 88
  %v1338 = vpop.permute.xlu0 %1337
  %1339 = vrot.lane.b32.xlu0 %v460, 88
  %v1340 = vpop.permute.xlu0 %1339
  %v1341 = vsel %vm527, %v1310, 0
  %v1343 = vsel %vm527, %v1312, 0
  %v1345 = vsel %vm527, %v1314, 0
  %v1347 = vsel %vm527, %v1316, 0
  %v1349 = vsel %vm527, %v1318, 0
  %v1351 = vsel %vm527, %v1320, 0
  %v1353 = vsel %vm527, %v1322, 0
  %v1355 = vsel %vm527, %v1324, 0
  %v1357 = vsel %vm527, %v1326, 0
  %v1359 = vsel %vm527, %v1328, 0
  %v1361 = vsel %vm527, %v1330, 0
  %v1363 = vsel %vm527, %v1332, 0
  %v1365 = vsel %vm527, %v1334, 0
  %v1367 = vsel %vm527, %v1336, 0
  %v1369 = vsel %vm527, %v1338, 0
  %v1371 = vsel %vm527, %v1340, 0
  %1373 = vmatprep.subr.mxu0 0.0
  %1374 = vmatpush1.xpose.msra.mxu0 %v1357
  %1375 = vmatprep.subr.mxu0 0.0
  %1376 = vmatpush1.xpose.msra.mxu0 %v1359
  %1377 = vmatprep.subr.mxu0 0.0
  %1378 = vmatpush1.xpose.msra.mxu0 %v1361
  %1379 = vmatprep.subr.mxu0 0.0
  %1380 = vmatpush1.xpose.msra.mxu0 %v1363
  %1381 = vmatprep.subr.mxu0 0.0
  %1382 = vmatpush1.xpose.msra.mxu0 %v1365
  %1383 = vmatprep.subr.mxu0 0.0
  %1384 = vmatpush1.xpose.msra.mxu0 %v1367
  %1385 = vmatprep.subr.mxu0 0.0
  %1386 = vmatpush1.xpose.msra.mxu0 %v1369
  %1387 = vmatprep.subr.mxu0 0.0
  %1388 = vmatpush1.xpose.msra.mxu0 %v1371
  %1389 = vmatprep.subr.mxu0 0.0
  %1390 = vmatpush1.xpose.msra.mxu0 0.0
  %1391 = vmatprep.subr.mxu0 0.0
  %1392 = vmatpush1.xpose.msra.mxu0 0.0
  %1393 = vmatprep.subr.mxu0 0.0
  %1394 = vmatpush1.xpose.msra.mxu0 0.0
  %1395 = vmatprep.subr.mxu0 0.0
  %1396 = vmatpush1.xpose.msra.mxu0 0.0
  %1397 = vmatprep.subr.mxu0 0.0
  %1398 = vmatpush1.xpose.msra.mxu0 0.0
  %1399 = vmatprep.subr.mxu0 0.0
  %1400 = vmatpush1.xpose.msra.mxu0 0.0
  %1401 = vmatprep.subr.mxu0 0.0
  %1402 = vmatpush1.xpose.msra.mxu0 0.0
  %1403 = vmatprep.subr.mxu0 0.0
  %1404 = vmatpush1.xpose.msra.mxu0 0.0
  %1405 = vmatprep.subr.mxu0 0.0
  %1406 = vmatpush1.xpose.msra.mxu0 0.0
  %1407 = vmatprep.subr.mxu0 0.0
  %1408 = vmatpush1.xpose.msra.mxu0 0.0
  %1409 = vmatprep.subr.mxu0 0.0
  %1410 = vmatpush1.xpose.msra.mxu0 0.0
  %1411 = vmatprep.subr.mxu0 0.0
  %1412 = vmatpush1.xpose.msra.mxu0 0.0
  %1413 = vmatprep.subr.mxu0 0.0
  %1414 = vmatpush1.xpose.msra.mxu0 0.0
  %1415 = vmatprep.subr.mxu0 0.0
  %1416 = vmatpush1.xpose.msra.mxu0 0.0
  %1417 = vmatprep.subr.mxu0 0.0
  %1418 = vmatpush1.xpose.msra.mxu0 0.0
  %1419 = vmatprep.subr.mxu0 0.0
  %1420 = vmatpush1.xpose.msra.mxu0 0.0
  %1421 = vmatprep.subr.mxu0 0.0
  %1422 = vmatpush1.xpose.msra.mxu0 0.0
  %1423 = vmatprep.subr.mxu0 0.0
  %1424 = vmatpush1.xpose.msra.mxu0 0.0
  %1425 = vmatprep.subr.mxu0 0.0
  %1426 = vmatpush1.xpose.msra.mxu0 0.0
  %1427 = vmatprep.subr.mxu0 0.0
  %1428 = vmatpush1.xpose.msra.mxu0 0.0
  %1429 = vmatprep.subr.mxu0 0.0
  %1430 = vmatpush1.xpose.msra.mxu0 0.0
  %1431 = vmatprep.subr.mxu0 0.0
  %1432 = vmatpush1.xpose.msra.mxu0 0.0
  %1433 = vmatprep.subr.mxu0 0.0
  %1434 = vmatpush1.xpose.msra.mxu0 0.0
  %1435 = vmatprep.subr.mxu0 0.0
  %1436 = vmatpush1.xpose.msra.mxu0 0.0
  %1437 = vmatprep.mubr.f32.mxu0 0.0
  %1438 = vmatmul.mubr.f32.gmra.mrb[0].mxu0 %v1341
  %v1439 = vpop.f32.mrb[0].mxu0
  %v1440 = vadd.f32 0.0, %v1439
  %v1441 = vpop.f32.mrb[0].mxu0
  %1442 = vmatprep.mubr.f32.mxu0 0.0
  %1443 = vmatmul.mubr.f32.gmra.mrb[0].mxu0 %v1343
  %v1444 = vpop.f32.mrb[0].mxu0
  %v1445 = vadd.f32 0.0, %v1444
  %v1446 = vpop.f32.mrb[0].mxu0
  %1447 = vmatprep.mubr.f32.mxu0 0.0
  %1448 = vmatmul.mubr.f32.gmra.mrb[0].mxu0 %v1345
  %v1449 = vpop.f32.mrb[0].mxu0
  %v1450 = vadd.f32 0.0, %v1449
  %v1451 = vpop.f32.mrb[0].mxu0
  %1452 = vmatprep.mubr.f32.mxu0 0.0
  %1453 = vmatmul.mubr.f32.gmra.mrb[0].mxu0 %v1347
  %v1454 = vpop.f32.mrb[0].mxu0
  %v1455 = vadd.f32 0.0, %v1454
  %v1456 = vpop.f32.mrb[0].mxu0
  %1457 = vmatprep.mubr.f32.mxu0 0.0
  %1458 = vmatmul.mubr.f32.gmra.mrb[0].mxu0 %v1349
  %v1459 = vpop.f32.mrb[0].mxu0
  %v1460 = vadd.f32 0.0, %v1459
  %v1461 = vpop.f32.mrb[0].mxu0
  %1462 = vmatprep.mubr.f32.mxu0 0.0
  %1463 = vmatmul.mubr.f32.gmra.mrb[0].mxu0 %v1351
  %v1464 = vpop.f32.mrb[0].mxu0
  %v1465 = vadd.f32 0.0, %v1464
  %v1466 = vpop.f32.mrb[0].mxu0
  %1467 = vmatprep.mubr.f32.mxu0 0.0
  %1468 = vmatmul.mubr.f32.gmra.mrb[0].mxu0 %v1353
  %v1469 = vpop.f32.mrb[0].mxu0
  %v1470 = vadd.f32 0.0, %v1469
  %v1471 = vpop.f32.mrb[0].mxu0
  %1472 = vmatprep.mubr.f32.mxu0 0.0
  %1473 = vmatmul.mubr.f32.gmra.mrb[0].mxu0 %v1355
  %v1474 = vpop.f32.mrb[0].mxu0
  %v1475 = vadd.f32 0.0, %v1474
  %v1476 = vpop.f32.mrb[0].mxu0
  %1477 = vdwg.mxu0
  %1478 = vrot.lane.b32.xlu0 %v465, 120
  %v1479 = vpop.permute.xlu0 %1478
  %1480 = vrot.lane.b32.xlu0 %v470, 120
  %v1481 = vpop.permute.xlu0 %1480
  %1482 = vrot.lane.b32.xlu0 %v475, 120
  %v1483 = vpop.permute.xlu0 %1482
  %1484 = vrot.lane.b32.xlu0 %v480, 120
  %v1485 = vpop.permute.xlu0 %1484
  %1486 = vrot.lane.b32.xlu0 %v485, 120
  %v1487 = vpop.permute.xlu0 %1486
  %1488 = vrot.lane.b32.xlu0 %v490, 120
  %v1489 = vpop.permute.xlu0 %1488
  %1490 = vrot.lane.b32.xlu0 %v495, 120
  %v1491 = vpop.permute.xlu0 %1490
  %1492 = vrot.lane.b32.xlu0 %v500, 120
  %v1493 = vpop.permute.xlu0 %1492
  %1494 = vrot.lane.b32.xlu0 %v465, 88
  %v1495 = vpop.permute.xlu0 %1494
  %1496 = vrot.lane.b32.xlu0 %v470, 88
  %v1497 = vpop.permute.xlu0 %1496
  %1498 = vrot.lane.b32.xlu0 %v475, 88
  %v1499 = vpop.permute.xlu0 %1498
  %1500 = vrot.lane.b32.xlu0 %v480, 88
  %v1501 = vpop.permute.xlu0 %1500
  %1502 = vrot.lane.b32.xlu0 %v485, 88
  %v1503 = vpop.permute.xlu0 %1502
  %1504 = vrot.lane.b32.xlu0 %v490, 88
  %v1505 = vpop.permute.xlu0 %1504
  %1506 = vrot.lane.b32.xlu0 %v495, 88
  %v1507 = vpop.permute.xlu0 %1506
  %1508 = vrot.lane.b32.xlu0 %v500, 88
  %v1509 = vpop.permute.xlu0 %1508
  %v1510 = vsel %vm527, %v1479, 0
  %v1512 = vsel %vm527, %v1481, 0
  %v1514 = vsel %vm527, %v1483, 0
  %v1516 = vsel %vm527, %v1485, 0
  %v1518 = vsel %vm527, %v1487, 0
  %v1520 = vsel %vm527, %v1489, 0
  %v1522 = vsel %vm527, %v1491, 0
  %v1524 = vsel %vm527, %v1493, 0
  %v1526 = vsel %vm527, %v1495, 0
  %v1528 = vsel %vm527, %v1497, 0
  %v1530 = vsel %vm527, %v1499, 0
  %v1532 = vsel %vm527, %v1501, 0
  %v1534 = vsel %vm527, %v1503, 0
  %v1536 = vsel %vm527, %v1505, 0
  %v1538 = vsel %vm527, %v1507, 0
  %v1540 = vsel %vm527, %v1509, 0
  %1542 = vmatprep.subr.mxu0 0.0
  %1543 = vmatpush1.xpose.msra.mxu0 %v1526
  %1544 = vmatprep.subr.mxu0 0.0
  %1545 = vmatpush1.xpose.msra.mxu0 %v1528
  %1546 = vmatprep.subr.mxu0 0.0
  %1547 = vmatpush1.xpose.msra.mxu0 %v1530
  %1548 = vmatprep.subr.mxu0 0.0
  %1549 = vmatpush1.xpose.msra.mxu0 %v1532
  %1550 = vmatprep.subr.mxu0 0.0
  %1551 = vmatpush1.xpose.msra.mxu0 %v1534
  %1552 = vmatprep.subr.mxu0 0.0
  %1553 = vmatpush1.xpose.msra.mxu0 %v1536
  %1554 = vmatprep.subr.mxu0 0.0
  %1555 = vmatpush1.xpose.msra.mxu0 %v1538
  %1556 = vmatprep.subr.mxu0 0.0
  %1557 = vmatpush1.xpose.msra.mxu0 %v1540
  %1558 = vmatprep.subr.mxu0 0.0
  %1559 = vmatpush1.xpose.msra.mxu0 0.0
  %1560 = vmatprep.subr.mxu0 0.0
  %1561 = vmatpush1.xpose.msra.mxu0 0.0
  %1562 = vmatprep.subr.mxu0 0.0
  %1563 = vmatpush1.xpose.msra.mxu0 0.0
  %1564 = vmatprep.subr.mxu0 0.0
  %1565 = vmatpush1.xpose.msra.mxu0 0.0
  %1566 = vmatprep.subr.mxu0 0.0
  %1567 = vmatpush1.xpose.msra.mxu0 0.0
  %1568 = vmatprep.subr.mxu0 0.0
  %1569 = vmatpush1.xpose.msra.mxu0 0.0
  %1570 = vmatprep.subr.mxu0 0.0
  %1571 = vmatpush1.xpose.msra.mxu0 0.0
  %1572 = vmatprep.subr.mxu0 0.0
  %1573 = vmatpush1.xpose.msra.mxu0 0.0
  %1574 = vmatprep.subr.mxu0 0.0
  %1575 = vmatpush1.xpose.msra.mxu0 0.0
  %1576 = vmatprep.subr.mxu0 0.0
  %1577 = vmatpush1.xpose.msra.mxu0 0.0
  %1578 = vmatprep.subr.mxu0 0.0
  %1579 = vmatpush1.xpose.msra.mxu0 0.0
  %1580 = vmatprep.subr.mxu0 0.0
  %1581 = vmatpush1.xpose.msra.mxu0 0.0
  %1582 = vmatprep.subr.mxu0 0.0
  %1583 = vmatpush1.xpose.msra.mxu0 0.0
  %1584 = vmatprep.subr.mxu0 0.0
  %1585 = vmatpush1.xpose.msra.mxu0 0.0
  %1586 = vmatprep.subr.mxu0 0.0
  %1587 = vmatpush1.xpose.msra.mxu0 0.0
  %1588 = vmatprep.subr.mxu0 0.0
  %1589 = vmatpush1.xpose.msra.mxu0 0.0
  %1590 = vmatprep.subr.mxu0 0.0
  %1591 = vmatpush1.xpose.msra.mxu0 0.0
  %1592 = vmatprep.subr.mxu0 0.0
  %1593 = vmatpush1.xpose.msra.mxu0 0.0
  %1594 = vmatprep.subr.mxu0 0.0
  %1595 = vmatpush1.xpose.msra.mxu0 0.0
  %1596 = vmatprep.subr.mxu0 0.0
  %1597 = vmatpush1.xpose.msra.mxu0 0.0
  %1598 = vmatprep.subr.mxu0 0.0
  %1599 = vmatpush1.xpose.msra.mxu0 0.0
  %1600 = vmatprep.subr.mxu0 0.0
  %1601 = vmatpush1.xpose.msra.mxu0 0.0
  %1602 = vmatprep.subr.mxu0 0.0
  %1603 = vmatpush1.xpose.msra.mxu0 0.0
  %1604 = vmatprep.subr.mxu0 0.0
  %1605 = vmatpush1.xpose.msra.mxu0 0.0
  %1606 = vmatprep.mubr.f32.mxu0 0.0
  %1607 = vmatmul.mubr.f32.gmra.mrb[0].mxu0 %v1510
  %v1608 = vpop.f32.mrb[0].mxu0
  %v1609 = vadd.f32 0.0, %v1608
  %v1610 = vpop.f32.mrb[0].mxu0
  %1611 = vmatprep.mubr.f32.mxu0 0.0
  %1612 = vmatmul.mubr.f32.gmra.mrb[0].mxu0 %v1512
  %v1613 = vpop.f32.mrb[0].mxu0
  %v1614 = vadd.f32 0.0, %v1613
  %v1615 = vpop.f32.mrb[0].mxu0
  %1616 = vmatprep.mubr.f32.mxu0 0.0
  %1617 = vmatmul.mubr.f32.gmra.mrb[0].mxu0 %v1514
  %v1618 = vpop.f32.mrb[0].mxu0
  %v1619 = vadd.f32 0.0, %v1618
  %v1620 = vpop.f32.mrb[0].mxu0
  %1621 = vmatprep.mubr.f32.mxu0 0.0
  %1622 = vmatmul.mubr.f32.gmra.mrb[0].mxu0 %v1516
  %v1623 = vpop.f32.mrb[0].mxu0
  %v1624 = vadd.f32 0.0, %v1623
  %v1625 = vpop.f32.mrb[0].mxu0
  %1626 = vmatprep.mubr.f32.mxu0 0.0
  %1627 = vmatmul.mubr.f32.gmra.mrb[0].mxu0 %v1518
  %v1628 = vpop.f32.mrb[0].mxu0
  %v1629 = vadd.f32 0.0, %v1628
  %v1630 = vpop.f32.mrb[0].mxu0
  %1631 = vmatprep.mubr.f32.mxu0 0.0
  %1632 = vmatmul.mubr.f32.gmra.mrb[0].mxu0 %v1520
  %v1633 = vpop.f32.mrb[0].mxu0
  %v1634 = vadd.f32 0.0, %v1633
  %v1635 = vpop.f32.mrb[0].mxu0
  %1636 = vmatprep.mubr.f32.mxu0 0.0
  %1637 = vmatmul.mubr.f32.gmra.mrb[0].mxu0 %v1522
  %v1638 = vpop.f32.mrb[0].mxu0
  %v1639 = vadd.f32 0.0, %v1638
  %v1640 = vpop.f32.mrb[0].mxu0
  %1641 = vmatprep.mubr.f32.mxu0 0.0
  %1642 = vmatmul.mubr.f32.gmra.mrb[0].mxu0 %v1524
  %v1643 = vpop.f32.mrb[0].mxu0
  %v1644 = vadd.f32 0.0, %v1643
  %v1645 = vpop.f32.mrb[0].mxu0
  %1646 = vdwg.mxu0
  %v1647 = vsel %vm826, %v1440, -inf
  %1648 = vmax.xlane.f32.xlu0 %v1647
  %v1649 = vpop.xlane.xlu0 %1648
  %v1650 = vsel %vm826, %v1445, -inf
  %1651 = vmax.xlane.f32.xlu0 %v1650
  %v1652 = vpop.xlane.xlu0 %1651
  %v1653 = vsel %vm826, %v1450, -inf
  %1654 = vmax.xlane.f32.xlu0 %v1653
  %v1655 = vpop.xlane.xlu0 %1654
  %v1656 = vsel %vm826, %v1455, -inf
  %1657 = vmax.xlane.f32.xlu0 %v1656
  %v1658 = vpop.xlane.xlu0 %1657
  %v1659 = vsel %vm826, %v1460, -inf
  %1660 = vmax.xlane.f32.xlu0 %v1659
  %v1661 = vpop.xlane.xlu0 %1660
  %v1662 = vsel %vm826, %v1465, -inf
  %1663 = vmax.xlane.f32.xlu0 %v1662
  %v1664 = vpop.xlane.xlu0 %1663
  %v1665 = vsel %vm826, %v1470, -inf
  %1666 = vmax.xlane.f32.xlu0 %v1665
  %v1667 = vpop.xlane.xlu0 %1666
  %v1668 = vsel %vm826, %v1475, -inf
  %1669 = vmax.xlane.f32.xlu0 %v1668
  %v1670 = vpop.xlane.xlu0 %1669
  %v1671 = vsel %vm826, %v1609, -inf
  %1672 = vmax.xlane.f32.xlu0 %v1671
  %v1673 = vpop.xlane.xlu0 %1672
  %v1674 = vsel %vm826, %v1614, -inf
  %1675 = vmax.xlane.f32.xlu0 %v1674
  %v1676 = vpop.xlane.xlu0 %1675
  %v1677 = vsel %vm826, %v1619, -inf
  %1678 = vmax.xlane.f32.xlu0 %v1677
  %v1679 = vpop.xlane.xlu0 %1678
  %v1680 = vsel %vm826, %v1624, -inf
  %1681 = vmax.xlane.f32.xlu0 %v1680
  %v1682 = vpop.xlane.xlu0 %1681
  %v1683 = vsel %vm826, %v1629, -inf
  %1684 = vmax.xlane.f32.xlu0 %v1683
  %v1685 = vpop.xlane.xlu0 %1684
  %v1686 = vsel %vm826, %v1634, -inf
  %1687 = vmax.xlane.f32.xlu0 %v1686
  %v1688 = vpop.xlane.xlu0 %1687
  %v1689 = vsel %vm826, %v1639, -inf
  %1690 = vmax.xlane.f32.xlu0 %v1689
  %v1691 = vpop.xlane.xlu0 %1690
  %v1692 = vsel %vm826, %v1644, -inf
  %1693 = vmax.xlane.f32.xlu0 %v1692
  %v1694 = vpop.xlane.xlu0 %1693
  %v1695 = vsub.f32 %v1440, %v1649
  %v1696 = vsub.f32 %v1445, %v1652
  %v1697 = vsub.f32 %v1450, %v1655
  %v1698 = vsub.f32 %v1455, %v1658
  %v1699 = vsub.f32 %v1460, %v1661
  %v1700 = vsub.f32 %v1465, %v1664
  %v1701 = vsub.f32 %v1470, %v1667
  %v1702 = vsub.f32 %v1475, %v1670
  %v1703 = vsub.f32 %v1609, %v1673
  %v1704 = vsub.f32 %v1614, %v1676
  %v1705 = vsub.f32 %v1619, %v1679
  %v1706 = vsub.f32 %v1624, %v1682
  %v1707 = vsub.f32 %v1629, %v1685
  %v1708 = vsub.f32 %v1634, %v1688
  %v1709 = vsub.f32 %v1639, %v1691
  %v1710 = vsub.f32 %v1644, %v1694
  %v1711 = vmul.f32 %v1695, 1.442695
  %v1712 = vpow.pop %v1711
  %v1713 = vmul.f32 %v1696, 1.442695
  %v1714 = vpow.pop %v1713
  %v1715 = vmul.f32 %v1697, 1.442695
  %v1716 = vpow.pop %v1715
  %v1717 = vmul.f32 %v1698, 1.442695
  %v1718 = vpow.pop %v1717
  %v1719 = vmul.f32 %v1699, 1.442695
  %v1720 = vpow.pop %v1719
  %v1721 = vmul.f32 %v1700, 1.442695
  %v1722 = vpow.pop %v1721
  %v1723 = vmul.f32 %v1701, 1.442695
  %v1724 = vpow.pop %v1723
  %v1725 = vmul.f32 %v1702, 1.442695
  %v1726 = vpow.pop %v1725
  %v1727 = vmul.f32 %v1703, 1.442695
  %v1728 = vpow.pop %v1727
  %v1729 = vmul.f32 %v1704, 1.442695
  %v1730 = vpow.pop %v1729
  %v1731 = vmul.f32 %v1705, 1.442695
  %v1732 = vpow.pop %v1731
  %v1733 = vmul.f32 %v1706, 1.442695
  %v1734 = vpow.pop %v1733
  %v1735 = vmul.f32 %v1707, 1.442695
  %v1736 = vpow.pop %v1735
  %v1737 = vmul.f32 %v1708, 1.442695
  %v1738 = vpow.pop %v1737
  %v1739 = vmul.f32 %v1709, 1.442695
  %v1740 = vpow.pop %v1739
  %v1741 = vmul.f32 %v1710, 1.442695
  %v1742 = vpow.pop %v1741
  %v1743 = vsel %vm826, %v1712, 0.0
  %1744 = vadd.xlane.f32.xlu0 %v1743
  %v1745 = vpop.xlane.xlu0 %1744
  %v1746 = vsel %vm826, %v1714, 0.0
  %1747 = vadd.xlane.f32.xlu0 %v1746
  %v1748 = vpop.xlane.xlu0 %1747
  %v1749 = vsel %vm826, %v1716, 0.0
  %1750 = vadd.xlane.f32.xlu0 %v1749
  %v1751 = vpop.xlane.xlu0 %1750
  %v1752 = vsel %vm826, %v1718, 0.0
  %1753 = vadd.xlane.f32.xlu0 %v1752
  %v1754 = vpop.xlane.xlu0 %1753
  %v1755 = vsel %vm826, %v1720, 0.0
  %1756 = vadd.xlane.f32.xlu0 %v1755
  %v1757 = vpop.xlane.xlu0 %1756
  %v1758 = vsel %vm826, %v1722, 0.0
  %1759 = vadd.xlane.f32.xlu0 %v1758
  %v1760 = vpop.xlane.xlu0 %1759
  %v1761 = vsel %vm826, %v1724, 0.0
  %1762 = vadd.xlane.f32.xlu0 %v1761
  %v1763 = vpop.xlane.xlu0 %1762
  %v1764 = vsel %vm826, %v1726, 0.0
  %1765 = vadd.xlane.f32.xlu0 %v1764
  %v1766 = vpop.xlane.xlu0 %1765
  %v1767 = vsel %vm826, %v1728, 0.0
  %1768 = vadd.xlane.f32.xlu0 %v1767
  %v1769 = vpop.xlane.xlu0 %1768
  %v1770 = vsel %vm826, %v1730, 0.0
  %1771 = vadd.xlane.f32.xlu0 %v1770
  %v1772 = vpop.xlane.xlu0 %1771
  %v1773 = vsel %vm826, %v1732, 0.0
  %1774 = vadd.xlane.f32.xlu0 %v1773
  %v1775 = vpop.xlane.xlu0 %1774
  %v1776 = vsel %vm826, %v1734, 0.0
  %1777 = vadd.xlane.f32.xlu0 %v1776
  %v1778 = vpop.xlane.xlu0 %1777
  %v1779 = vsel %vm826, %v1736, 0.0
  %1780 = vadd.xlane.f32.xlu0 %v1779
  %v1781 = vpop.xlane.xlu0 %1780
  %v1782 = vsel %vm826, %v1738, 0.0
  %1783 = vadd.xlane.f32.xlu0 %v1782
  %v1784 = vpop.xlane.xlu0 %1783
  %v1785 = vsel %vm826, %v1740, 0.0
  %1786 = vadd.xlane.f32.xlu0 %v1785
  %v1787 = vpop.xlane.xlu0 %1786
  %v1788 = vsel %vm826, %v1742, 0.0
  %1789 = vadd.xlane.f32.xlu0 %v1788
  %v1790 = vpop.xlane.xlu0 %1789
  %v1791 = vrcp.pop %v1745
  %v1792 = vrcp.pop %v1748
  %v1793 = vrcp.pop %v1751
  %v1794 = vrcp.pop %v1754
  %v1795 = vrcp.pop %v1757
  %v1796 = vrcp.pop %v1760
  %v1797 = vrcp.pop %v1763
  %v1798 = vrcp.pop %v1766
  %v1799 = vrcp.pop %v1769
  %v1800 = vrcp.pop %v1772
  %v1801 = vrcp.pop %v1775
  %v1802 = vrcp.pop %v1778
  %v1803 = vrcp.pop %v1781
  %v1804 = vrcp.pop %v1784
  %v1805 = vrcp.pop %v1787
  %v1806 = vrcp.pop %v1790
  %v1807 = vmul.f32 %v1712, %v1791
  %v1808 = vmul.f32 %v1714, %v1792
  %v1809 = vmul.f32 %v1716, %v1793
  %v1810 = vmul.f32 %v1718, %v1794
  %v1811 = vmul.f32 %v1720, %v1795
  %v1812 = vmul.f32 %v1722, %v1796
  %v1813 = vmul.f32 %v1724, %v1797
  %v1814 = vmul.f32 %v1726, %v1798
  %v1815 = vmul.f32 %v1728, %v1799
  %v1816 = vmul.f32 %v1730, %v1800
  %v1817 = vmul.f32 %v1732, %v1801
  %v1818 = vmul.f32 %v1734, %v1802
  %v1819 = vmul.f32 %v1736, %v1803
  %v1820 = vmul.f32 %v1738, %v1804
  %v1821 = vmul.f32 %v1740, %v1805
  %v1822 = vmul.f32 %v1742, %v1806
  %1823 = vrot.lane.b32.xlu0 %v425, 56
  %v1824 = vpop.permute.xlu0 %1823
  %1825 = vrot.lane.b32.xlu0 %v430, 56
  %v1826 = vpop.permute.xlu0 %1825
  %1827 = vrot.lane.b32.xlu0 %v435, 56
  %v1828 = vpop.permute.xlu0 %1827
  %1829 = vrot.lane.b32.xlu0 %v440, 56
  %v1830 = vpop.permute.xlu0 %1829
  %1831 = vrot.lane.b32.xlu0 %v445, 56
  %v1832 = vpop.permute.xlu0 %1831
  %1833 = vrot.lane.b32.xlu0 %v450, 56
  %v1834 = vpop.permute.xlu0 %1833
  %1835 = vrot.lane.b32.xlu0 %v455, 56
  %v1836 = vpop.permute.xlu0 %1835
  %1837 = vrot.lane.b32.xlu0 %v460, 56
  %v1838 = vpop.permute.xlu0 %1837
  %v1848 = vsel %vm826, %v1807, 0
  %v1851 = vsel %vm826, %v1808, 0
  %v1854 = vsel %vm826, %v1809, 0
  %v1857 = vsel %vm826, %v1810, 0
  %v1860 = vsel %vm826, %v1811, 0
  %v1863 = vsel %vm826, %v1812, 0
  %v1866 = vsel %vm826, %v1813, 0
  %v1869 = vsel %vm826, %v1814, 0
  %1871 = vmatprep.subr.mxu0 0.0
  %1872 = vmatpush1.msra.mxu0 %v1824
  %1873 = vmatprep.subr.mxu0 0.0
  %1874 = vmatpush1.msra.mxu0 %v1826
  %1875 = vmatprep.subr.mxu0 0.0
  %1876 = vmatpush1.msra.mxu0 %v1828
  %1877 = vmatprep.subr.mxu0 0.0
  %1878 = vmatpush1.msra.mxu0 %v1830
  %1879 = vmatprep.subr.mxu0 0.0
  %1880 = vmatpush1.msra.mxu0 %v1832
  %1881 = vmatprep.subr.mxu0 0.0
  %1882 = vmatpush1.msra.mxu0 %v1834
  %1883 = vmatprep.subr.mxu0 0.0
  %1884 = vmatpush1.msra.mxu0 %v1836
  %1885 = vmatprep.subr.mxu0 0.0
  %1886 = vmatpush1.msra.mxu0 %v1838
  %1887 = vmatprep.subr.mxu0 0.0
  %1888 = vmatpush1.msra.mxu0 0.0
  %1889 = vmatprep.subr.mxu0 0.0
  %1890 = vmatpush1.msra.mxu0 0.0
  %1891 = vmatprep.subr.mxu0 0.0
  %1892 = vmatpush1.msra.mxu0 0.0
  %1893 = vmatprep.subr.mxu0 0.0
  %1894 = vmatpush1.msra.mxu0 0.0
  %1895 = vmatprep.subr.mxu0 0.0
  %1896 = vmatpush1.msra.mxu0 0.0
  %1897 = vmatprep.subr.mxu0 0.0
  %1898 = vmatpush1.msra.mxu0 0.0
  %1899 = vmatprep.subr.mxu0 0.0
  %1900 = vmatpush1.msra.mxu0 0.0
  %1901 = vmatprep.subr.mxu0 0.0
  %1902 = vmatpush1.msra.mxu0 0.0
  %1903 = vmatprep.subr.mxu0 0.0
  %1904 = vmatpush1.msra.mxu0 0.0
  %1905 = vmatprep.subr.mxu0 0.0
  %1906 = vmatpush1.msra.mxu0 0.0
  %1907 = vmatprep.subr.mxu0 0.0
  %1908 = vmatpush1.msra.mxu0 0.0
  %1909 = vmatprep.subr.mxu0 0.0
  %1910 = vmatpush1.msra.mxu0 0.0
  %1911 = vmatprep.subr.mxu0 0.0
  %1912 = vmatpush1.msra.mxu0 0.0
  %1913 = vmatprep.subr.mxu0 0.0
  %1914 = vmatpush1.msra.mxu0 0.0
  %1915 = vmatprep.subr.mxu0 0.0
  %1916 = vmatpush1.msra.mxu0 0.0
  %1917 = vmatprep.subr.mxu0 0.0
  %1918 = vmatpush1.msra.mxu0 0.0
  %1919 = vmatprep.subr.mxu0 0.0
  %1920 = vmatpush1.msra.mxu0 0.0
  %1921 = vmatprep.subr.mxu0 0.0
  %1922 = vmatpush1.msra.mxu0 0.0
  %1923 = vmatprep.subr.mxu0 0.0
  %1924 = vmatpush1.msra.mxu0 0.0
  %1925 = vmatprep.subr.mxu0 0.0
  %1926 = vmatpush1.msra.mxu0 0.0
  %1927 = vmatprep.subr.mxu0 0.0
  %1928 = vmatpush1.msra.mxu0 0.0
  %1929 = vmatprep.subr.mxu0 0.0
  %1930 = vmatpush1.msra.mxu0 0.0
  %1931 = vmatprep.subr.mxu0 0.0
  %1932 = vmatpush1.msra.mxu0 0.0
  %1933 = vmatprep.subr.mxu0 0.0
  %1934 = vmatpush1.msra.mxu0 0.0
  %1935 = vmatprep.mubr.f32.mxu0 0.0
  %1936 = vmatmul.mubr.f32.gmra.mrb[0].mxu0 %v1848
  %v1937 = vpop.f32.mrb[0].mxu0
  %v1938 = vadd.f32 0.0, %v1937
  %v1939 = vpop.f32.mrb[0].mxu0
  %1940 = vmatprep.mubr.f32.mxu0 0.0
  %1941 = vmatmul.mubr.f32.gmra.mrb[0].mxu0 %v1851
  %v1942 = vpop.f32.mrb[0].mxu0
  %v1943 = vadd.f32 0.0, %v1942
  %v1944 = vpop.f32.mrb[0].mxu0
  %1945 = vmatprep.mubr.f32.mxu0 0.0
  %1946 = vmatmul.mubr.f32.gmra.mrb[0].mxu0 %v1854
  %v1947 = vpop.f32.mrb[0].mxu0
  %v1948 = vadd.f32 0.0, %v1947
  %v1949 = vpop.f32.mrb[0].mxu0
  %1950 = vmatprep.mubr.f32.mxu0 0.0
  %1951 = vmatmul.mubr.f32.gmra.mrb[0].mxu0 %v1857
  %v1952 = vpop.f32.mrb[0].mxu0
  %v1953 = vadd.f32 0.0, %v1952
  %v1954 = vpop.f32.mrb[0].mxu0
  %1955 = vmatprep.mubr.f32.mxu0 0.0
  %1956 = vmatmul.mubr.f32.gmra.mrb[0].mxu0 %v1860
  %v1957 = vpop.f32.mrb[0].mxu0
  %v1958 = vadd.f32 0.0, %v1957
  %v1959 = vpop.f32.mrb[0].mxu0
  %1960 = vmatprep.mubr.f32.mxu0 0.0
  %1961 = vmatmul.mubr.f32.gmra.mrb[0].mxu0 %v1863
  %v1962 = vpop.f32.mrb[0].mxu0
  %v1963 = vadd.f32 0.0, %v1962
  %v1964 = vpop.f32.mrb[0].mxu0
  %1965 = vmatprep.mubr.f32.mxu0 0.0
  %1966 = vmatmul.mubr.f32.gmra.mrb[0].mxu0 %v1866
  %v1967 = vpop.f32.mrb[0].mxu0
  %v1968 = vadd.f32 0.0, %v1967
  %v1969 = vpop.f32.mrb[0].mxu0
  %1970 = vmatprep.mubr.f32.mxu0 0.0
  %1971 = vmatmul.mubr.f32.gmra.mrb[0].mxu0 %v1869
  %v1972 = vpop.f32.mrb[0].mxu0
  %v1973 = vadd.f32 0.0, %v1972
  %v1974 = vpop.f32.mrb[0].mxu0
  %1975 = vdwg.mxu0
  %1976 = vrot.lane.b32.xlu0 %v465, 56
  %v1977 = vpop.permute.xlu0 %1976
  %1978 = vrot.lane.b32.xlu0 %v470, 56
  %v1979 = vpop.permute.xlu0 %1978
  %1980 = vrot.lane.b32.xlu0 %v475, 56
  %v1981 = vpop.permute.xlu0 %1980
  %1982 = vrot.lane.b32.xlu0 %v480, 56
  %v1983 = vpop.permute.xlu0 %1982
  %1984 = vrot.lane.b32.xlu0 %v485, 56
  %v1985 = vpop.permute.xlu0 %1984
  %1986 = vrot.lane.b32.xlu0 %v490, 56
  %v1987 = vpop.permute.xlu0 %1986
  %1988 = vrot.lane.b32.xlu0 %v495, 56
  %v1989 = vpop.permute.xlu0 %1988
  %1990 = vrot.lane.b32.xlu0 %v500, 56
  %v1991 = vpop.permute.xlu0 %1990
  %v2001 = vsel %vm826, %v1815, 0
  %v2004 = vsel %vm826, %v1816, 0
  %v2007 = vsel %vm826, %v1817, 0
  %v2010 = vsel %vm826, %v1818, 0
  %v2013 = vsel %vm826, %v1819, 0
  %v2016 = vsel %vm826, %v1820, 0
  %v2019 = vsel %vm826, %v1821, 0
  %v2022 = vsel %vm826, %v1822, 0
  %2024 = vmatprep.subr.mxu0 0.0
  %2025 = vmatpush1.msra.mxu0 %v1977
  %2026 = vmatprep.subr.mxu0 0.0
  %2027 = vmatpush1.msra.mxu0 %v1979
  %2028 = vmatprep.subr.mxu0 0.0
  %2029 = vmatpush1.msra.mxu0 %v1981
  %2030 = vmatprep.subr.mxu0 0.0
  %2031 = vmatpush1.msra.mxu0 %v1983
  %2032 = vmatprep.subr.mxu0 0.0
  %2033 = vmatpush1.msra.mxu0 %v1985
  %2034 = vmatprep.subr.mxu0 0.0
  %2035 = vmatpush1.msra.mxu0 %v1987
  %2036 = vmatprep.subr.mxu0 0.0
  %2037 = vmatpush1.msra.mxu0 %v1989
  %2038 = vmatprep.subr.mxu0 0.0
  %2039 = vmatpush1.msra.mxu0 %v1991
  %2040 = vmatprep.subr.mxu0 0.0
  %2041 = vmatpush1.msra.mxu0 0.0
  %2042 = vmatprep.subr.mxu0 0.0
  %2043 = vmatpush1.msra.mxu0 0.0
  %2044 = vmatprep.subr.mxu0 0.0
  %2045 = vmatpush1.msra.mxu0 0.0
  %2046 = vmatprep.subr.mxu0 0.0
  %2047 = vmatpush1.msra.mxu0 0.0
  %2048 = vmatprep.subr.mxu0 0.0
  %2049 = vmatpush1.msra.mxu0 0.0
  %2050 = vmatprep.subr.mxu0 0.0
  %2051 = vmatpush1.msra.mxu0 0.0
  %2052 = vmatprep.subr.mxu0 0.0
  %2053 = vmatpush1.msra.mxu0 0.0
  %2054 = vmatprep.subr.mxu0 0.0
  %2055 = vmatpush1.msra.mxu0 0.0
  %2056 = vmatprep.subr.mxu0 0.0
  %2057 = vmatpush1.msra.mxu0 0.0
  %2058 = vmatprep.subr.mxu0 0.0
  %2059 = vmatpush1.msra.mxu0 0.0
  %2060 = vmatprep.subr.mxu0 0.0
  %2061 = vmatpush1.msra.mxu0 0.0
  %2062 = vmatprep.subr.mxu0 0.0
  %2063 = vmatpush1.msra.mxu0 0.0
  %2064 = vmatprep.subr.mxu0 0.0
  %2065 = vmatpush1.msra.mxu0 0.0
  %2066 = vmatprep.subr.mxu0 0.0
  %2067 = vmatpush1.msra.mxu0 0.0
  %2068 = vmatprep.subr.mxu0 0.0
  %2069 = vmatpush1.msra.mxu0 0.0
  %2070 = vmatprep.subr.mxu0 0.0
  %2071 = vmatpush1.msra.mxu0 0.0
  %2072 = vmatprep.subr.mxu0 0.0
  %2073 = vmatpush1.msra.mxu0 0.0
  %2074 = vmatprep.subr.mxu0 0.0
  %2075 = vmatpush1.msra.mxu0 0.0
  %2076 = vmatprep.subr.mxu0 0.0
  %2077 = vmatpush1.msra.mxu0 0.0
  %2078 = vmatprep.subr.mxu0 0.0
  %2079 = vmatpush1.msra.mxu0 0.0
  %2080 = vmatprep.subr.mxu0 0.0
  %2081 = vmatpush1.msra.mxu0 0.0
  %2082 = vmatprep.subr.mxu0 0.0
  %2083 = vmatpush1.msra.mxu0 0.0
  %2084 = vmatprep.subr.mxu0 0.0
  %2085 = vmatpush1.msra.mxu0 0.0
  %2086 = vmatprep.subr.mxu0 0.0
  %2087 = vmatpush1.msra.mxu0 0.0
  %2088 = vmatprep.mubr.f32.mxu0 0.0
  %2089 = vmatmul.mubr.f32.gmra.mrb[0].mxu0 %v2001
  %v2090 = vpop.f32.mrb[0].mxu0
  %v2091 = vadd.f32 0.0, %v2090
  %v2092 = vpop.f32.mrb[0].mxu0
  %2093 = vmatprep.mubr.f32.mxu0 0.0
  %2094 = vmatmul.mubr.f32.gmra.mrb[0].mxu0 %v2004
  %v2095 = vpop.f32.mrb[0].mxu0
  %v2096 = vadd.f32 0.0, %v2095
  %v2097 = vpop.f32.mrb[0].mxu0
  %2098 = vmatprep.mubr.f32.mxu0 0.0
  %2099 = vmatmul.mubr.f32.gmra.mrb[0].mxu0 %v2007
  %v2100 = vpop.f32.mrb[0].mxu0
  %v2101 = vadd.f32 0.0, %v2100
  %v2102 = vpop.f32.mrb[0].mxu0
  %2103 = vmatprep.mubr.f32.mxu0 0.0
  %2104 = vmatmul.mubr.f32.gmra.mrb[0].mxu0 %v2010
  %v2105 = vpop.f32.mrb[0].mxu0
  %v2106 = vadd.f32 0.0, %v2105
  %v2107 = vpop.f32.mrb[0].mxu0
  %2108 = vmatprep.mubr.f32.mxu0 0.0
  %2109 = vmatmul.mubr.f32.gmra.mrb[0].mxu0 %v2013
  %v2110 = vpop.f32.mrb[0].mxu0
  %v2111 = vadd.f32 0.0, %v2110
  %v2112 = vpop.f32.mrb[0].mxu0
  %2113 = vmatprep.mubr.f32.mxu0 0.0
  %2114 = vmatmul.mubr.f32.gmra.mrb[0].mxu0 %v2016
  %v2115 = vpop.f32.mrb[0].mxu0
  %v2116 = vadd.f32 0.0, %v2115
  %v2117 = vpop.f32.mrb[0].mxu0
  %2118 = vmatprep.mubr.f32.mxu0 0.0
  %2119 = vmatmul.mubr.f32.gmra.mrb[0].mxu0 %v2019
  %v2120 = vpop.f32.mrb[0].mxu0
  %v2121 = vadd.f32 0.0, %v2120
  %v2122 = vpop.f32.mrb[0].mxu0
  %2123 = vmatprep.mubr.f32.mxu0 0.0
  %2124 = vmatmul.mubr.f32.gmra.mrb[0].mxu0 %v2022
  %v2125 = vpop.f32.mrb[0].mxu0
  %v2126 = vadd.f32 0.0, %v2125
  %v2127 = vpop.f32.mrb[0].mxu0
  %2128 = vdwg.mxu0
  %2129 = vrot.lane.b32.xlu0 %v425, 112
  %v2130 = vpop.permute.xlu0 %2129
  %2131 = vrot.lane.b32.xlu0 %v430, 112
  %v2132 = vpop.permute.xlu0 %2131
  %2133 = vrot.lane.b32.xlu0 %v435, 112
  %v2134 = vpop.permute.xlu0 %2133
  %2135 = vrot.lane.b32.xlu0 %v440, 112
  %v2136 = vpop.permute.xlu0 %2135
  %2137 = vrot.lane.b32.xlu0 %v445, 112
  %v2138 = vpop.permute.xlu0 %2137
  %2139 = vrot.lane.b32.xlu0 %v450, 112
  %v2140 = vpop.permute.xlu0 %2139
  %2141 = vrot.lane.b32.xlu0 %v455, 112
  %v2142 = vpop.permute.xlu0 %2141
  %2143 = vrot.lane.b32.xlu0 %v460, 112
  %v2144 = vpop.permute.xlu0 %2143
  %2145 = vrot.lane.b32.xlu0 %v425, 80
  %v2146 = vpop.permute.xlu0 %2145
  %2147 = vrot.lane.b32.xlu0 %v430, 80
  %v2148 = vpop.permute.xlu0 %2147
  %2149 = vrot.lane.b32.xlu0 %v435, 80
  %v2150 = vpop.permute.xlu0 %2149
  %2151 = vrot.lane.b32.xlu0 %v440, 80
  %v2152 = vpop.permute.xlu0 %2151
  %2153 = vrot.lane.b32.xlu0 %v445, 80
  %v2154 = vpop.permute.xlu0 %2153
  %2155 = vrot.lane.b32.xlu0 %v450, 80
  %v2156 = vpop.permute.xlu0 %2155
  %2157 = vrot.lane.b32.xlu0 %v455, 80
  %v2158 = vpop.permute.xlu0 %2157
  %2159 = vrot.lane.b32.xlu0 %v460, 80
  %v2160 = vpop.permute.xlu0 %2159
  %v2161 = vsel %vm527, %v2130, 0
  %v2163 = vsel %vm527, %v2132, 0
  %v2165 = vsel %vm527, %v2134, 0
  %v2167 = vsel %vm527, %v2136, 0
  %v2169 = vsel %vm527, %v2138, 0
  %v2171 = vsel %vm527, %v2140, 0
  %v2173 = vsel %vm527, %v2142, 0
  %v2175 = vsel %vm527, %v2144, 0
  %v2177 = vsel %vm527, %v2146, 0
  %v2179 = vsel %vm527, %v2148, 0
  %v2181 = vsel %vm527, %v2150, 0
  %v2183 = vsel %vm527, %v2152, 0
  %v2185 = vsel %vm527, %v2154, 0
  %v2187 = vsel %vm527, %v2156, 0
  %v2189 = vsel %vm527, %v2158, 0
  %v2191 = vsel %vm527, %v2160, 0
  %2193 = vmatprep.subr.mxu0 0.0
  %2194 = vmatpush1.xpose.msra.mxu0 %v2177
  %2195 = vmatprep.subr.mxu0 0.0
  %2196 = vmatpush1.xpose.msra.mxu0 %v2179
  %2197 = vmatprep.subr.mxu0 0.0
  %2198 = vmatpush1.xpose.msra.mxu0 %v2181
  %2199 = vmatprep.subr.mxu0 0.0
  %2200 = vmatpush1.xpose.msra.mxu0 %v2183
  %2201 = vmatprep.subr.mxu0 0.0
  %2202 = vmatpush1.xpose.msra.mxu0 %v2185
  %2203 = vmatprep.subr.mxu0 0.0
  %2204 = vmatpush1.xpose.msra.mxu0 %v2187
  %2205 = vmatprep.subr.mxu0 0.0
  %2206 = vmatpush1.xpose.msra.mxu0 %v2189
  %2207 = vmatprep.subr.mxu0 0.0
  %2208 = vmatpush1.xpose.msra.mxu0 %v2191
  %2209 = vmatprep.subr.mxu0 0.0
  %2210 = vmatpush1.xpose.msra.mxu0 0.0
  %2211 = vmatprep.subr.mxu0 0.0
  %2212 = vmatpush1.xpose.msra.mxu0 0.0
  %2213 = vmatprep.subr.mxu0 0.0
  %2214 = vmatpush1.xpose.msra.mxu0 0.0
  %2215 = vmatprep.subr.mxu0 0.0
  %2216 = vmatpush1.xpose.msra.mxu0 0.0
  %2217 = vmatprep.subr.mxu0 0.0
  %2218 = vmatpush1.xpose.msra.mxu0 0.0
  %2219 = vmatprep.subr.mxu0 0.0
  %2220 = vmatpush1.xpose.msra.mxu0 0.0
  %2221 = vmatprep.subr.mxu0 0.0
  %2222 = vmatpush1.xpose.msra.mxu0 0.0
  %2223 = vmatprep.subr.mxu0 0.0
  %2224 = vmatpush1.xpose.msra.mxu0 0.0
  %2225 = vmatprep.subr.mxu0 0.0
  %2226 = vmatpush1.xpose.msra.mxu0 0.0
  %2227 = vmatprep.subr.mxu0 0.0
  %2228 = vmatpush1.xpose.msra.mxu0 0.0
  %2229 = vmatprep.subr.mxu0 0.0
  %2230 = vmatpush1.xpose.msra.mxu0 0.0
  %2231 = vmatprep.subr.mxu0 0.0
  %2232 = vmatpush1.xpose.msra.mxu0 0.0
  %2233 = vmatprep.subr.mxu0 0.0
  %2234 = vmatpush1.xpose.msra.mxu0 0.0
  %2235 = vmatprep.subr.mxu0 0.0
  %2236 = vmatpush1.xpose.msra.mxu0 0.0
  %2237 = vmatprep.subr.mxu0 0.0
  %2238 = vmatpush1.xpose.msra.mxu0 0.0
  %2239 = vmatprep.subr.mxu0 0.0
  %2240 = vmatpush1.xpose.msra.mxu0 0.0
  %2241 = vmatprep.subr.mxu0 0.0
  %2242 = vmatpush1.xpose.msra.mxu0 0.0
  %2243 = vmatprep.subr.mxu0 0.0
  %2244 = vmatpush1.xpose.msra.mxu0 0.0
  %2245 = vmatprep.subr.mxu0 0.0
  %2246 = vmatpush1.xpose.msra.mxu0 0.0
  %2247 = vmatprep.subr.mxu0 0.0
  %2248 = vmatpush1.xpose.msra.mxu0 0.0
  %2249 = vmatprep.subr.mxu0 0.0
  %2250 = vmatpush1.xpose.msra.mxu0 0.0
  %2251 = vmatprep.subr.mxu0 0.0
  %2252 = vmatpush1.xpose.msra.mxu0 0.0
  %2253 = vmatprep.subr.mxu0 0.0
  %2254 = vmatpush1.xpose.msra.mxu0 0.0
  %2255 = vmatprep.subr.mxu0 0.0
  %2256 = vmatpush1.xpose.msra.mxu0 0.0
  %2257 = vmatprep.mubr.f32.mxu0 0.0
  %2258 = vmatmul.mubr.f32.gmra.mrb[0].mxu0 %v2161
  %v2259 = vpop.f32.mrb[0].mxu0
  %v2260 = vadd.f32 0.0, %v2259
  %v2261 = vpop.f32.mrb[0].mxu0
  %2262 = vmatprep.mubr.f32.mxu0 0.0
  %2263 = vmatmul.mubr.f32.gmra.mrb[0].mxu0 %v2163
  %v2264 = vpop.f32.mrb[0].mxu0
  %v2265 = vadd.f32 0.0, %v2264
  %v2266 = vpop.f32.mrb[0].mxu0
  %2267 = vmatprep.mubr.f32.mxu0 0.0
  %2268 = vmatmul.mubr.f32.gmra.mrb[0].mxu0 %v2165
  %v2269 = vpop.f32.mrb[0].mxu0
  %v2270 = vadd.f32 0.0, %v2269
  %v2271 = vpop.f32.mrb[0].mxu0
  %2272 = vmatprep.mubr.f32.mxu0 0.0
  %2273 = vmatmul.mubr.f32.gmra.mrb[0].mxu0 %v2167
  %v2274 = vpop.f32.mrb[0].mxu0
  %v2275 = vadd.f32 0.0, %v2274
  %v2276 = vpop.f32.mrb[0].mxu0
  %2277 = vmatprep.mubr.f32.mxu0 0.0
  %2278 = vmatmul.mubr.f32.gmra.mrb[0].mxu0 %v2169
  %v2279 = vpop.f32.mrb[0].mxu0
  %v2280 = vadd.f32 0.0, %v2279
  %v2281 = vpop.f32.mrb[0].mxu0
  %2282 = vmatprep.mubr.f32.mxu0 0.0
  %2283 = vmatmul.mubr.f32.gmra.mrb[0].mxu0 %v2171
  %v2284 = vpop.f32.mrb[0].mxu0
  %v2285 = vadd.f32 0.0, %v2284
  %v2286 = vpop.f32.mrb[0].mxu0
  %2287 = vmatprep.mubr.f32.mxu0 0.0
  %2288 = vmatmul.mubr.f32.gmra.mrb[0].mxu0 %v2173
  %v2289 = vpop.f32.mrb[0].mxu0
  %v2290 = vadd.f32 0.0, %v2289
  %v2291 = vpop.f32.mrb[0].mxu0
  %2292 = vmatprep.mubr.f32.mxu0 0.0
  %2293 = vmatmul.mubr.f32.gmra.mrb[0].mxu0 %v2175
  %v2294 = vpop.f32.mrb[0].mxu0
  %v2295 = vadd.f32 0.0, %v2294
  %v2296 = vpop.f32.mrb[0].mxu0
  %2297 = vdwg.mxu0
  %2298 = vrot.lane.b32.xlu0 %v465, 112
  %v2299 = vpop.permute.xlu0 %2298
  %2300 = vrot.lane.b32.xlu0 %v470, 112
  %v2301 = vpop.permute.xlu0 %2300
  %2302 = vrot.lane.b32.xlu0 %v475, 112
  %v2303 = vpop.permute.xlu0 %2302
  %2304 = vrot.lane.b32.xlu0 %v480, 112
  %v2305 = vpop.permute.xlu0 %2304
  %2306 = vrot.lane.b32.xlu0 %v485, 112
  %v2307 = vpop.permute.xlu0 %2306
  %2308 = vrot.lane.b32.xlu0 %v490, 112
  %v2309 = vpop.permute.xlu0 %2308
  %2310 = vrot.lane.b32.xlu0 %v495, 112
  %v2311 = vpop.permute.xlu0 %2310
  %2312 = vrot.lane.b32.xlu0 %v500, 112
  %v2313 = vpop.permute.xlu0 %2312
  %2314 = vrot.lane.b32.xlu0 %v465, 80
  %v2315 = vpop.permute.xlu0 %2314
  %2316 = vrot.lane.b32.xlu0 %v470, 80
  %v2317 = vpop.permute.xlu0 %2316
  %2318 = vrot.lane.b32.xlu0 %v475, 80
  %v2319 = vpop.permute.xlu0 %2318
  %2320 = vrot.lane.b32.xlu0 %v480, 80
  %v2321 = vpop.permute.xlu0 %2320
  %2322 = vrot.lane.b32.xlu0 %v485, 80
  %v2323 = vpop.permute.xlu0 %2322
  %2324 = vrot.lane.b32.xlu0 %v490, 80
  %v2325 = vpop.permute.xlu0 %2324
  %2326 = vrot.lane.b32.xlu0 %v495, 80
  %v2327 = vpop.permute.xlu0 %2326
  %2328 = vrot.lane.b32.xlu0 %v500, 80
  %v2329 = vpop.permute.xlu0 %2328
  %v2330 = vsel %vm527, %v2299, 0
  %v2332 = vsel %vm527, %v2301, 0
  %v2334 = vsel %vm527, %v2303, 0
  %v2336 = vsel %vm527, %v2305, 0
  %v2338 = vsel %vm527, %v2307, 0
  %v2340 = vsel %vm527, %v2309, 0
  %v2342 = vsel %vm527, %v2311, 0
  %v2344 = vsel %vm527, %v2313, 0
  %v2346 = vsel %vm527, %v2315, 0
  %v2348 = vsel %vm527, %v2317, 0
  %v2350 = vsel %vm527, %v2319, 0
  %v2352 = vsel %vm527, %v2321, 0
  %v2354 = vsel %vm527, %v2323, 0
  %v2356 = vsel %vm527, %v2325, 0
  %v2358 = vsel %vm527, %v2327, 0
  %v2360 = vsel %vm527, %v2329, 0
  %2362 = vmatprep.subr.mxu0 0.0
  %2363 = vmatpush1.xpose.msra.mxu0 %v2346
  %2364 = vmatprep.subr.mxu0 0.0
  %2365 = vmatpush1.xpose.msra.mxu0 %v2348
  %2366 = vmatprep.subr.mxu0 0.0
  %2367 = vmatpush1.xpose.msra.mxu0 %v2350
  %2368 = vmatprep.subr.mxu0 0.0
  %2369 = vmatpush1.xpose.msra.mxu0 %v2352
  %2370 = vmatprep.subr.mxu0 0.0
  %2371 = vmatpush1.xpose.msra.mxu0 %v2354
  %2372 = vmatprep.subr.mxu0 0.0
  %2373 = vmatpush1.xpose.msra.mxu0 %v2356
  %2374 = vmatprep.subr.mxu0 0.0
  %2375 = vmatpush1.xpose.msra.mxu0 %v2358
  %2376 = vmatprep.subr.mxu0 0.0
  %2377 = vmatpush1.xpose.msra.mxu0 %v2360
  %2378 = vmatprep.subr.mxu0 0.0
  %2379 = vmatpush1.xpose.msra.mxu0 0.0
  %2380 = vmatprep.subr.mxu0 0.0
  %2381 = vmatpush1.xpose.msra.mxu0 0.0
  %2382 = vmatprep.subr.mxu0 0.0
  %2383 = vmatpush1.xpose.msra.mxu0 0.0
  %2384 = vmatprep.subr.mxu0 0.0
  %2385 = vmatpush1.xpose.msra.mxu0 0.0
  %2386 = vmatprep.subr.mxu0 0.0
  %2387 = vmatpush1.xpose.msra.mxu0 0.0
  %2388 = vmatprep.subr.mxu0 0.0
  %2389 = vmatpush1.xpose.msra.mxu0 0.0
  %2390 = vmatprep.subr.mxu0 0.0
  %2391 = vmatpush1.xpose.msra.mxu0 0.0
  %2392 = vmatprep.subr.mxu0 0.0
  %2393 = vmatpush1.xpose.msra.mxu0 0.0
  %2394 = vmatprep.subr.mxu0 0.0
  %2395 = vmatpush1.xpose.msra.mxu0 0.0
  %2396 = vmatprep.subr.mxu0 0.0
  %2397 = vmatpush1.xpose.msra.mxu0 0.0
  %2398 = vmatprep.subr.mxu0 0.0
  %2399 = vmatpush1.xpose.msra.mxu0 0.0
  %2400 = vmatprep.subr.mxu0 0.0
  %2401 = vmatpush1.xpose.msra.mxu0 0.0
  %2402 = vmatprep.subr.mxu0 0.0
  %2403 = vmatpush1.xpose.msra.mxu0 0.0
  %2404 = vmatprep.subr.mxu0 0.0
  %2405 = vmatpush1.xpose.msra.mxu0 0.0
  %2406 = vmatprep.subr.mxu0 0.0
  %2407 = vmatpush1.xpose.msra.mxu0 0.0
  %2408 = vmatprep.subr.mxu0 0.0
  %2409 = vmatpush1.xpose.msra.mxu0 0.0
  %2410 = vmatprep.subr.mxu0 0.0
  %2411 = vmatpush1.xpose.msra.mxu0 0.0
  %2412 = vmatprep.subr.mxu0 0.0
  %2413 = vmatpush1.xpose.msra.mxu0 0.0
  %2414 = vmatprep.subr.mxu0 0.0
  %2415 = vmatpush1.xpose.msra.mxu0 0.0
  %2416 = vmatprep.subr.mxu0 0.0
  %2417 = vmatpush1.xpose.msra.mxu0 0.0
  %2418 = vmatprep.subr.mxu0 0.0
  %2419 = vmatpush1.xpose.msra.mxu0 0.0
  %2420 = vmatprep.subr.mxu0 0.0
  %2421 = vmatpush1.xpose.msra.mxu0 0.0
  %2422 = vmatprep.subr.mxu0 0.0
  %2423 = vmatpush1.xpose.msra.mxu0 0.0
  %2424 = vmatprep.subr.mxu0 0.0
  %2425 = vmatpush1.xpose.msra.mxu0 0.0
  %2426 = vmatprep.mubr.f32.mxu0 0.0
  %2427 = vmatmul.mubr.f32.gmra.mrb[0].mxu0 %v2330
  %v2428 = vpop.f32.mrb[0].mxu0
  %v2429 = vadd.f32 0.0, %v2428
  %v2430 = vpop.f32.mrb[0].mxu0
  %2431 = vmatprep.mubr.f32.mxu0 0.0
  %2432 = vmatmul.mubr.f32.gmra.mrb[0].mxu0 %v2332
  %v2433 = vpop.f32.mrb[0].mxu0
  %v2434 = vadd.f32 0.0, %v2433
  %v2435 = vpop.f32.mrb[0].mxu0
  %2436 = vmatprep.mubr.f32.mxu0 0.0
  %2437 = vmatmul.mubr.f32.gmra.mrb[0].mxu0 %v2334
  %v2438 = vpop.f32.mrb[0].mxu0
  %v2439 = vadd.f32 0.0, %v2438
  %v2440 = vpop.f32.mrb[0].mxu0
  %2441 = vmatprep.mubr.f32.mxu0 0.0
  %2442 = vmatmul.mubr.f32.gmra.mrb[0].mxu0 %v2336
  %v2443 = vpop.f32.mrb[0].mxu0
  %v2444 = vadd.f32 0.0, %v2443
  %v2445 = vpop.f32.mrb[0].mxu0
  %2446 = vmatprep.mubr.f32.mxu0 0.0
  %2447 = vmatmul.mubr.f32.gmra.mrb[0].mxu0 %v2338
  %v2448 = vpop.f32.mrb[0].mxu0
  %v2449 = vadd.f32 0.0, %v2448
  %v2450 = vpop.f32.mrb[0].mxu0
  %2451 = vmatprep.mubr.f32.mxu0 0.0
  %2452 = vmatmul.mubr.f32.gmra.mrb[0].mxu0 %v2340
  %v2453 = vpop.f32.mrb[0].mxu0
  %v2454 = vadd.f32 0.0, %v2453
  %v2455 = vpop.f32.mrb[0].mxu0
  %2456 = vmatprep.mubr.f32.mxu0 0.0
  %2457 = vmatmul.mubr.f32.gmra.mrb[0].mxu0 %v2342
  %v2458 = vpop.f32.mrb[0].mxu0
  %v2459 = vadd.f32 0.0, %v2458
  %v2460 = vpop.f32.mrb[0].mxu0
  %2461 = vmatprep.mubr.f32.mxu0 0.0
  %2462 = vmatmul.mubr.f32.gmra.mrb[0].mxu0 %v2344
  %v2463 = vpop.f32.mrb[0].mxu0
  %v2464 = vadd.f32 0.0, %v2463
  %v2465 = vpop.f32.mrb[0].mxu0
  %2466 = vdwg.mxu0
  %v2467 = vsel %vm826, %v2260, -inf
  %2468 = vmax.xlane.f32.xlu0 %v2467
  %v2469 = vpop.xlane.xlu0 %2468
  %v2470 = vsel %vm826, %v2265, -inf
  %2471 = vmax.xlane.f32.xlu0 %v2470
  %v2472 = vpop.xlane.xlu0 %2471
  %v2473 = vsel %vm826, %v2270, -inf
  %2474 = vmax.xlane.f32.xlu0 %v2473
  %v2475 = vpop.xlane.xlu0 %2474
  %v2476 = vsel %vm826, %v2275, -inf
  %2477 = vmax.xlane.f32.xlu0 %v2476
  %v2478 = vpop.xlane.xlu0 %2477
  %v2479 = vsel %vm826, %v2280, -inf
  %2480 = vmax.xlane.f32.xlu0 %v2479
  %v2481 = vpop.xlane.xlu0 %2480
  %v2482 = vsel %vm826, %v2285, -inf
  %2483 = vmax.xlane.f32.xlu0 %v2482
  %v2484 = vpop.xlane.xlu0 %2483
  %v2485 = vsel %vm826, %v2290, -inf
  %2486 = vmax.xlane.f32.xlu0 %v2485
  %v2487 = vpop.xlane.xlu0 %2486
  %v2488 = vsel %vm826, %v2295, -inf
  %2489 = vmax.xlane.f32.xlu0 %v2488
  %v2490 = vpop.xlane.xlu0 %2489
  %v2491 = vsel %vm826, %v2429, -inf
  %2492 = vmax.xlane.f32.xlu0 %v2491
  %v2493 = vpop.xlane.xlu0 %2492
  %v2494 = vsel %vm826, %v2434, -inf
  %2495 = vmax.xlane.f32.xlu0 %v2494
  %v2496 = vpop.xlane.xlu0 %2495
  %v2497 = vsel %vm826, %v2439, -inf
  %2498 = vmax.xlane.f32.xlu0 %v2497
  %v2499 = vpop.xlane.xlu0 %2498
  %v2500 = vsel %vm826, %v2444, -inf
  %2501 = vmax.xlane.f32.xlu0 %v2500
  %v2502 = vpop.xlane.xlu0 %2501
  %v2503 = vsel %vm826, %v2449, -inf
  %2504 = vmax.xlane.f32.xlu0 %v2503
  %v2505 = vpop.xlane.xlu0 %2504
  %v2506 = vsel %vm826, %v2454, -inf
  %2507 = vmax.xlane.f32.xlu0 %v2506
  %v2508 = vpop.xlane.xlu0 %2507
  %v2509 = vsel %vm826, %v2459, -inf
  %2510 = vmax.xlane.f32.xlu0 %v2509
  %v2511 = vpop.xlane.xlu0 %2510
  %v2512 = vsel %vm826, %v2464, -inf
  %2513 = vmax.xlane.f32.xlu0 %v2512
  %v2514 = vpop.xlane.xlu0 %2513
  %v2515 = vsub.f32 %v2260, %v2469
  %v2516 = vsub.f32 %v2265, %v2472
  %v2517 = vsub.f32 %v2270, %v2475
  %v2518 = vsub.f32 %v2275, %v2478
  %v2519 = vsub.f32 %v2280, %v2481
  %v2520 = vsub.f32 %v2285, %v2484
  %v2521 = vsub.f32 %v2290, %v2487
  %v2522 = vsub.f32 %v2295, %v2490
  %v2523 = vsub.f32 %v2429, %v2493
  %v2524 = vsub.f32 %v2434, %v2496
  %v2525 = vsub.f32 %v2439, %v2499
  %v2526 = vsub.f32 %v2444, %v2502
  %v2527 = vsub.f32 %v2449, %v2505
  %v2528 = vsub.f32 %v2454, %v2508
  %v2529 = vsub.f32 %v2459, %v2511
  %v2530 = vsub.f32 %v2464, %v2514
  %v2531 = vmul.f32 %v2515, 1.442695
  %v2532 = vpow.pop %v2531
  %v2533 = vmul.f32 %v2516, 1.442695
  %v2534 = vpow.pop %v2533
  %v2535 = vmul.f32 %v2517, 1.442695
  %v2536 = vpow.pop %v2535
  %v2537 = vmul.f32 %v2518, 1.442695
  %v2538 = vpow.pop %v2537
  %v2539 = vmul.f32 %v2519, 1.442695
  %v2540 = vpow.pop %v2539
  %v2541 = vmul.f32 %v2520, 1.442695
  %v2542 = vpow.pop %v2541
  %v2543 = vmul.f32 %v2521, 1.442695
  %v2544 = vpow.pop %v2543
  %v2545 = vmul.f32 %v2522, 1.442695
  %v2546 = vpow.pop %v2545
  %v2547 = vmul.f32 %v2523, 1.442695
  %v2548 = vpow.pop %v2547
  %v2549 = vmul.f32 %v2524, 1.442695
  %v2550 = vpow.pop %v2549
  %v2551 = vmul.f32 %v2525, 1.442695
  %v2552 = vpow.pop %v2551
  %v2553 = vmul.f32 %v2526, 1.442695
  %v2554 = vpow.pop %v2553
  %v2555 = vmul.f32 %v2527, 1.442695
  %v2556 = vpow.pop %v2555
  %v2557 = vmul.f32 %v2528, 1.442695
  %v2558 = vpow.pop %v2557
  %v2559 = vmul.f32 %v2529, 1.442695
  %v2560 = vpow.pop %v2559
  %v2561 = vmul.f32 %v2530, 1.442695
  %v2562 = vpow.pop %v2561
  %v2563 = vsel %vm826, %v2532, 0.0
  %2564 = vadd.xlane.f32.xlu0 %v2563
  %v2565 = vpop.xlane.xlu0 %2564
  %v2566 = vsel %vm826, %v2534, 0.0
  %2567 = vadd.xlane.f32.xlu0 %v2566
  %v2568 = vpop.xlane.xlu0 %2567
  %v2569 = vsel %vm826, %v2536, 0.0
  %2570 = vadd.xlane.f32.xlu0 %v2569
  %v2571 = vpop.xlane.xlu0 %2570
  %v2572 = vsel %vm826, %v2538, 0.0
  %2573 = vadd.xlane.f32.xlu0 %v2572
  %v2574 = vpop.xlane.xlu0 %2573
  %v2575 = vsel %vm826, %v2540, 0.0
  %2576 = vadd.xlane.f32.xlu0 %v2575
  %v2577 = vpop.xlane.xlu0 %2576
  %v2578 = vsel %vm826, %v2542, 0.0
  %2579 = vadd.xlane.f32.xlu0 %v2578
  %v2580 = vpop.xlane.xlu0 %2579
  %v2581 = vsel %vm826, %v2544, 0.0
  %2582 = vadd.xlane.f32.xlu0 %v2581
  %v2583 = vpop.xlane.xlu0 %2582
  %v2584 = vsel %vm826, %v2546, 0.0
  %2585 = vadd.xlane.f32.xlu0 %v2584
  %v2586 = vpop.xlane.xlu0 %2585
  %v2587 = vsel %vm826, %v2548, 0.0
  %2588 = vadd.xlane.f32.xlu0 %v2587
  %v2589 = vpop.xlane.xlu0 %2588
  %v2590 = vsel %vm826, %v2550, 0.0
  %2591 = vadd.xlane.f32.xlu0 %v2590
  %v2592 = vpop.xlane.xlu0 %2591
  %v2593 = vsel %vm826, %v2552, 0.0
  %2594 = vadd.xlane.f32.xlu0 %v2593
  %v2595 = vpop.xlane.xlu0 %2594
  %v2596 = vsel %vm826, %v2554, 0.0
  %2597 = vadd.xlane.f32.xlu0 %v2596
  %v2598 = vpop.xlane.xlu0 %2597
  %v2599 = vsel %vm826, %v2556, 0.0
  %2600 = vadd.xlane.f32.xlu0 %v2599
  %v2601 = vpop.xlane.xlu0 %2600
  %v2602 = vsel %vm826, %v2558, 0.0
  %2603 = vadd.xlane.f32.xlu0 %v2602
  %v2604 = vpop.xlane.xlu0 %2603
  %v2605 = vsel %vm826, %v2560, 0.0
  %2606 = vadd.xlane.f32.xlu0 %v2605
  %v2607 = vpop.xlane.xlu0 %2606
  %v2608 = vsel %vm826, %v2562, 0.0
  %2609 = vadd.xlane.f32.xlu0 %v2608
  %v2610 = vpop.xlane.xlu0 %2609
  %v2611 = vrcp.pop %v2565
  %v2612 = vrcp.pop %v2568
  %v2613 = vrcp.pop %v2571
  %v2614 = vrcp.pop %v2574
  %v2615 = vrcp.pop %v2577
  %v2616 = vrcp.pop %v2580
  %v2617 = vrcp.pop %v2583
  %v2618 = vrcp.pop %v2586
  %v2619 = vrcp.pop %v2589
  %v2620 = vrcp.pop %v2592
  %v2621 = vrcp.pop %v2595
  %v2622 = vrcp.pop %v2598
  %v2623 = vrcp.pop %v2601
  %v2624 = vrcp.pop %v2604
  %v2625 = vrcp.pop %v2607
  %v2626 = vrcp.pop %v2610
  %v2627 = vmul.f32 %v2532, %v2611
  %v2628 = vmul.f32 %v2534, %v2612
  %v2629 = vmul.f32 %v2536, %v2613
  %v2630 = vmul.f32 %v2538, %v2614
  %v2631 = vmul.f32 %v2540, %v2615
  %v2632 = vmul.f32 %v2542, %v2616
  %v2633 = vmul.f32 %v2544, %v2617
  %v2634 = vmul.f32 %v2546, %v2618
  %v2635 = vmul.f32 %v2548, %v2619
  %v2636 = vmul.f32 %v2550, %v2620
  %v2637 = vmul.f32 %v2552, %v2621
  %v2638 = vmul.f32 %v2554, %v2622
  %v2639 = vmul.f32 %v2556, %v2623
  %v2640 = vmul.f32 %v2558, %v2624
  %v2641 = vmul.f32 %v2560, %v2625
  %v2642 = vmul.f32 %v2562, %v2626
  %2643 = vrot.lane.b32.xlu0 %v425, 48
  %v2644 = vpop.permute.xlu0 %2643
  %2645 = vrot.lane.b32.xlu0 %v430, 48
  %v2646 = vpop.permute.xlu0 %2645
  %2647 = vrot.lane.b32.xlu0 %v435, 48
  %v2648 = vpop.permute.xlu0 %2647
  %2649 = vrot.lane.b32.xlu0 %v440, 48
  %v2650 = vpop.permute.xlu0 %2649
  %2651 = vrot.lane.b32.xlu0 %v445, 48
  %v2652 = vpop.permute.xlu0 %2651
  %2653 = vrot.lane.b32.xlu0 %v450, 48
  %v2654 = vpop.permute.xlu0 %2653
  %2655 = vrot.lane.b32.xlu0 %v455, 48
  %v2656 = vpop.permute.xlu0 %2655
  %2657 = vrot.lane.b32.xlu0 %v460, 48
  %v2658 = vpop.permute.xlu0 %2657
  %v2668 = vsel %vm826, %v2627, 0
  %v2671 = vsel %vm826, %v2628, 0
  %v2674 = vsel %vm826, %v2629, 0
  %v2677 = vsel %vm826, %v2630, 0
  %v2680 = vsel %vm826, %v2631, 0
  %v2683 = vsel %vm826, %v2632, 0
  %v2686 = vsel %vm826, %v2633, 0
  %v2689 = vsel %vm826, %v2634, 0
  %2691 = vmatprep.subr.mxu0 0.0
  %2692 = vmatpush1.msra.mxu0 %v2644
  %2693 = vmatprep.subr.mxu0 0.0
  %2694 = vmatpush1.msra.mxu0 %v2646
  %2695 = vmatprep.subr.mxu0 0.0
  %2696 = vmatpush1.msra.mxu0 %v2648
  %2697 = vmatprep.subr.mxu0 0.0
  %2698 = vmatpush1.msra.mxu0 %v2650
  %2699 = vmatprep.subr.mxu0 0.0
  %2700 = vmatpush1.msra.mxu0 %v2652
  %2701 = vmatprep.subr.mxu0 0.0
  %2702 = vmatpush1.msra.mxu0 %v2654
  %2703 = vmatprep.subr.mxu0 0.0
  %2704 = vmatpush1.msra.mxu0 %v2656
  %2705 = vmatprep.subr.mxu0 0.0
  %2706 = vmatpush1.msra.mxu0 %v2658
  %2707 = vmatprep.subr.mxu0 0.0
  %2708 = vmatpush1.msra.mxu0 0.0
  %2709 = vmatprep.subr.mxu0 0.0
  %2710 = vmatpush1.msra.mxu0 0.0
  %2711 = vmatprep.subr.mxu0 0.0
  %2712 = vmatpush1.msra.mxu0 0.0
  %2713 = vmatprep.subr.mxu0 0.0
  %2714 = vmatpush1.msra.mxu0 0.0
  %2715 = vmatprep.subr.mxu0 0.0
  %2716 = vmatpush1.msra.mxu0 0.0
  %2717 = vmatprep.subr.mxu0 0.0
  %2718 = vmatpush1.msra.mxu0 0.0
  %2719 = vmatprep.subr.mxu0 0.0
  %2720 = vmatpush1.msra.mxu0 0.0
  %2721 = vmatprep.subr.mxu0 0.0
  %2722 = vmatpush1.msra.mxu0 0.0
  %2723 = vmatprep.subr.mxu0 0.0
  %2724 = vmatpush1.msra.mxu0 0.0
  %2725 = vmatprep.subr.mxu0 0.0
  %2726 = vmatpush1.msra.mxu0 0.0
  %2727 = vmatprep.subr.mxu0 0.0
  %2728 = vmatpush1.msra.mxu0 0.0
  %2729 = vmatprep.subr.mxu0 0.0
  %2730 = vmatpush1.msra.mxu0 0.0
  %2731 = vmatprep.subr.mxu0 0.0
  %2732 = vmatpush1.msra.mxu0 0.0
  %2733 = vmatprep.subr.mxu0 0.0
  %2734 = vmatpush1.msra.mxu0 0.0
  %2735 = vmatprep.subr.mxu0 0.0
  %2736 = vmatpush1.msra.mxu0 0.0
  %2737 = vmatprep.subr.mxu0 0.0
  %2738 = vmatpush1.msra.mxu0 0.0
  %2739 = vmatprep.subr.mxu0 0.0
  %2740 = vmatpush1.msra.mxu0 0.0
  %2741 = vmatprep.subr.mxu0 0.0
  %2742 = vmatpush1.msra.mxu0 0.0
  %2743 = vmatprep.subr.mxu0 0.0
  %2744 = vmatpush1.msra.mxu0 0.0
  %2745 = vmatprep.subr.mxu0 0.0
  %2746 = vmatpush1.msra.mxu0 0.0
  %2747 = vmatprep.subr.mxu0 0.0
  %2748 = vmatpush1.msra.mxu0 0.0
  %2749 = vmatprep.subr.mxu0 0.0
  %2750 = vmatpush1.msra.mxu0 0.0
  %2751 = vmatprep.subr.mxu0 0.0
  %2752 = vmatpush1.msra.mxu0 0.0
  %2753 = vmatprep.subr.mxu0 0.0
  %2754 = vmatpush1.msra.mxu0 0.0
  %2755 = vmatprep.mubr.f32.mxu0 0.0
  %2756 = vmatmul.mubr.f32.gmra.mrb[0].mxu0 %v2668
  %v2757 = vpop.f32.mrb[0].mxu0
  %v2758 = vadd.f32 0.0, %v2757
  %v2759 = vpop.f32.mrb[0].mxu0
  %2760 = vmatprep.mubr.f32.mxu0 0.0
  %2761 = vmatmul.mubr.f32.gmra.mrb[0].mxu0 %v2671
  %v2762 = vpop.f32.mrb[0].mxu0
  %v2763 = vadd.f32 0.0, %v2762
  %v2764 = vpop.f32.mrb[0].mxu0
  %2765 = vmatprep.mubr.f32.mxu0 0.0
  %2766 = vmatmul.mubr.f32.gmra.mrb[0].mxu0 %v2674
  %v2767 = vpop.f32.mrb[0].mxu0
  %v2768 = vadd.f32 0.0, %v2767
  %v2769 = vpop.f32.mrb[0].mxu0
  %2770 = vmatprep.mubr.f32.mxu0 0.0
  %2771 = vmatmul.mubr.f32.gmra.mrb[0].mxu0 %v2677
  %v2772 = vpop.f32.mrb[0].mxu0
  %v2773 = vadd.f32 0.0, %v2772
  %v2774 = vpop.f32.mrb[0].mxu0
  %2775 = vmatprep.mubr.f32.mxu0 0.0
  %2776 = vmatmul.mubr.f32.gmra.mrb[0].mxu0 %v2680
  %v2777 = vpop.f32.mrb[0].mxu0
  %v2778 = vadd.f32 0.0, %v2777
  %v2779 = vpop.f32.mrb[0].mxu0
  %2780 = vmatprep.mubr.f32.mxu0 0.0
  %2781 = vmatmul.mubr.f32.gmra.mrb[0].mxu0 %v2683
  %v2782 = vpop.f32.mrb[0].mxu0
  %v2783 = vadd.f32 0.0, %v2782
  %v2784 = vpop.f32.mrb[0].mxu0
  %2785 = vmatprep.mubr.f32.mxu0 0.0
  %2786 = vmatmul.mubr.f32.gmra.mrb[0].mxu0 %v2686
  %v2787 = vpop.f32.mrb[0].mxu0
  %v2788 = vadd.f32 0.0, %v2787
  %v2789 = vpop.f32.mrb[0].mxu0
  %2790 = vmatprep.mubr.f32.mxu0 0.0
  %2791 = vmatmul.mubr.f32.gmra.mrb[0].mxu0 %v2689
  %v2792 = vpop.f32.mrb[0].mxu0
  %v2793 = vadd.f32 0.0, %v2792
  %v2794 = vpop.f32.mrb[0].mxu0
  %2795 = vdwg.mxu0
  %2796 = vrot.lane.b32.xlu0 %v465, 48
  %v2797 = vpop.permute.xlu0 %2796
  %2798 = vrot.lane.b32.xlu0 %v470, 48
  %v2799 = vpop.permute.xlu0 %2798
  %2800 = vrot.lane.b32.xlu0 %v475, 48
  %v2801 = vpop.permute.xlu0 %2800
  %2802 = vrot.lane.b32.xlu0 %v480, 48
  %v2803 = vpop.permute.xlu0 %2802
  %2804 = vrot.lane.b32.xlu0 %v485, 48
  %v2805 = vpop.permute.xlu0 %2804
  %2806 = vrot.lane.b32.xlu0 %v490, 48
  %v2807 = vpop.permute.xlu0 %2806
  %2808 = vrot.lane.b32.xlu0 %v495, 48
  %v2809 = vpop.permute.xlu0 %2808
  %2810 = vrot.lane.b32.xlu0 %v500, 48
  %v2811 = vpop.permute.xlu0 %2810
  %v2821 = vsel %vm826, %v2635, 0
  %v2824 = vsel %vm826, %v2636, 0
  %v2827 = vsel %vm826, %v2637, 0
  %v2830 = vsel %vm826, %v2638, 0
  %v2833 = vsel %vm826, %v2639, 0
  %v2836 = vsel %vm826, %v2640, 0
  %v2839 = vsel %vm826, %v2641, 0
  %v2842 = vsel %vm826, %v2642, 0
  %2844 = vmatprep.subr.mxu0 0.0
  %2845 = vmatpush1.msra.mxu0 %v2797
  %2846 = vmatprep.subr.mxu0 0.0
  %2847 = vmatpush1.msra.mxu0 %v2799
  %2848 = vmatprep.subr.mxu0 0.0
  %2849 = vmatpush1.msra.mxu0 %v2801
  %2850 = vmatprep.subr.mxu0 0.0
  %2851 = vmatpush1.msra.mxu0 %v2803
  %2852 = vmatprep.subr.mxu0 0.0
  %2853 = vmatpush1.msra.mxu0 %v2805
  %2854 = vmatprep.subr.mxu0 0.0
  %2855 = vmatpush1.msra.mxu0 %v2807
  %2856 = vmatprep.subr.mxu0 0.0
  %2857 = vmatpush1.msra.mxu0 %v2809
  %2858 = vmatprep.subr.mxu0 0.0
  %2859 = vmatpush1.msra.mxu0 %v2811
  %2860 = vmatprep.subr.mxu0 0.0
  %2861 = vmatpush1.msra.mxu0 0.0
  %2862 = vmatprep.subr.mxu0 0.0
  %2863 = vmatpush1.msra.mxu0 0.0
  %2864 = vmatprep.subr.mxu0 0.0
  %2865 = vmatpush1.msra.mxu0 0.0
  %2866 = vmatprep.subr.mxu0 0.0
  %2867 = vmatpush1.msra.mxu0 0.0
  %2868 = vmatprep.subr.mxu0 0.0
  %2869 = vmatpush1.msra.mxu0 0.0
  %2870 = vmatprep.subr.mxu0 0.0
  %2871 = vmatpush1.msra.mxu0 0.0
  %2872 = vmatprep.subr.mxu0 0.0
  %2873 = vmatpush1.msra.mxu0 0.0
  %2874 = vmatprep.subr.mxu0 0.0
  %2875 = vmatpush1.msra.mxu0 0.0
  %2876 = vmatprep.subr.mxu0 0.0
  %2877 = vmatpush1.msra.mxu0 0.0
  %2878 = vmatprep.subr.mxu0 0.0
  %2879 = vmatpush1.msra.mxu0 0.0
  %2880 = vmatprep.subr.mxu0 0.0
  %2881 = vmatpush1.msra.mxu0 0.0
  %2882 = vmatprep.subr.mxu0 0.0
  %2883 = vmatpush1.msra.mxu0 0.0
  %2884 = vmatprep.subr.mxu0 0.0
  %2885 = vmatpush1.msra.mxu0 0.0
  %2886 = vmatprep.subr.mxu0 0.0
  %2887 = vmatpush1.msra.mxu0 0.0
  %2888 = vmatprep.subr.mxu0 0.0
  %2889 = vmatpush1.msra.mxu0 0.0
  %2890 = vmatprep.subr.mxu0 0.0
  %2891 = vmatpush1.msra.mxu0 0.0
  %2892 = vmatprep.subr.mxu0 0.0
  %2893 = vmatpush1.msra.mxu0 0.0
  %2894 = vmatprep.subr.mxu0 0.0
  %2895 = vmatpush1.msra.mxu0 0.0
  %2896 = vmatprep.subr.mxu0 0.0
  %2897 = vmatpush1.msra.mxu0 0.0
  %2898 = vmatprep.subr.mxu0 0.0
  %2899 = vmatpush1.msra.mxu0 0.0
  %2900 = vmatprep.subr.mxu0 0.0
  %2901 = vmatpush1.msra.mxu0 0.0
  %2902 = vmatprep.subr.mxu0 0.0
  %2903 = vmatpush1.msra.mxu0 0.0
  %2904 = vmatprep.subr.mxu0 0.0
  %2905 = vmatpush1.msra.mxu0 0.0
  %2906 = vmatprep.subr.mxu0 0.0
  %2907 = vmatpush1.msra.mxu0 0.0
  %2908 = vmatprep.mubr.f32.mxu0 0.0
  %2909 = vmatmul.mubr.f32.gmra.mrb[0].mxu0 %v2821
  %v2910 = vpop.f32.mrb[0].mxu0
  %v2911 = vadd.f32 0.0, %v2910
  %v2912 = vpop.f32.mrb[0].mxu0
  %2913 = vmatprep.mubr.f32.mxu0 0.0
  %2914 = vmatmul.mubr.f32.gmra.mrb[0].mxu0 %v2824
  %v2915 = vpop.f32.mrb[0].mxu0
  %v2916 = vadd.f32 0.0, %v2915
  %v2917 = vpop.f32.mrb[0].mxu0
  %2918 = vmatprep.mubr.f32.mxu0 0.0
  %2919 = vmatmul.mubr.f32.gmra.mrb[0].mxu0 %v2827
  %v2920 = vpop.f32.mrb[0].mxu0
  %v2921 = vadd.f32 0.0, %v2920
  %v2922 = vpop.f32.mrb[0].mxu0
  %2923 = vmatprep.mubr.f32.mxu0 0.0
  %2924 = vmatmul.mubr.f32.gmra.mrb[0].mxu0 %v2830
  %v2925 = vpop.f32.mrb[0].mxu0
  %v2926 = vadd.f32 0.0, %v2925
  %v2927 = vpop.f32.mrb[0].mxu0
  %2928 = vmatprep.mubr.f32.mxu0 0.0
  %2929 = vmatmul.mubr.f32.gmra.mrb[0].mxu0 %v2833
  %v2930 = vpop.f32.mrb[0].mxu0
  %v2931 = vadd.f32 0.0, %v2930
  %v2932 = vpop.f32.mrb[0].mxu0
  %2933 = vmatprep.mubr.f32.mxu0 0.0
  %2934 = vmatmul.mubr.f32.gmra.mrb[0].mxu0 %v2836
  %v2935 = vpop.f32.mrb[0].mxu0
  %v2936 = vadd.f32 0.0, %v2935
  %v2937 = vpop.f32.mrb[0].mxu0
  %2938 = vmatprep.mubr.f32.mxu0 0.0
  %2939 = vmatmul.mubr.f32.gmra.mrb[0].mxu0 %v2839
  %v2940 = vpop.f32.mrb[0].mxu0
  %v2941 = vadd.f32 0.0, %v2940
  %v2942 = vpop.f32.mrb[0].mxu0
  %2943 = vmatprep.mubr.f32.mxu0 0.0
  %2944 = vmatmul.mubr.f32.gmra.mrb[0].mxu0 %v2842
  %v2945 = vpop.f32.mrb[0].mxu0
  %v2946 = vadd.f32 0.0, %v2945
  %v2947 = vpop.f32.mrb[0].mxu0
  %2948 = vdwg.mxu0
  %2949 = vrot.lane.b32.xlu0 %v425, 104
  %v2950 = vpop.permute.xlu0 %2949
  %2951 = vrot.lane.b32.xlu0 %v430, 104
  %v2952 = vpop.permute.xlu0 %2951
  %2953 = vrot.lane.b32.xlu0 %v435, 104
  %v2954 = vpop.permute.xlu0 %2953
  %2955 = vrot.lane.b32.xlu0 %v440, 104
  %v2956 = vpop.permute.xlu0 %2955
  %2957 = vrot.lane.b32.xlu0 %v445, 104
  %v2958 = vpop.permute.xlu0 %2957
  %2959 = vrot.lane.b32.xlu0 %v450, 104
  %v2960 = vpop.permute.xlu0 %2959
  %2961 = vrot.lane.b32.xlu0 %v455, 104
  %v2962 = vpop.permute.xlu0 %2961
  %2963 = vrot.lane.b32.xlu0 %v460, 104
  %v2964 = vpop.permute.xlu0 %2963
  %2965 = vrot.lane.b32.xlu0 %v425, 72
  %v2966 = vpop.permute.xlu0 %2965
  %2967 = vrot.lane.b32.xlu0 %v430, 72
  %v2968 = vpop.permute.xlu0 %2967
  %2969 = vrot.lane.b32.xlu0 %v435, 72
  %v2970 = vpop.permute.xlu0 %2969
  %2971 = vrot.lane.b32.xlu0 %v440, 72
  %v2972 = vpop.permute.xlu0 %2971
  %2973 = vrot.lane.b32.xlu0 %v445, 72
  %v2974 = vpop.permute.xlu0 %2973
  %2975 = vrot.lane.b32.xlu0 %v450, 72
  %v2976 = vpop.permute.xlu0 %2975
  %2977 = vrot.lane.b32.xlu0 %v455, 72
  %v2978 = vpop.permute.xlu0 %2977
  %2979 = vrot.lane.b32.xlu0 %v460, 72
  %v2980 = vpop.permute.xlu0 %2979
  %v2981 = vsel %vm527, %v2950, 0
  %v2983 = vsel %vm527, %v2952, 0
  %v2985 = vsel %vm527, %v2954, 0
  %v2987 = vsel %vm527, %v2956, 0
  %v2989 = vsel %vm527, %v2958, 0
  %v2991 = vsel %vm527, %v2960, 0
  %v2993 = vsel %vm527, %v2962, 0
  %v2995 = vsel %vm527, %v2964, 0
  %v2997 = vsel %vm527, %v2966, 0
  %v2999 = vsel %vm527, %v2968, 0
  %v3001 = vsel %vm527, %v2970, 0
  %v3003 = vsel %vm527, %v2972, 0
  %v3005 = vsel %vm527, %v2974, 0
  %v3007 = vsel %vm527, %v2976, 0
  %v3009 = vsel %vm527, %v2978, 0
  %v3011 = vsel %vm527, %v2980, 0
  %3013 = vmatprep.subr.mxu0 0.0
  %3014 = vmatpush1.xpose.msra.mxu0 %v2997
  %3015 = vmatprep.subr.mxu0 0.0
  %3016 = vmatpush1.xpose.msra.mxu0 %v2999
  %3017 = vmatprep.subr.mxu0 0.0
  %3018 = vmatpush1.xpose.msra.mxu0 %v3001
  %3019 = vmatprep.subr.mxu0 0.0
  %3020 = vmatpush1.xpose.msra.mxu0 %v3003
  %3021 = vmatprep.subr.mxu0 0.0
  %3022 = vmatpush1.xpose.msra.mxu0 %v3005
  %3023 = vmatprep.subr.mxu0 0.0
  %3024 = vmatpush1.xpose.msra.mxu0 %v3007
  %3025 = vmatprep.subr.mxu0 0.0
  %3026 = vmatpush1.xpose.msra.mxu0 %v3009
  %3027 = vmatprep.subr.mxu0 0.0
  %3028 = vmatpush1.xpose.msra.mxu0 %v3011
  %3029 = vmatprep.subr.mxu0 0.0
  %3030 = vmatpush1.xpose.msra.mxu0 0.0
  %3031 = vmatprep.subr.mxu0 0.0
  %3032 = vmatpush1.xpose.msra.mxu0 0.0
  %3033 = vmatprep.subr.mxu0 0.0
  %3034 = vmatpush1.xpose.msra.mxu0 0.0
  %3035 = vmatprep.subr.mxu0 0.0
  %3036 = vmatpush1.xpose.msra.mxu0 0.0
  %3037 = vmatprep.subr.mxu0 0.0
  %3038 = vmatpush1.xpose.msra.mxu0 0.0
  %3039 = vmatprep.subr.mxu0 0.0
  %3040 = vmatpush1.xpose.msra.mxu0 0.0
  %3041 = vmatprep.subr.mxu0 0.0
  %3042 = vmatpush1.xpose.msra.mxu0 0.0
  %3043 = vmatprep.subr.mxu0 0.0
  %3044 = vmatpush1.xpose.msra.mxu0 0.0
  %3045 = vmatprep.subr.mxu0 0.0
  %3046 = vmatpush1.xpose.msra.mxu0 0.0
  %3047 = vmatprep.subr.mxu0 0.0
  %3048 = vmatpush1.xpose.msra.mxu0 0.0
  %3049 = vmatprep.subr.mxu0 0.0
  %3050 = vmatpush1.xpose.msra.mxu0 0.0
  %3051 = vmatprep.subr.mxu0 0.0
  %3052 = vmatpush1.xpose.msra.mxu0 0.0
  %3053 = vmatprep.subr.mxu0 0.0
  %3054 = vmatpush1.xpose.msra.mxu0 0.0
  %3055 = vmatprep.subr.mxu0 0.0
  %3056 = vmatpush1.xpose.msra.mxu0 0.0
  %3057 = vmatprep.subr.mxu0 0.0
  %3058 = vmatpush1.xpose.msra.mxu0 0.0
  %3059 = vmatprep.subr.mxu0 0.0
  %3060 = vmatpush1.xpose.msra.mxu0 0.0
  %3061 = vmatprep.subr.mxu0 0.0
  %3062 = vmatpush1.xpose.msra.mxu0 0.0
  %3063 = vmatprep.subr.mxu0 0.0
  %3064 = vmatpush1.xpose.msra.mxu0 0.0
  %3065 = vmatprep.subr.mxu0 0.0
  %3066 = vmatpush1.xpose.msra.mxu0 0.0
  %3067 = vmatprep.subr.mxu0 0.0
  %3068 = vmatpush1.xpose.msra.mxu0 0.0
  %3069 = vmatprep.subr.mxu0 0.0
  %3070 = vmatpush1.xpose.msra.mxu0 0.0
  %3071 = vmatprep.subr.mxu0 0.0
  %3072 = vmatpush1.xpose.msra.mxu0 0.0
  %3073 = vmatprep.subr.mxu0 0.0
  %3074 = vmatpush1.xpose.msra.mxu0 0.0
  %3075 = vmatprep.subr.mxu0 0.0
  %3076 = vmatpush1.xpose.msra.mxu0 0.0
  %3077 = vmatprep.mubr.f32.mxu0 0.0
  %3078 = vmatmul.mubr.f32.gmra.mrb[0].mxu0 %v2981
  %v3079 = vpop.f32.mrb[0].mxu0
  %v3080 = vadd.f32 0.0, %v3079
  %v3081 = vpop.f32.mrb[0].mxu0
  %3082 = vmatprep.mubr.f32.mxu0 0.0
  %3083 = vmatmul.mubr.f32.gmra.mrb[0].mxu0 %v2983
  %v3084 = vpop.f32.mrb[0].mxu0
  %v3085 = vadd.f32 0.0, %v3084
  %v3086 = vpop.f32.mrb[0].mxu0
  %3087 = vmatprep.mubr.f32.mxu0 0.0
  %3088 = vmatmul.mubr.f32.gmra.mrb[0].mxu0 %v2985
  %v3089 = vpop.f32.mrb[0].mxu0
  %v3090 = vadd.f32 0.0, %v3089
  %v3091 = vpop.f32.mrb[0].mxu0
  %3092 = vmatprep.mubr.f32.mxu0 0.0
  %3093 = vmatmul.mubr.f32.gmra.mrb[0].mxu0 %v2987
  %v3094 = vpop.f32.mrb[0].mxu0
  %v3095 = vadd.f32 0.0, %v3094
  %v3096 = vpop.f32.mrb[0].mxu0
  %3097 = vmatprep.mubr.f32.mxu0 0.0
  %3098 = vmatmul.mubr.f32.gmra.mrb[0].mxu0 %v2989
  %v3099 = vpop.f32.mrb[0].mxu0
  %v3100 = vadd.f32 0.0, %v3099
  %v3101 = vpop.f32.mrb[0].mxu0
  %3102 = vmatprep.mubr.f32.mxu0 0.0
  %3103 = vmatmul.mubr.f32.gmra.mrb[0].mxu0 %v2991
  %v3104 = vpop.f32.mrb[0].mxu0
  %v3105 = vadd.f32 0.0, %v3104
  %v3106 = vpop.f32.mrb[0].mxu0
  %3107 = vmatprep.mubr.f32.mxu0 0.0
  %3108 = vmatmul.mubr.f32.gmra.mrb[0].mxu0 %v2993
  %v3109 = vpop.f32.mrb[0].mxu0
  %v3110 = vadd.f32 0.0, %v3109
  %v3111 = vpop.f32.mrb[0].mxu0
  %3112 = vmatprep.mubr.f32.mxu0 0.0
  %3113 = vmatmul.mubr.f32.gmra.mrb[0].mxu0 %v2995
  %v3114 = vpop.f32.mrb[0].mxu0
  %v3115 = vadd.f32 0.0, %v3114
  %v3116 = vpop.f32.mrb[0].mxu0
  %3117 = vdwg.mxu0
  %3118 = vrot.lane.b32.xlu0 %v465, 104
  %v3119 = vpop.permute.xlu0 %3118
  %3120 = vrot.lane.b32.xlu0 %v470, 104
  %v3121 = vpop.permute.xlu0 %3120
  %3122 = vrot.lane.b32.xlu0 %v475, 104
  %v3123 = vpop.permute.xlu0 %3122
  %3124 = vrot.lane.b32.xlu0 %v480, 104
  %v3125 = vpop.permute.xlu0 %3124
  %3126 = vrot.lane.b32.xlu0 %v485, 104
  %v3127 = vpop.permute.xlu0 %3126
  %3128 = vrot.lane.b32.xlu0 %v490, 104
  %v3129 = vpop.permute.xlu0 %3128
  %3130 = vrot.lane.b32.xlu0 %v495, 104
  %v3131 = vpop.permute.xlu0 %3130
  %3132 = vrot.lane.b32.xlu0 %v500, 104
  %v3133 = vpop.permute.xlu0 %3132
  %3134 = vrot.lane.b32.xlu0 %v465, 72
  %v3135 = vpop.permute.xlu0 %3134
  %3136 = vrot.lane.b32.xlu0 %v470, 72
  %v3137 = vpop.permute.xlu0 %3136
  %3138 = vrot.lane.b32.xlu0 %v475, 72
  %v3139 = vpop.permute.xlu0 %3138
  %3140 = vrot.lane.b32.xlu0 %v480, 72
  %v3141 = vpop.permute.xlu0 %3140
  %3142 = vrot.lane.b32.xlu0 %v485, 72
  %v3143 = vpop.permute.xlu0 %3142
  %3144 = vrot.lane.b32.xlu0 %v490, 72
  %v3145 = vpop.permute.xlu0 %3144
  %3146 = vrot.lane.b32.xlu0 %v495, 72
  %v3147 = vpop.permute.xlu0 %3146
  %3148 = vrot.lane.b32.xlu0 %v500, 72
  %v3149 = vpop.permute.xlu0 %3148
  %v3150 = vsel %vm527, %v3119, 0
  %v3152 = vsel %vm527, %v3121, 0
  %v3154 = vsel %vm527, %v3123, 0
  %v3156 = vsel %vm527, %v3125, 0
  %v3158 = vsel %vm527, %v3127, 0
  %v3160 = vsel %vm527, %v3129, 0
  %v3162 = vsel %vm527, %v3131, 0
  %v3164 = vsel %vm527, %v3133, 0
  %v3166 = vsel %vm527, %v3135, 0
  %v3168 = vsel %vm527, %v3137, 0
  %v3170 = vsel %vm527, %v3139, 0
  %v3172 = vsel %vm527, %v3141, 0
  %v3174 = vsel %vm527, %v3143, 0
  %v3176 = vsel %vm527, %v3145, 0
  %v3178 = vsel %vm527, %v3147, 0
  %v3180 = vsel %vm527, %v3149, 0
  %3182 = vmatprep.subr.mxu0 0.0
  %3183 = vmatpush1.xpose.msra.mxu0 %v3166
  %3184 = vmatprep.subr.mxu0 0.0
  %3185 = vmatpush1.xpose.msra.mxu0 %v3168
  %3186 = vmatprep.subr.mxu0 0.0
  %3187 = vmatpush1.xpose.msra.mxu0 %v3170
  %3188 = vmatprep.subr.mxu0 0.0
  %3189 = vmatpush1.xpose.msra.mxu0 %v3172
  %3190 = vmatprep.subr.mxu0 0.0
  %3191 = vmatpush1.xpose.msra.mxu0 %v3174
  %3192 = vmatprep.subr.mxu0 0.0
  %3193 = vmatpush1.xpose.msra.mxu0 %v3176
  %3194 = vmatprep.subr.mxu0 0.0
  %3195 = vmatpush1.xpose.msra.mxu0 %v3178
  %3196 = vmatprep.subr.mxu0 0.0
  %3197 = vmatpush1.xpose.msra.mxu0 %v3180
  %3198 = vmatprep.subr.mxu0 0.0
  %3199 = vmatpush1.xpose.msra.mxu0 0.0
  %3200 = vmatprep.subr.mxu0 0.0
  %3201 = vmatpush1.xpose.msra.mxu0 0.0
  %3202 = vmatprep.subr.mxu0 0.0
  %3203 = vmatpush1.xpose.msra.mxu0 0.0
  %3204 = vmatprep.subr.mxu0 0.0
  %3205 = vmatpush1.xpose.msra.mxu0 0.0
  %3206 = vmatprep.subr.mxu0 0.0
  %3207 = vmatpush1.xpose.msra.mxu0 0.0
  %3208 = vmatprep.subr.mxu0 0.0
  %3209 = vmatpush1.xpose.msra.mxu0 0.0
  %3210 = vmatprep.subr.mxu0 0.0
  %3211 = vmatpush1.xpose.msra.mxu0 0.0
  %3212 = vmatprep.subr.mxu0 0.0
  %3213 = vmatpush1.xpose.msra.mxu0 0.0
  %3214 = vmatprep.subr.mxu0 0.0
  %3215 = vmatpush1.xpose.msra.mxu0 0.0
  %3216 = vmatprep.subr.mxu0 0.0
  %3217 = vmatpush1.xpose.msra.mxu0 0.0
  %3218 = vmatprep.subr.mxu0 0.0
  %3219 = vmatpush1.xpose.msra.mxu0 0.0
  %3220 = vmatprep.subr.mxu0 0.0
  %3221 = vmatpush1.xpose.msra.mxu0 0.0
  %3222 = vmatprep.subr.mxu0 0.0
  %3223 = vmatpush1.xpose.msra.mxu0 0.0
  %3224 = vmatprep.subr.mxu0 0.0
  %3225 = vmatpush1.xpose.msra.mxu0 0.0
  %3226 = vmatprep.subr.mxu0 0.0
  %3227 = vmatpush1.xpose.msra.mxu0 0.0
  %3228 = vmatprep.subr.mxu0 0.0
  %3229 = vmatpush1.xpose.msra.mxu0 0.0
  %3230 = vmatprep.subr.mxu0 0.0
  %3231 = vmatpush1.xpose.msra.mxu0 0.0
  %3232 = vmatprep.subr.mxu0 0.0
  %3233 = vmatpush1.xpose.msra.mxu0 0.0
  %3234 = vmatprep.subr.mxu0 0.0
  %3235 = vmatpush1.xpose.msra.mxu0 0.0
  %3236 = vmatprep.subr.mxu0 0.0
  %3237 = vmatpush1.xpose.msra.mxu0 0.0
  %3238 = vmatprep.subr.mxu0 0.0
  %3239 = vmatpush1.xpose.msra.mxu0 0.0
  %3240 = vmatprep.subr.mxu0 0.0
  %3241 = vmatpush1.xpose.msra.mxu0 0.0
  %3242 = vmatprep.subr.mxu0 0.0
  %3243 = vmatpush1.xpose.msra.mxu0 0.0
  %3244 = vmatprep.subr.mxu0 0.0
  %3245 = vmatpush1.xpose.msra.mxu0 0.0
  %3246 = vmatprep.mubr.f32.mxu0 0.0
  %3247 = vmatmul.mubr.f32.gmra.mrb[0].mxu0 %v3150
  %v3248 = vpop.f32.mrb[0].mxu0
  %v3249 = vadd.f32 0.0, %v3248
  %v3250 = vpop.f32.mrb[0].mxu0
  %3251 = vmatprep.mubr.f32.mxu0 0.0
  %3252 = vmatmul.mubr.f32.gmra.mrb[0].mxu0 %v3152
  %v3253 = vpop.f32.mrb[0].mxu0
  %v3254 = vadd.f32 0.0, %v3253
  %v3255 = vpop.f32.mrb[0].mxu0
  %3256 = vmatprep.mubr.f32.mxu0 0.0
  %3257 = vmatmul.mubr.f32.gmra.mrb[0].mxu0 %v3154
  %v3258 = vpop.f32.mrb[0].mxu0
  %v3259 = vadd.f32 0.0, %v3258
  %v3260 = vpop.f32.mrb[0].mxu0
  %3261 = vmatprep.mubr.f32.mxu0 0.0
  %3262 = vmatmul.mubr.f32.gmra.mrb[0].mxu0 %v3156
  %v3263 = vpop.f32.mrb[0].mxu0
  %v3264 = vadd.f32 0.0, %v3263
  %v3265 = vpop.f32.mrb[0].mxu0
  %3266 = vmatprep.mubr.f32.mxu0 0.0
  %3267 = vmatmul.mubr.f32.gmra.mrb[0].mxu0 %v3158
  %v3268 = vpop.f32.mrb[0].mxu0
  %v3269 = vadd.f32 0.0, %v3268
  %v3270 = vpop.f32.mrb[0].mxu0
  %3271 = vmatprep.mubr.f32.mxu0 0.0
  %3272 = vmatmul.mubr.f32.gmra.mrb[0].mxu0 %v3160
  %v3273 = vpop.f32.mrb[0].mxu0
  %v3274 = vadd.f32 0.0, %v3273
  %v3275 = vpop.f32.mrb[0].mxu0
  %3276 = vmatprep.mubr.f32.mxu0 0.0
  %3277 = vmatmul.mubr.f32.gmra.mrb[0].mxu0 %v3162
  %v3278 = vpop.f32.mrb[0].mxu0
  %v3279 = vadd.f32 0.0, %v3278
  %v3280 = vpop.f32.mrb[0].mxu0
  %3281 = vmatprep.mubr.f32.mxu0 0.0
  %3282 = vmatmul.mubr.f32.gmra.mrb[0].mxu0 %v3164
  %v3283 = vpop.f32.mrb[0].mxu0
  %v3284 = vadd.f32 0.0, %v3283
  %v3285 = vpop.f32.mrb[0].mxu0
  %3286 = vdwg.mxu0
  %v3287 = vsel %vm826, %v3080, -inf
  %3288 = vmax.xlane.f32.xlu0 %v3287
  %v3289 = vpop.xlane.xlu0 %3288
  %v3290 = vsel %vm826, %v3085, -inf
  %3291 = vmax.xlane.f32.xlu0 %v3290
  %v3292 = vpop.xlane.xlu0 %3291
  %v3293 = vsel %vm826, %v3090, -inf
  %3294 = vmax.xlane.f32.xlu0 %v3293
  %v3295 = vpop.xlane.xlu0 %3294
  %v3296 = vsel %vm826, %v3095, -inf
  %3297 = vmax.xlane.f32.xlu0 %v3296
  %v3298 = vpop.xlane.xlu0 %3297
  %v3299 = vsel %vm826, %v3100, -inf
  %3300 = vmax.xlane.f32.xlu0 %v3299
  %v3301 = vpop.xlane.xlu0 %3300
  %v3302 = vsel %vm826, %v3105, -inf
  %3303 = vmax.xlane.f32.xlu0 %v3302
  %v3304 = vpop.xlane.xlu0 %3303
  %v3305 = vsel %vm826, %v3110, -inf
  %3306 = vmax.xlane.f32.xlu0 %v3305
  %v3307 = vpop.xlane.xlu0 %3306
  %v3308 = vsel %vm826, %v3115, -inf
  %3309 = vmax.xlane.f32.xlu0 %v3308
  %v3310 = vpop.xlane.xlu0 %3309
  %v3311 = vsel %vm826, %v3249, -inf
  %3312 = vmax.xlane.f32.xlu0 %v3311
  %v3313 = vpop.xlane.xlu0 %3312
  %v3314 = vsel %vm826, %v3254, -inf
  %3315 = vmax.xlane.f32.xlu0 %v3314
  %v3316 = vpop.xlane.xlu0 %3315
  %v3317 = vsel %vm826, %v3259, -inf
  %3318 = vmax.xlane.f32.xlu0 %v3317
  %v3319 = vpop.xlane.xlu0 %3318
  %v3320 = vsel %vm826, %v3264, -inf
  %3321 = vmax.xlane.f32.xlu0 %v3320
  %v3322 = vpop.xlane.xlu0 %3321
  %v3323 = vsel %vm826, %v3269, -inf
  %3324 = vmax.xlane.f32.xlu0 %v3323
  %v3325 = vpop.xlane.xlu0 %3324
  %v3326 = vsel %vm826, %v3274, -inf
  %3327 = vmax.xlane.f32.xlu0 %v3326
  %v3328 = vpop.xlane.xlu0 %3327
  %v3329 = vsel %vm826, %v3279, -inf
  %3330 = vmax.xlane.f32.xlu0 %v3329
  %v3331 = vpop.xlane.xlu0 %3330
  %v3332 = vsel %vm826, %v3284, -inf
  %3333 = vmax.xlane.f32.xlu0 %v3332
  %v3334 = vpop.xlane.xlu0 %3333
  %v3335 = vsub.f32 %v3080, %v3289
  %v3336 = vsub.f32 %v3085, %v3292
  %v3337 = vsub.f32 %v3090, %v3295
  %v3338 = vsub.f32 %v3095, %v3298
  %v3339 = vsub.f32 %v3100, %v3301
  %v3340 = vsub.f32 %v3105, %v3304
  %v3341 = vsub.f32 %v3110, %v3307
  %v3342 = vsub.f32 %v3115, %v3310
  %v3343 = vsub.f32 %v3249, %v3313
  %v3344 = vsub.f32 %v3254, %v3316
  %v3345 = vsub.f32 %v3259, %v3319
  %v3346 = vsub.f32 %v3264, %v3322
  %v3347 = vsub.f32 %v3269, %v3325
  %v3348 = vsub.f32 %v3274, %v3328
  %v3349 = vsub.f32 %v3279, %v3331
  %v3350 = vsub.f32 %v3284, %v3334
  %v3351 = vmul.f32 %v3335, 1.442695
  %v3352 = vpow.pop %v3351
  %v3353 = vmul.f32 %v3336, 1.442695
  %v3354 = vpow.pop %v3353
  %v3355 = vmul.f32 %v3337, 1.442695
  %v3356 = vpow.pop %v3355
  %v3357 = vmul.f32 %v3338, 1.442695
  %v3358 = vpow.pop %v3357
  %v3359 = vmul.f32 %v3339, 1.442695
  %v3360 = vpow.pop %v3359
  %v3361 = vmul.f32 %v3340, 1.442695
  %v3362 = vpow.pop %v3361
  %v3363 = vmul.f32 %v3341, 1.442695
  %v3364 = vpow.pop %v3363
  %v3365 = vmul.f32 %v3342, 1.442695
  %v3366 = vpow.pop %v3365
  %v3367 = vmul.f32 %v3343, 1.442695
  %v3368 = vpow.pop %v3367
  %v3369 = vmul.f32 %v3344, 1.442695
  %v3370 = vpow.pop %v3369
  %v3371 = vmul.f32 %v3345, 1.442695
  %v3372 = vpow.pop %v3371
  %v3373 = vmul.f32 %v3346, 1.442695
  %v3374 = vpow.pop %v3373
  %v3375 = vmul.f32 %v3347, 1.442695
  %v3376 = vpow.pop %v3375
  %v3377 = vmul.f32 %v3348, 1.442695
  %v3378 = vpow.pop %v3377
  %v3379 = vmul.f32 %v3349, 1.442695
  %v3380 = vpow.pop %v3379
  %v3381 = vmul.f32 %v3350, 1.442695
  %v3382 = vpow.pop %v3381
  %v3383 = vsel %vm826, %v3352, 0.0
  %3384 = vadd.xlane.f32.xlu0 %v3383
  %v3385 = vpop.xlane.xlu0 %3384
  %v3386 = vsel %vm826, %v3354, 0.0
  %3387 = vadd.xlane.f32.xlu0 %v3386
  %v3388 = vpop.xlane.xlu0 %3387
  %v3389 = vsel %vm826, %v3356, 0.0
  %3390 = vadd.xlane.f32.xlu0 %v3389
  %v3391 = vpop.xlane.xlu0 %3390
  %v3392 = vsel %vm826, %v3358, 0.0
  %3393 = vadd.xlane.f32.xlu0 %v3392
  %v3394 = vpop.xlane.xlu0 %3393
  %v3395 = vsel %vm826, %v3360, 0.0
  %3396 = vadd.xlane.f32.xlu0 %v3395
  %v3397 = vpop.xlane.xlu0 %3396
  %v3398 = vsel %vm826, %v3362, 0.0
  %3399 = vadd.xlane.f32.xlu0 %v3398
  %v3400 = vpop.xlane.xlu0 %3399
  %v3401 = vsel %vm826, %v3364, 0.0
  %3402 = vadd.xlane.f32.xlu0 %v3401
  %v3403 = vpop.xlane.xlu0 %3402
  %v3404 = vsel %vm826, %v3366, 0.0
  %3405 = vadd.xlane.f32.xlu0 %v3404
  %v3406 = vpop.xlane.xlu0 %3405
  %v3407 = vsel %vm826, %v3368, 0.0
  %3408 = vadd.xlane.f32.xlu0 %v3407
  %v3409 = vpop.xlane.xlu0 %3408
  %v3410 = vsel %vm826, %v3370, 0.0
  %3411 = vadd.xlane.f32.xlu0 %v3410
  %v3412 = vpop.xlane.xlu0 %3411
  %v3413 = vsel %vm826, %v3372, 0.0
  %3414 = vadd.xlane.f32.xlu0 %v3413
  %v3415 = vpop.xlane.xlu0 %3414
  %v3416 = vsel %vm826, %v3374, 0.0
  %3417 = vadd.xlane.f32.xlu0 %v3416
  %v3418 = vpop.xlane.xlu0 %3417
  %v3419 = vsel %vm826, %v3376, 0.0
  %3420 = vadd.xlane.f32.xlu0 %v3419
  %v3421 = vpop.xlane.xlu0 %3420
  %v3422 = vsel %vm826, %v3378, 0.0
  %3423 = vadd.xlane.f32.xlu0 %v3422
  %v3424 = vpop.xlane.xlu0 %3423
  %v3425 = vsel %vm826, %v3380, 0.0
  %3426 = vadd.xlane.f32.xlu0 %v3425
  %v3427 = vpop.xlane.xlu0 %3426
  %v3428 = vsel %vm826, %v3382, 0.0
  %3429 = vadd.xlane.f32.xlu0 %v3428
  %v3430 = vpop.xlane.xlu0 %3429
  %v3431 = vrcp.pop %v3385
  %v3432 = vrcp.pop %v3388
  %v3433 = vrcp.pop %v3391
  %v3434 = vrcp.pop %v3394
  %v3435 = vrcp.pop %v3397
  %v3436 = vrcp.pop %v3400
  %v3437 = vrcp.pop %v3403
  %v3438 = vrcp.pop %v3406
  %v3439 = vrcp.pop %v3409
  %v3440 = vrcp.pop %v3412
  %v3441 = vrcp.pop %v3415
  %v3442 = vrcp.pop %v3418
  %v3443 = vrcp.pop %v3421
  %v3444 = vrcp.pop %v3424
  %v3445 = vrcp.pop %v3427
  %v3446 = vrcp.pop %v3430
  %v3447 = vmul.f32 %v3352, %v3431
  %v3448 = vmul.f32 %v3354, %v3432
  %v3449 = vmul.f32 %v3356, %v3433
  %v3450 = vmul.f32 %v3358, %v3434
  %v3451 = vmul.f32 %v3360, %v3435
  %v3452 = vmul.f32 %v3362, %v3436
  %v3453 = vmul.f32 %v3364, %v3437
  %v3454 = vmul.f32 %v3366, %v3438
  %v3455 = vmul.f32 %v3368, %v3439
  %v3456 = vmul.f32 %v3370, %v3440
  %v3457 = vmul.f32 %v3372, %v3441
  %v3458 = vmul.f32 %v3374, %v3442
  %v3459 = vmul.f32 %v3376, %v3443
  %v3460 = vmul.f32 %v3378, %v3444
  %v3461 = vmul.f32 %v3380, %v3445
  %v3462 = vmul.f32 %v3382, %v3446
  %3463 = vrot.lane.b32.xlu0 %v425, 40
  %v3464 = vpop.permute.xlu0 %3463
  %3465 = vrot.lane.b32.xlu0 %v430, 40
  %v3466 = vpop.permute.xlu0 %3465
  %3467 = vrot.lane.b32.xlu0 %v435, 40
  %v3468 = vpop.permute.xlu0 %3467
  %3469 = vrot.lane.b32.xlu0 %v440, 40
  %v3470 = vpop.permute.xlu0 %3469
  %3471 = vrot.lane.b32.xlu0 %v445, 40
  %v3472 = vpop.permute.xlu0 %3471
  %3473 = vrot.lane.b32.xlu0 %v450, 40
  %v3474 = vpop.permute.xlu0 %3473
  %3475 = vrot.lane.b32.xlu0 %v455, 40
  %v3476 = vpop.permute.xlu0 %3475
  %3477 = vrot.lane.b32.xlu0 %v460, 40
  %v3478 = vpop.permute.xlu0 %3477
  %v3488 = vsel %vm826, %v3447, 0
  %v3491 = vsel %vm826, %v3448, 0
  %v3494 = vsel %vm826, %v3449, 0
  %v3497 = vsel %vm826, %v3450, 0
  %v3500 = vsel %vm826, %v3451, 0
  %v3503 = vsel %vm826, %v3452, 0
  %v3506 = vsel %vm826, %v3453, 0
  %v3509 = vsel %vm826, %v3454, 0
  %3511 = vmatprep.subr.mxu0 0.0
  %3512 = vmatpush1.msra.mxu0 %v3464
  %3513 = vmatprep.subr.mxu0 0.0
  %3514 = vmatpush1.msra.mxu0 %v3466
  %3515 = vmatprep.subr.mxu0 0.0
  %3516 = vmatpush1.msra.mxu0 %v3468
  %3517 = vmatprep.subr.mxu0 0.0
  %3518 = vmatpush1.msra.mxu0 %v3470
  %3519 = vmatprep.subr.mxu0 0.0
  %3520 = vmatpush1.msra.mxu0 %v3472
  %3521 = vmatprep.subr.mxu0 0.0
  %3522 = vmatpush1.msra.mxu0 %v3474
  %3523 = vmatprep.subr.mxu0 0.0
  %3524 = vmatpush1.msra.mxu0 %v3476
  %3525 = vmatprep.subr.mxu0 0.0
  %3526 = vmatpush1.msra.mxu0 %v3478
  %3527 = vmatprep.subr.mxu0 0.0
  %3528 = vmatpush1.msra.mxu0 0.0
  %3529 = vmatprep.subr.mxu0 0.0
  %3530 = vmatpush1.msra.mxu0 0.0
  %3531 = vmatprep.subr.mxu0 0.0
  %3532 = vmatpush1.msra.mxu0 0.0
  %3533 = vmatprep.subr.mxu0 0.0
  %3534 = vmatpush1.msra.mxu0 0.0
  %3535 = vmatprep.subr.mxu0 0.0
  %3536 = vmatpush1.msra.mxu0 0.0
  %3537 = vmatprep.subr.mxu0 0.0
  %3538 = vmatpush1.msra.mxu0 0.0
  %3539 = vmatprep.subr.mxu0 0.0
  %3540 = vmatpush1.msra.mxu0 0.0
  %3541 = vmatprep.subr.mxu0 0.0
  %3542 = vmatpush1.msra.mxu0 0.0
  %3543 = vmatprep.subr.mxu0 0.0
  %3544 = vmatpush1.msra.mxu0 0.0
  %3545 = vmatprep.subr.mxu0 0.0
  %3546 = vmatpush1.msra.mxu0 0.0
  %3547 = vmatprep.subr.mxu0 0.0
  %3548 = vmatpush1.msra.mxu0 0.0
  %3549 = vmatprep.subr.mxu0 0.0
  %3550 = vmatpush1.msra.mxu0 0.0
  %3551 = vmatprep.subr.mxu0 0.0
  %3552 = vmatpush1.msra.mxu0 0.0
  %3553 = vmatprep.subr.mxu0 0.0
  %3554 = vmatpush1.msra.mxu0 0.0
  %3555 = vmatprep.subr.mxu0 0.0
  %3556 = vmatpush1.msra.mxu0 0.0
  %3557 = vmatprep.subr.mxu0 0.0
  %3558 = vmatpush1.msra.mxu0 0.0
  %3559 = vmatprep.subr.mxu0 0.0
  %3560 = vmatpush1.msra.mxu0 0.0
  %3561 = vmatprep.subr.mxu0 0.0
  %3562 = vmatpush1.msra.mxu0 0.0
  %3563 = vmatprep.subr.mxu0 0.0
  %3564 = vmatpush1.msra.mxu0 0.0
  %3565 = vmatprep.subr.mxu0 0.0
  %3566 = vmatpush1.msra.mxu0 0.0
  %3567 = vmatprep.subr.mxu0 0.0
  %3568 = vmatpush1.msra.mxu0 0.0
  %3569 = vmatprep.subr.mxu0 0.0
  %3570 = vmatpush1.msra.mxu0 0.0
  %3571 = vmatprep.subr.mxu0 0.0
  %3572 = vmatpush1.msra.mxu0 0.0
  %3573 = vmatprep.subr.mxu0 0.0
  %3574 = vmatpush1.msra.mxu0 0.0
  %3575 = vmatprep.mubr.f32.mxu0 0.0
  %3576 = vmatmul.mubr.f32.gmra.mrb[0].mxu0 %v3488
  %v3577 = vpop.f32.mrb[0].mxu0
  %v3578 = vadd.f32 0.0, %v3577
  %v3579 = vpop.f32.mrb[0].mxu0
  %3580 = vmatprep.mubr.f32.mxu0 0.0
  %3581 = vmatmul.mubr.f32.gmra.mrb[0].mxu0 %v3491
  %v3582 = vpop.f32.mrb[0].mxu0
  %v3583 = vadd.f32 0.0, %v3582
  %v3584 = vpop.f32.mrb[0].mxu0
  %3585 = vmatprep.mubr.f32.mxu0 0.0
  %3586 = vmatmul.mubr.f32.gmra.mrb[0].mxu0 %v3494
  %v3587 = vpop.f32.mrb[0].mxu0
  %v3588 = vadd.f32 0.0, %v3587
  %v3589 = vpop.f32.mrb[0].mxu0
  %3590 = vmatprep.mubr.f32.mxu0 0.0
  %3591 = vmatmul.mubr.f32.gmra.mrb[0].mxu0 %v3497
  %v3592 = vpop.f32.mrb[0].mxu0
  %v3593 = vadd.f32 0.0, %v3592
  %v3594 = vpop.f32.mrb[0].mxu0
  %3595 = vmatprep.mubr.f32.mxu0 0.0
  %3596 = vmatmul.mubr.f32.gmra.mrb[0].mxu0 %v3500
  %v3597 = vpop.f32.mrb[0].mxu0
  %v3598 = vadd.f32 0.0, %v3597
  %v3599 = vpop.f32.mrb[0].mxu0
  %3600 = vmatprep.mubr.f32.mxu0 0.0
  %3601 = vmatmul.mubr.f32.gmra.mrb[0].mxu0 %v3503
  %v3602 = vpop.f32.mrb[0].mxu0
  %v3603 = vadd.f32 0.0, %v3602
  %v3604 = vpop.f32.mrb[0].mxu0
  %3605 = vmatprep.mubr.f32.mxu0 0.0
  %3606 = vmatmul.mubr.f32.gmra.mrb[0].mxu0 %v3506
  %v3607 = vpop.f32.mrb[0].mxu0
  %v3608 = vadd.f32 0.0, %v3607
  %v3609 = vpop.f32.mrb[0].mxu0
  %3610 = vmatprep.mubr.f32.mxu0 0.0
  %3611 = vmatmul.mubr.f32.gmra.mrb[0].mxu0 %v3509
  %v3612 = vpop.f32.mrb[0].mxu0
  %v3613 = vadd.f32 0.0, %v3612
  %v3614 = vpop.f32.mrb[0].mxu0
  %3615 = vdwg.mxu0
  %3616 = vrot.lane.b32.xlu0 %v465, 40
  %v3617 = vpop.permute.xlu0 %3616
  %3618 = vrot.lane.b32.xlu0 %v470, 40
  %v3619 = vpop.permute.xlu0 %3618
  %3620 = vrot.lane.b32.xlu0 %v475, 40
  %v3621 = vpop.permute.xlu0 %3620
  %3622 = vrot.lane.b32.xlu0 %v480, 40
  %v3623 = vpop.permute.xlu0 %3622
  %3624 = vrot.lane.b32.xlu0 %v485, 40
  %v3625 = vpop.permute.xlu0 %3624
  %3626 = vrot.lane.b32.xlu0 %v490, 40
  %v3627 = vpop.permute.xlu0 %3626
  %3628 = vrot.lane.b32.xlu0 %v495, 40
  %v3629 = vpop.permute.xlu0 %3628
  %3630 = vrot.lane.b32.xlu0 %v500, 40
  %v3631 = vpop.permute.xlu0 %3630
  %v3641 = vsel %vm826, %v3455, 0
  %v3644 = vsel %vm826, %v3456, 0
  %v3647 = vsel %vm826, %v3457, 0
  %v3650 = vsel %vm826, %v3458, 0
  %v3653 = vsel %vm826, %v3459, 0
  %v3656 = vsel %vm826, %v3460, 0
  %v3659 = vsel %vm826, %v3461, 0
  %v3662 = vsel %vm826, %v3462, 0
  %3664 = vmatprep.subr.mxu0 0.0
  %3665 = vmatpush1.msra.mxu0 %v3617
  %3666 = vmatprep.subr.mxu0 0.0
  %3667 = vmatpush1.msra.mxu0 %v3619
  %3668 = vmatprep.subr.mxu0 0.0
  %3669 = vmatpush1.msra.mxu0 %v3621
  %3670 = vmatprep.subr.mxu0 0.0
  %3671 = vmatpush1.msra.mxu0 %v3623
  %3672 = vmatprep.subr.mxu0 0.0
  %3673 = vmatpush1.msra.mxu0 %v3625
  %3674 = vmatprep.subr.mxu0 0.0
  %3675 = vmatpush1.msra.mxu0 %v3627
  %3676 = vmatprep.subr.mxu0 0.0
  %3677 = vmatpush1.msra.mxu0 %v3629
  %3678 = vmatprep.subr.mxu0 0.0
  %3679 = vmatpush1.msra.mxu0 %v3631
  %3680 = vmatprep.subr.mxu0 0.0
  %3681 = vmatpush1.msra.mxu0 0.0
  %3682 = vmatprep.subr.mxu0 0.0
  %3683 = vmatpush1.msra.mxu0 0.0
  %3684 = vmatprep.subr.mxu0 0.0
  %3685 = vmatpush1.msra.mxu0 0.0
  %3686 = vmatprep.subr.mxu0 0.0
  %3687 = vmatpush1.msra.mxu0 0.0
  %3688 = vmatprep.subr.mxu0 0.0
  %3689 = vmatpush1.msra.mxu0 0.0
  %3690 = vmatprep.subr.mxu0 0.0
  %3691 = vmatpush1.msra.mxu0 0.0
  %3692 = vmatprep.subr.mxu0 0.0
  %3693 = vmatpush1.msra.mxu0 0.0
  %3694 = vmatprep.subr.mxu0 0.0
  %3695 = vmatpush1.msra.mxu0 0.0
  %3696 = vmatprep.subr.mxu0 0.0
  %3697 = vmatpush1.msra.mxu0 0.0
  %3698 = vmatprep.subr.mxu0 0.0
  %3699 = vmatpush1.msra.mxu0 0.0
  %3700 = vmatprep.subr.mxu0 0.0
  %3701 = vmatpush1.msra.mxu0 0.0
  %3702 = vmatprep.subr.mxu0 0.0
  %3703 = vmatpush1.msra.mxu0 0.0
  %3704 = vmatprep.subr.mxu0 0.0
  %3705 = vmatpush1.msra.mxu0 0.0
  %3706 = vmatprep.subr.mxu0 0.0
  %3707 = vmatpush1.msra.mxu0 0.0
  %3708 = vmatprep.subr.mxu0 0.0
  %3709 = vmatpush1.msra.mxu0 0.0
  %3710 = vmatprep.subr.mxu0 0.0
  %3711 = vmatpush1.msra.mxu0 0.0
  %3712 = vmatprep.subr.mxu0 0.0
  %3713 = vmatpush1.msra.mxu0 0.0
  %3714 = vmatprep.subr.mxu0 0.0
  %3715 = vmatpush1.msra.mxu0 0.0
  %3716 = vmatprep.subr.mxu0 0.0
  %3717 = vmatpush1.msra.mxu0 0.0
  %3718 = vmatprep.subr.mxu0 0.0
  %3719 = vmatpush1.msra.mxu0 0.0
  %3720 = vmatprep.subr.mxu0 0.0
  %3721 = vmatpush1.msra.mxu0 0.0
  %3722 = vmatprep.subr.mxu0 0.0
  %3723 = vmatpush1.msra.mxu0 0.0
  %3724 = vmatprep.subr.mxu0 0.0
  %3725 = vmatpush1.msra.mxu0 0.0
  %3726 = vmatprep.subr.mxu0 0.0
  %3727 = vmatpush1.msra.mxu0 0.0
  %3728 = vmatprep.mubr.f32.mxu0 0.0
  %3729 = vmatmul.mubr.f32.gmra.mrb[0].mxu0 %v3641
  %v3730 = vpop.f32.mrb[0].mxu0
  %v3731 = vadd.f32 0.0, %v3730
  %v3732 = vpop.f32.mrb[0].mxu0
  %3733 = vmatprep.mubr.f32.mxu0 0.0
  %3734 = vmatmul.mubr.f32.gmra.mrb[0].mxu0 %v3644
  %v3735 = vpop.f32.mrb[0].mxu0
  %v3736 = vadd.f32 0.0, %v3735
  %v3737 = vpop.f32.mrb[0].mxu0
  %3738 = vmatprep.mubr.f32.mxu0 0.0
  %3739 = vmatmul.mubr.f32.gmra.mrb[0].mxu0 %v3647
  %v3740 = vpop.f32.mrb[0].mxu0
  %v3741 = vadd.f32 0.0, %v3740
  %v3742 = vpop.f32.mrb[0].mxu0
  %3743 = vmatprep.mubr.f32.mxu0 0.0
  %3744 = vmatmul.mubr.f32.gmra.mrb[0].mxu0 %v3650
  %v3745 = vpop.f32.mrb[0].mxu0
  %v3746 = vadd.f32 0.0, %v3745
  %v3747 = vpop.f32.mrb[0].mxu0
  %3748 = vmatprep.mubr.f32.mxu0 0.0
  %3749 = vmatmul.mubr.f32.gmra.mrb[0].mxu0 %v3653
  %v3750 = vpop.f32.mrb[0].mxu0
  %v3751 = vadd.f32 0.0, %v3750
  %v3752 = vpop.f32.mrb[0].mxu0
  %3753 = vmatprep.mubr.f32.mxu0 0.0
  %3754 = vmatmul.mubr.f32.gmra.mrb[0].mxu0 %v3656
  %v3755 = vpop.f32.mrb[0].mxu0
  %v3756 = vadd.f32 0.0, %v3755
  %v3757 = vpop.f32.mrb[0].mxu0
  %3758 = vmatprep.mubr.f32.mxu0 0.0
  %3759 = vmatmul.mubr.f32.gmra.mrb[0].mxu0 %v3659
  %v3760 = vpop.f32.mrb[0].mxu0
  %v3761 = vadd.f32 0.0, %v3760
  %v3762 = vpop.f32.mrb[0].mxu0
  %3763 = vmatprep.mubr.f32.mxu0 0.0
  %3764 = vmatmul.mubr.f32.gmra.mrb[0].mxu0 %v3662
  %v3765 = vpop.f32.mrb[0].mxu0
  %v3766 = vadd.f32 0.0, %v3765
  %v3767 = vpop.f32.mrb[0].mxu0
  %3768 = vdwg.mxu0
  %3785 = vrot.lane.b32.xlu0 %v1938, 8
  %v3786 = vpop.permute.xlu0 %3785
  %3787 = vrot.lane.b32.xlu0 %v1943, 8
  %v3788 = vpop.permute.xlu0 %3787
  %3789 = vrot.lane.b32.xlu0 %v1948, 8
  %v3790 = vpop.permute.xlu0 %3789
  %3791 = vrot.lane.b32.xlu0 %v1953, 8
  %v3792 = vpop.permute.xlu0 %3791
  %3793 = vrot.lane.b32.xlu0 %v1958, 8
  %v3794 = vpop.permute.xlu0 %3793
  %3795 = vrot.lane.b32.xlu0 %v1963, 8
  %v3796 = vpop.permute.xlu0 %3795
  %3797 = vrot.lane.b32.xlu0 %v1968, 8
  %v3798 = vpop.permute.xlu0 %3797
  %3799 = vrot.lane.b32.xlu0 %v1973, 8
  %v3800 = vpop.permute.xlu0 %3799
  %3801 = vrot.lane.b32.xlu0 %v2091, 8
  %v3802 = vpop.permute.xlu0 %3801
  %3803 = vrot.lane.b32.xlu0 %v2096, 8
  %v3804 = vpop.permute.xlu0 %3803
  %3805 = vrot.lane.b32.xlu0 %v2101, 8
  %v3806 = vpop.permute.xlu0 %3805
  %3807 = vrot.lane.b32.xlu0 %v2106, 8
  %v3808 = vpop.permute.xlu0 %3807
  %3809 = vrot.lane.b32.xlu0 %v2111, 8
  %v3810 = vpop.permute.xlu0 %3809
  %3811 = vrot.lane.b32.xlu0 %v2116, 8
  %v3812 = vpop.permute.xlu0 %3811
  %3813 = vrot.lane.b32.xlu0 %v2121, 8
  %v3814 = vpop.permute.xlu0 %3813
  %3815 = vrot.lane.b32.xlu0 %v2126, 8
  %v3816 = vpop.permute.xlu0 %3815
  %3849 = vrot.lane.b32.xlu0 %v2758, 16
  %v3850 = vpop.permute.xlu0 %3849
  %3851 = vrot.lane.b32.xlu0 %v2763, 16
  %v3852 = vpop.permute.xlu0 %3851
  %3853 = vrot.lane.b32.xlu0 %v2768, 16
  %v3854 = vpop.permute.xlu0 %3853
  %3855 = vrot.lane.b32.xlu0 %v2773, 16
  %v3856 = vpop.permute.xlu0 %3855
  %3857 = vrot.lane.b32.xlu0 %v2778, 16
  %v3858 = vpop.permute.xlu0 %3857
  %3859 = vrot.lane.b32.xlu0 %v2783, 16
  %v3860 = vpop.permute.xlu0 %3859
  %3861 = vrot.lane.b32.xlu0 %v2788, 16
  %v3862 = vpop.permute.xlu0 %3861
  %3863 = vrot.lane.b32.xlu0 %v2793, 16
  %v3864 = vpop.permute.xlu0 %3863
  %3865 = vrot.lane.b32.xlu0 %v2911, 16
  %v3866 = vpop.permute.xlu0 %3865
  %3867 = vrot.lane.b32.xlu0 %v2916, 16
  %v3868 = vpop.permute.xlu0 %3867
  %3869 = vrot.lane.b32.xlu0 %v2921, 16
  %v3870 = vpop.permute.xlu0 %3869
  %3871 = vrot.lane.b32.xlu0 %v2926, 16
  %v3872 = vpop.permute.xlu0 %3871
  %3873 = vrot.lane.b32.xlu0 %v2931, 16
  %v3874 = vpop.permute.xlu0 %3873
  %3875 = vrot.lane.b32.xlu0 %v2936, 16
  %v3876 = vpop.permute.xlu0 %3875
  %3877 = vrot.lane.b32.xlu0 %v2941, 16
  %v3878 = vpop.permute.xlu0 %3877
  %3879 = vrot.lane.b32.xlu0 %v2946, 16
  %v3880 = vpop.permute.xlu0 %3879
  %3913 = vrot.lane.b32.xlu0 %v3578, 24
  %v3914 = vpop.permute.xlu0 %3913
  %3915 = vrot.lane.b32.xlu0 %v3583, 24
  %v3916 = vpop.permute.xlu0 %3915
  %3917 = vrot.lane.b32.xlu0 %v3588, 24
  %v3918 = vpop.permute.xlu0 %3917
  %3919 = vrot.lane.b32.xlu0 %v3593, 24
  %v3920 = vpop.permute.xlu0 %3919
  %3921 = vrot.lane.b32.xlu0 %v3598, 24
  %v3922 = vpop.permute.xlu0 %3921
  %3923 = vrot.lane.b32.xlu0 %v3603, 24
  %v3924 = vpop.permute.xlu0 %3923
  %3925 = vrot.lane.b32.xlu0 %v3608, 24
  %v3926 = vpop.permute.xlu0 %3925
  %3927 = vrot.lane.b32.xlu0 %v3613, 24
  %v3928 = vpop.permute.xlu0 %3927
  %3929 = vrot.lane.b32.xlu0 %v3731, 24
  %v3930 = vpop.permute.xlu0 %3929
  %3931 = vrot.lane.b32.xlu0 %v3736, 24
  %v3932 = vpop.permute.xlu0 %3931
  %3933 = vrot.lane.b32.xlu0 %v3741, 24
  %v3934 = vpop.permute.xlu0 %3933
  %3935 = vrot.lane.b32.xlu0 %v3746, 24
  %v3936 = vpop.permute.xlu0 %3935
  %3937 = vrot.lane.b32.xlu0 %v3751, 24
  %v3938 = vpop.permute.xlu0 %3937
  %3939 = vrot.lane.b32.xlu0 %v3756, 24
  %v3940 = vpop.permute.xlu0 %3939
  %3941 = vrot.lane.b32.xlu0 %v3761, 24
  %v3942 = vpop.permute.xlu0 %3941
  %3943 = vrot.lane.b32.xlu0 %v3766, 24
  %v3944 = vpop.permute.xlu0 %3943
  %v3961 = vsel %vm527, %v1118, %v3786
  %v3962 = vsel %vm527, %v1123, %v3788
  %v3963 = vsel %vm527, %v1128, %v3790
  %v3964 = vsel %vm527, %v1133, %v3792
  %v3965 = vsel %vm527, %v1138, %v3794
  %v3966 = vsel %vm527, %v1143, %v3796
  %v3967 = vsel %vm527, %v1148, %v3798
  %v3968 = vsel %vm527, %v1153, %v3800
  %v3969 = vsel %vm527, %v1271, %v3802
  %v3970 = vsel %vm527, %v1276, %v3804
  %v3971 = vsel %vm527, %v1281, %v3806
  %v3972 = vsel %vm527, %v1286, %v3808
  %v3973 = vsel %vm527, %v1291, %v3810
  %v3974 = vsel %vm527, %v1296, %v3812
  %v3975 = vsel %vm527, %v1301, %v3814
  %v3976 = vsel %vm527, %v1306, %v3816
  %vm3977 = vcmask 130048
  %v3978 = vsel %vm3977, %v3961, %v3850
  %v3979 = vsel %vm3977, %v3962, %v3852
  %v3980 = vsel %vm3977, %v3963, %v3854
  %v3981 = vsel %vm3977, %v3964, %v3856
  %v3982 = vsel %vm3977, %v3965, %v3858
  %v3983 = vsel %vm3977, %v3966, %v3860
  %v3984 = vsel %vm3977, %v3967, %v3862
  %v3985 = vsel %vm3977, %v3968, %v3864
  %v3986 = vsel %vm3977, %v3969, %v3866
  %v3987 = vsel %vm3977, %v3970, %v3868
  %v3988 = vsel %vm3977, %v3971, %v3870
  %v3989 = vsel %vm3977, %v3972, %v3872
  %v3990 = vsel %vm3977, %v3973, %v3874
  %v3991 = vsel %vm3977, %v3974, %v3876
  %v3992 = vsel %vm3977, %v3975, %v3878
  %v3993 = vsel %vm3977, %v3976, %v3880
  %vm3994 = vcmask 195584
  %v3995 = vsel %vm3994, %v3978, %v3914
  %v3996 = vsel %vm3994, %v3979, %v3916
  %v3997 = vsel %vm3994, %v3980, %v3918
  %v3998 = vsel %vm3994, %v3981, %v3920
  %v3999 = vsel %vm3994, %v3982, %v3922
  %v4000 = vsel %vm3994, %v3983, %v3924
  %v4001 = vsel %vm3994, %v3984, %v3926
  %v4002 = vsel %vm3994, %v3985, %v3928
  %v4003 = vsel %vm3994, %v3986, %v3930
  %v4004 = vsel %vm3994, %v3987, %v3932
  %v4005 = vsel %vm3994, %v3988, %v3934
  %v4006 = vsel %vm3994, %v3989, %v3936
  %v4007 = vsel %vm3994, %v3990, %v3938
  %v4008 = vsel %vm3994, %v3991, %v3940
  %v4009 = vsel %vm3994, %v3992, %v3942
  %v4010 = vsel %vm3994, %v3993, %v3944
  %v4011 = vld [vmem:[%s3] sm:$0xff]
  %v4012 = vld [vmem:[%s3 + $0x8] sm:$0xff]
  %v4013 = vld [vmem:[%s3 + $0x10] sm:$0xff]
  %v4014 = vld [vmem:[%s3 + $0x18] sm:$0xff]
  %v4015 = vlaneseq
  %v4016 = vshrl.u32 %v4015, 7
  %v4017 = vsub.s32 0, %v4016
  %v4018 = vrot.slane %v28, %v4017
  %v4020 = vsel %vm49, %v3995, 0
  %v4023 = vsel %vm49, %v3996, 0
  %v4026 = vsel %vm49, %v3997, 0
  %v4029 = vsel %vm49, %v3998, 0
  %v4032 = vsel %vm49, %v3999, 0
  %v4035 = vsel %vm49, %v4000, 0
  %v4038 = vsel %vm49, %v4001, 0
  %v4041 = vsel %vm49, %v4002, 0
  %v4044 = vsel %vm49, %v4003, 0
  %v4047 = vsel %vm49, %v4004, 0
  %v4050 = vsel %vm49, %v4005, 0
  %v4053 = vsel %vm49, %v4006, 0
  %v4056 = vsel %vm49, %v4007, 0
  %v4059 = vsel %vm49, %v4008, 0
  %v4062 = vsel %vm49, %v4009, 0
  %v4065 = vsel %vm49, %v4010, 0
  %4067 = vmatprep.subr.mxu0 0.0
  %4068 = vmatpush1.msra.mxu0 %v4011
  %4069 = vmatprep.subr.mxu0 0.0
  %4070 = vmatpush1.msra.mxu0 %v4012
  %4071 = vmatprep.subr.mxu0 0.0
  %4072 = vmatpush1.msra.mxu0 %v4013
  %4073 = vmatprep.subr.mxu0 0.0
  %4074 = vmatpush1.msra.mxu0 %v4014
  %4075 = vmatprep.subr.mxu0 0.0
  %4076 = vmatpush1.msra.mxu0 0.0
  %4077 = vmatprep.subr.mxu0 0.0
  %4078 = vmatpush1.msra.mxu0 0.0
  %4079 = vmatprep.subr.mxu0 0.0
  %4080 = vmatpush1.msra.mxu0 0.0
  %4081 = vmatprep.subr.mxu0 0.0
  %4082 = vmatpush1.msra.mxu0 0.0
  %4083 = vmatprep.subr.mxu0 0.0
  %4084 = vmatpush1.msra.mxu0 0.0
  %4085 = vmatprep.subr.mxu0 0.0
  %4086 = vmatpush1.msra.mxu0 0.0
  %4087 = vmatprep.subr.mxu0 0.0
  %4088 = vmatpush1.msra.mxu0 0.0
  %4089 = vmatprep.subr.mxu0 0.0
  %4090 = vmatpush1.msra.mxu0 0.0
  %4091 = vmatprep.subr.mxu0 0.0
  %4092 = vmatpush1.msra.mxu0 0.0
  %4093 = vmatprep.subr.mxu0 0.0
  %4094 = vmatpush1.msra.mxu0 0.0
  %4095 = vmatprep.subr.mxu0 0.0
  %4096 = vmatpush1.msra.mxu0 0.0
  %4097 = vmatprep.subr.mxu0 0.0
  %4098 = vmatpush1.msra.mxu0 0.0
  %4099 = vmatprep.subr.mxu0 0.0
  %4100 = vmatpush1.msra.mxu0 0.0
  %4101 = vmatprep.subr.mxu0 0.0
  %4102 = vmatpush1.msra.mxu0 0.0
  %4103 = vmatprep.subr.mxu0 0.0
  %4104 = vmatpush1.msra.mxu0 0.0
  %4105 = vmatprep.subr.mxu0 0.0
  %4106 = vmatpush1.msra.mxu0 0.0
  %4107 = vmatprep.subr.mxu0 0.0
  %4108 = vmatpush1.msra.mxu0 0.0
  %4109 = vmatprep.subr.mxu0 0.0
  %4110 = vmatpush1.msra.mxu0 0.0
  %4111 = vmatprep.subr.mxu0 0.0
  %4112 = vmatpush1.msra.mxu0 0.0
  %4113 = vmatprep.subr.mxu0 0.0
  %4114 = vmatpush1.msra.mxu0 0.0
  %4115 = vmatprep.subr.mxu0 0.0
  %4116 = vmatpush1.msra.mxu0 0.0
  %4117 = vmatprep.subr.mxu0 0.0
  %4118 = vmatpush1.msra.mxu0 0.0
  %4119 = vmatprep.subr.mxu0 0.0
  %4120 = vmatpush1.msra.mxu0 0.0
  %4121 = vmatprep.subr.mxu0 0.0
  %4122 = vmatpush1.msra.mxu0 0.0
  %4123 = vmatprep.subr.mxu0 0.0
  %4124 = vmatpush1.msra.mxu0 0.0
  %4125 = vmatprep.subr.mxu0 0.0
  %4126 = vmatpush1.msra.mxu0 0.0
  %4127 = vmatprep.subr.mxu0 0.0
  %4128 = vmatpush1.msra.mxu0 0.0
  %4129 = vmatprep.subr.mxu0 0.0
  %4130 = vmatpush1.msra.mxu0 0.0
  %4131 = vmatprep.mubr.f32.mxu0 0.0
  %4132 = vmatmul.mubr.f32.gmra.mrb[0].mxu0 %v4020
  %v4133 = vpop.f32.mrb[0].mxu0
  %v4134 = vadd.f32 %v4018, %v4133
  %v4135 = vpop.f32.mrb[0].mxu0
  %4136 = vmatprep.mubr.f32.mxu0 0.0
  %4137 = vmatmul.mubr.f32.gmra.mrb[0].mxu0 %v4023
  %v4138 = vpop.f32.mrb[0].mxu0
  %v4139 = vadd.f32 %v4018, %v4138
  %v4140 = vpop.f32.mrb[0].mxu0
  %4141 = vmatprep.mubr.f32.mxu0 0.0
  %4142 = vmatmul.mubr.f32.gmra.mrb[0].mxu0 %v4026
  %v4143 = vpop.f32.mrb[0].mxu0
  %v4144 = vadd.f32 %v4018, %v4143
  %v4145 = vpop.f32.mrb[0].mxu0
  %4146 = vmatprep.mubr.f32.mxu0 0.0
  %4147 = vmatmul.mubr.f32.gmra.mrb[0].mxu0 %v4029
  %v4148 = vpop.f32.mrb[0].mxu0
  %v4149 = vadd.f32 %v4018, %v4148
  %v4150 = vpop.f32.mrb[0].mxu0
  %4151 = vmatprep.mubr.f32.mxu0 0.0
  %4152 = vmatmul.mubr.f32.gmra.mrb[0].mxu0 %v4032
  %v4153 = vpop.f32.mrb[0].mxu0
  %v4154 = vadd.f32 %v4018, %v4153
  %v4155 = vpop.f32.mrb[0].mxu0
  %4156 = vmatprep.mubr.f32.mxu0 0.0
  %4157 = vmatmul.mubr.f32.gmra.mrb[0].mxu0 %v4035
  %v4158 = vpop.f32.mrb[0].mxu0
  %v4159 = vadd.f32 %v4018, %v4158
  %v4160 = vpop.f32.mrb[0].mxu0
  %4161 = vmatprep.mubr.f32.mxu0 0.0
  %4162 = vmatmul.mubr.f32.gmra.mrb[0].mxu0 %v4038
  %v4163 = vpop.f32.mrb[0].mxu0
  %v4164 = vadd.f32 %v4018, %v4163
  %v4165 = vpop.f32.mrb[0].mxu0
  %4166 = vmatprep.mubr.f32.mxu0 0.0
  %4167 = vmatmul.mubr.f32.gmra.mrb[0].mxu0 %v4041
  %v4168 = vpop.f32.mrb[0].mxu0
  %v4169 = vadd.f32 %v4018, %v4168
  %v4170 = vpop.f32.mrb[0].mxu0
  %4171 = vmatprep.mubr.f32.mxu0 0.0
  %4172 = vmatmul.mubr.f32.gmra.mrb[0].mxu0 %v4044
  %v4173 = vpop.f32.mrb[0].mxu0
  %v4174 = vadd.f32 %v4018, %v4173
  %v4175 = vpop.f32.mrb[0].mxu0
  %4176 = vmatprep.mubr.f32.mxu0 0.0
  %4177 = vmatmul.mubr.f32.gmra.mrb[0].mxu0 %v4047
  %v4178 = vpop.f32.mrb[0].mxu0
  %v4179 = vadd.f32 %v4018, %v4178
  %v4180 = vpop.f32.mrb[0].mxu0
  %4181 = vmatprep.mubr.f32.mxu0 0.0
  %4182 = vmatmul.mubr.f32.gmra.mrb[0].mxu0 %v4050
  %v4183 = vpop.f32.mrb[0].mxu0
  %v4184 = vadd.f32 %v4018, %v4183
  %v4185 = vpop.f32.mrb[0].mxu0
  %4186 = vmatprep.mubr.f32.mxu0 0.0
  %4187 = vmatmul.mubr.f32.gmra.mrb[0].mxu0 %v4053
  %v4188 = vpop.f32.mrb[0].mxu0
  %v4189 = vadd.f32 %v4018, %v4188
  %v4190 = vpop.f32.mrb[0].mxu0
  %4191 = vmatprep.mubr.f32.mxu0 0.0
  %4192 = vmatmul.mubr.f32.gmra.mrb[0].mxu0 %v4056
  %v4193 = vpop.f32.mrb[0].mxu0
  %v4194 = vadd.f32 %v4018, %v4193
  %v4195 = vpop.f32.mrb[0].mxu0
  %4196 = vmatprep.mubr.f32.mxu0 0.0
  %4197 = vmatmul.mubr.f32.gmra.mrb[0].mxu0 %v4059
  %v4198 = vpop.f32.mrb[0].mxu0
  %v4199 = vadd.f32 %v4018, %v4198
  %v4200 = vpop.f32.mrb[0].mxu0
  %4201 = vmatprep.mubr.f32.mxu0 0.0
  %4202 = vmatmul.mubr.f32.gmra.mrb[0].mxu0 %v4062
  %v4203 = vpop.f32.mrb[0].mxu0
  %v4204 = vadd.f32 %v4018, %v4203
  %v4205 = vpop.f32.mrb[0].mxu0
  %4206 = vmatprep.mubr.f32.mxu0 0.0
  %4207 = vmatmul.mubr.f32.gmra.mrb[0].mxu0 %v4065
  %v4208 = vpop.f32.mrb[0].mxu0
  %v4209 = vadd.f32 %v4018, %v4208
  %v4210 = vpop.f32.mrb[0].mxu0
  %4211 = vdwg.mxu0
  %v4212 = vadd.f32 %v4134, %v33
  %v4213 = vadd.f32 %v4139, %v34
  %v4214 = vadd.f32 %v4144, %v35
  %v4215 = vadd.f32 %v4149, %v36
  %v4216 = vadd.f32 %v4154, %v37
  %v4217 = vadd.f32 %v4159, %v38
  %v4218 = vadd.f32 %v4164, %v39
  %v4219 = vadd.f32 %v4169, %v40
  %v4220 = vadd.f32 %v4174, %v41
  %v4221 = vadd.f32 %v4179, %v42
  %v4222 = vadd.f32 %v4184, %v43
  %v4223 = vadd.f32 %v4189, %v44
  %v4224 = vadd.f32 %v4194, %v45
  %v4225 = vadd.f32 %v4199, %v46
  %v4226 = vadd.f32 %v4204, %v47
  %v4227 = vadd.f32 %v4209, %v48
  %v4228 = vsel %vm49, %v4212, 0.0
  %4229 = vadd.xlane.f32.xlu0 %v4228
  %v4230 = vpop.xlane.xlu0 %4229
  %v4231 = vsel %vm49, %v4213, 0.0
  %4232 = vadd.xlane.f32.xlu0 %v4231
  %v4233 = vpop.xlane.xlu0 %4232
  %v4234 = vsel %vm49, %v4214, 0.0
  %4235 = vadd.xlane.f32.xlu0 %v4234
  %v4236 = vpop.xlane.xlu0 %4235
  %v4237 = vsel %vm49, %v4215, 0.0
  %4238 = vadd.xlane.f32.xlu0 %v4237
  %v4239 = vpop.xlane.xlu0 %4238
  %v4240 = vsel %vm49, %v4216, 0.0
  %4241 = vadd.xlane.f32.xlu0 %v4240
  %v4242 = vpop.xlane.xlu0 %4241
  %v4243 = vsel %vm49, %v4217, 0.0
  %4244 = vadd.xlane.f32.xlu0 %v4243
  %v4245 = vpop.xlane.xlu0 %4244
  %v4246 = vsel %vm49, %v4218, 0.0
  %4247 = vadd.xlane.f32.xlu0 %v4246
  %v4248 = vpop.xlane.xlu0 %4247
  %v4249 = vsel %vm49, %v4219, 0.0
  %4250 = vadd.xlane.f32.xlu0 %v4249
  %v4251 = vpop.xlane.xlu0 %4250
  %v4252 = vsel %vm49, %v4220, 0.0
  %4253 = vadd.xlane.f32.xlu0 %v4252
  %v4254 = vpop.xlane.xlu0 %4253
  %v4255 = vsel %vm49, %v4221, 0.0
  %4256 = vadd.xlane.f32.xlu0 %v4255
  %v4257 = vpop.xlane.xlu0 %4256
  %v4258 = vsel %vm49, %v4222, 0.0
  %4259 = vadd.xlane.f32.xlu0 %v4258
  %v4260 = vpop.xlane.xlu0 %4259
  %v4261 = vsel %vm49, %v4223, 0.0
  %4262 = vadd.xlane.f32.xlu0 %v4261
  %v4263 = vpop.xlane.xlu0 %4262
  %v4264 = vsel %vm49, %v4224, 0.0
  %4265 = vadd.xlane.f32.xlu0 %v4264
  %v4266 = vpop.xlane.xlu0 %4265
  %v4267 = vsel %vm49, %v4225, 0.0
  %4268 = vadd.xlane.f32.xlu0 %v4267
  %v4269 = vpop.xlane.xlu0 %4268
  %v4270 = vsel %vm49, %v4226, 0.0
  %4271 = vadd.xlane.f32.xlu0 %v4270
  %v4272 = vpop.xlane.xlu0 %4271
  %v4273 = vsel %vm49, %v4227, 0.0
  %4274 = vadd.xlane.f32.xlu0 %v4273
  %v4275 = vpop.xlane.xlu0 %4274
  %v4276 = vmul.f32 %v4230, %v98
  %v4277 = vmul.f32 %v4233, %v98
  %v4278 = vmul.f32 %v4236, %v98
  %v4279 = vmul.f32 %v4239, %v98
  %v4280 = vmul.f32 %v4242, %v98
  %v4281 = vmul.f32 %v4245, %v98
  %v4282 = vmul.f32 %v4248, %v98
  %v4283 = vmul.f32 %v4251, %v98
  %v4284 = vmul.f32 %v4254, %v98
  %v4285 = vmul.f32 %v4257, %v98
  %v4286 = vmul.f32 %v4260, %v98
  %v4287 = vmul.f32 %v4263, %v98
  %v4288 = vmul.f32 %v4266, %v98
  %v4289 = vmul.f32 %v4269, %v98
  %v4290 = vmul.f32 %v4272, %v98
  %v4291 = vmul.f32 %v4275, %v98
  %v4292 = vsub.f32 %v4212, %v4276
  %v4293 = vsub.f32 %v4213, %v4277
  %v4294 = vsub.f32 %v4214, %v4278
  %v4295 = vsub.f32 %v4215, %v4279
  %v4296 = vsub.f32 %v4216, %v4280
  %v4297 = vsub.f32 %v4217, %v4281
  %v4298 = vsub.f32 %v4218, %v4282
  %v4299 = vsub.f32 %v4219, %v4283
  %v4300 = vsub.f32 %v4220, %v4284
  %v4301 = vsub.f32 %v4221, %v4285
  %v4302 = vsub.f32 %v4222, %v4286
  %v4303 = vsub.f32 %v4223, %v4287
  %v4304 = vsub.f32 %v4224, %v4288
  %v4305 = vsub.f32 %v4225, %v4289
  %v4306 = vsub.f32 %v4226, %v4290
  %v4307 = vsub.f32 %v4227, %v4291
  %v4308 = vmul.f32 %v4292, %v4292
  %v4309 = vmul.f32 %v4293, %v4293
  %v4310 = vmul.f32 %v4294, %v4294
  %v4311 = vmul.f32 %v4295, %v4295
  %v4312 = vmul.f32 %v4296, %v4296
  %v4313 = vmul.f32 %v4297, %v4297
  %v4314 = vmul.f32 %v4298, %v4298
  %v4315 = vmul.f32 %v4299, %v4299
  %v4316 = vmul.f32 %v4300, %v4300
  %v4317 = vmul.f32 %v4301, %v4301
  %v4318 = vmul.f32 %v4302, %v4302
  %v4319 = vmul.f32 %v4303, %v4303
  %v4320 = vmul.f32 %v4304, %v4304
  %v4321 = vmul.f32 %v4305, %v4305
  %v4322 = vmul.f32 %v4306, %v4306
  %v4323 = vmul.f32 %v4307, %v4307
  %v4324 = vsel %vm49, %v4308, 0.0
  %4325 = vadd.xlane.f32.xlu0 %v4324
  %v4326 = vpop.xlane.xlu0 %4325
  %v4327 = vsel %vm49, %v4309, 0.0
  %4328 = vadd.xlane.f32.xlu0 %v4327
  %v4329 = vpop.xlane.xlu0 %4328
  %v4330 = vsel %vm49, %v4310, 0.0
  %4331 = vadd.xlane.f32.xlu0 %v4330
  %v4332 = vpop.xlane.xlu0 %4331
  %v4333 = vsel %vm49, %v4311, 0.0
  %4334 = vadd.xlane.f32.xlu0 %v4333
  %v4335 = vpop.xlane.xlu0 %4334
  %v4336 = vsel %vm49, %v4312, 0.0
  %4337 = vadd.xlane.f32.xlu0 %v4336
  %v4338 = vpop.xlane.xlu0 %4337
  %v4339 = vsel %vm49, %v4313, 0.0
  %4340 = vadd.xlane.f32.xlu0 %v4339
  %v4341 = vpop.xlane.xlu0 %4340
  %v4342 = vsel %vm49, %v4314, 0.0
  %4343 = vadd.xlane.f32.xlu0 %v4342
  %v4344 = vpop.xlane.xlu0 %4343
  %v4345 = vsel %vm49, %v4315, 0.0
  %4346 = vadd.xlane.f32.xlu0 %v4345
  %v4347 = vpop.xlane.xlu0 %4346
  %v4348 = vsel %vm49, %v4316, 0.0
  %4349 = vadd.xlane.f32.xlu0 %v4348
  %v4350 = vpop.xlane.xlu0 %4349
  %v4351 = vsel %vm49, %v4317, 0.0
  %4352 = vadd.xlane.f32.xlu0 %v4351
  %v4353 = vpop.xlane.xlu0 %4352
  %v4354 = vsel %vm49, %v4318, 0.0
  %4355 = vadd.xlane.f32.xlu0 %v4354
  %v4356 = vpop.xlane.xlu0 %4355
  %v4357 = vsel %vm49, %v4319, 0.0
  %4358 = vadd.xlane.f32.xlu0 %v4357
  %v4359 = vpop.xlane.xlu0 %4358
  %v4360 = vsel %vm49, %v4320, 0.0
  %4361 = vadd.xlane.f32.xlu0 %v4360
  %v4362 = vpop.xlane.xlu0 %4361
  %v4363 = vsel %vm49, %v4321, 0.0
  %4364 = vadd.xlane.f32.xlu0 %v4363
  %v4365 = vpop.xlane.xlu0 %4364
  %v4366 = vsel %vm49, %v4322, 0.0
  %4367 = vadd.xlane.f32.xlu0 %v4366
  %v4368 = vpop.xlane.xlu0 %4367
  %v4369 = vsel %vm49, %v4323, 0.0
  %4370 = vadd.xlane.f32.xlu0 %v4369
  %v4371 = vpop.xlane.xlu0 %4370
  %v4372 = vmul.f32 %v4326, %v98
  %v4373 = vmul.f32 %v4329, %v98
  %v4374 = vmul.f32 %v4332, %v98
  %v4375 = vmul.f32 %v4335, %v98
  %v4376 = vmul.f32 %v4338, %v98
  %v4377 = vmul.f32 %v4341, %v98
  %v4378 = vmul.f32 %v4344, %v98
  %v4379 = vmul.f32 %v4347, %v98
  %v4380 = vmul.f32 %v4350, %v98
  %v4381 = vmul.f32 %v4353, %v98
  %v4382 = vmul.f32 %v4356, %v98
  %v4383 = vmul.f32 %v4359, %v98
  %v4384 = vmul.f32 %v4362, %v98
  %v4385 = vmul.f32 %v4365, %v98
  %v4386 = vmul.f32 %v4368, %v98
  %v4387 = vmul.f32 %v4371, %v98
  %v4388 = vadd.f32 %v4372, 1e-05
  %v4389 = vadd.f32 %v4373, 1e-05
  %v4390 = vadd.f32 %v4374, 1e-05
  %v4391 = vadd.f32 %v4375, 1e-05
  %v4392 = vadd.f32 %v4376, 1e-05
  %v4393 = vadd.f32 %v4377, 1e-05
  %v4394 = vadd.f32 %v4378, 1e-05
  %v4395 = vadd.f32 %v4379, 1e-05
  %v4396 = vadd.f32 %v4380, 1e-05
  %v4397 = vadd.f32 %v4381, 1e-05
  %v4398 = vadd.f32 %v4382, 1e-05
  %v4399 = vadd.f32 %v4383, 1e-05
  %v4400 = vadd.f32 %v4384, 1e-05
  %v4401 = vadd.f32 %v4385, 1e-05
  %v4402 = vadd.f32 %v4386, 1e-05
  %v4403 = vadd.f32 %v4387, 1e-05
  %v4404 = vrsqrt.pop %v4388
  %v4405 = vrsqrt.pop %v4389
  %v4406 = vrsqrt.pop %v4390
  %v4407 = vrsqrt.pop %v4391
  %v4408 = vrsqrt.pop %v4392
  %v4409 = vrsqrt.pop %v4393
  %v4410 = vrsqrt.pop %v4394
  %v4411 = vrsqrt.pop %v4395
  %v4412 = vrsqrt.pop %v4396
  %v4413 = vrsqrt.pop %v4397
  %v4414 = vrsqrt.pop %v4398
  %v4415 = vrsqrt.pop %v4399
  %v4416 = vrsqrt.pop %v4400
  %v4417 = vrsqrt.pop %v4401
  %v4418 = vrsqrt.pop %v4402
  %v4419 = vrsqrt.pop %v4403
  %v4420 = vmul.f32 %v4292, %v4404
  %v4421 = vmul.f32 %v4293, %v4405
  %v4422 = vmul.f32 %v4294, %v4406
  %v4423 = vmul.f32 %v4295, %v4407
  %v4424 = vmul.f32 %v4296, %v4408
  %v4425 = vmul.f32 %v4297, %v4409
  %v4426 = vmul.f32 %v4298, %v4410
  %v4427 = vmul.f32 %v4299, %v4411
  %v4428 = vmul.f32 %v4300, %v4412
  %v4429 = vmul.f32 %v4301, %v4413
  %v4430 = vmul.f32 %v4302, %v4414
  %v4431 = vmul.f32 %v4303, %v4415
  %v4432 = vmul.f32 %v4304, %v4416
  %v4433 = vmul.f32 %v4305, %v4417
  %v4434 = vmul.f32 %v4306, %v4418
  %v4435 = vmul.f32 %v4307, %v4419
  %v4436 = vlaneseq
  %v4437 = vshrl.u32 %v4436, 7
  %v4438 = vsub.s32 0, %v4437
  %v4439 = vrot.slane %v29, %v4438
  %v4440 = vmul.f32 %v4420, %v4439
  %v4441 = vmul.f32 %v4421, %v4439
  %v4442 = vmul.f32 %v4422, %v4439
  %v4443 = vmul.f32 %v4423, %v4439
  %v4444 = vmul.f32 %v4424, %v4439
  %v4445 = vmul.f32 %v4425, %v4439
  %v4446 = vmul.f32 %v4426, %v4439
  %v4447 = vmul.f32 %v4427, %v4439
  %v4448 = vmul.f32 %v4428, %v4439
  %v4449 = vmul.f32 %v4429, %v4439
  %v4450 = vmul.f32 %v4430, %v4439
  %v4451 = vmul.f32 %v4431, %v4439
  %v4452 = vmul.f32 %v4432, %v4439
  %v4453 = vmul.f32 %v4433, %v4439
  %v4454 = vmul.f32 %v4434, %v4439
  %v4455 = vmul.f32 %v4435, %v4439
  %v4456 = vlaneseq
  %v4457 = vshrl.u32 %v4456, 7
  %v4458 = vsub.s32 0, %v4457
  %v4459 = vrot.slane %v30, %v4458
  %v4460 = vadd.f32 %v4440, %v4459
  %v4461 = vadd.f32 %v4441, %v4459
  %v4462 = vadd.f32 %v4442, %v4459
  %v4463 = vadd.f32 %v4443, %v4459
  %v4464 = vadd.f32 %v4444, %v4459
  %v4465 = vadd.f32 %v4445, %v4459
  %v4466 = vadd.f32 %v4446, %v4459
  %v4467 = vadd.f32 %v4447, %v4459
  %v4468 = vadd.f32 %v4448, %v4459
  %v4469 = vadd.f32 %v4449, %v4459
  %v4470 = vadd.f32 %v4450, %v4459
  %v4471 = vadd.f32 %v4451, %v4459
  %v4472 = vadd.f32 %v4452, %v4459
  %v4473 = vadd.f32 %v4453, %v4459
  %v4474 = vadd.f32 %v4454, %v4459
  %v4475 = vadd.f32 %v4455, %v4459
  %v4476 = vld [vmem:[%s4] sm:$0xff]
  %v4477 = vld [vmem:[%s4 + $0x8] sm:$0xff]
  %v4478 = vld [vmem:[%s4 + $0x10] sm:$0xff]
  %v4479 = vld [vmem:[%s4 + $0x18] sm:$0xff]
  %v4480 = vlaneseq
  %v4481 = vshrl.u32 %v4480, 7
  %v4482 = vsub.s32 0, %v4481
  %v4483 = vrot.slane %v31, %v4482
  %v4485 = vsel %vm49, %v4460, 0
  %v4488 = vsel %vm49, %v4461, 0
  %v4491 = vsel %vm49, %v4462, 0
  %v4494 = vsel %vm49, %v4463, 0
  %v4497 = vsel %vm49, %v4464, 0
  %v4500 = vsel %vm49, %v4465, 0
  %v4503 = vsel %vm49, %v4466, 0
  %v4506 = vsel %vm49, %v4467, 0
  %v4509 = vsel %vm49, %v4468, 0
  %v4512 = vsel %vm49, %v4469, 0
  %v4515 = vsel %vm49, %v4470, 0
  %v4518 = vsel %vm49, %v4471, 0
  %v4521 = vsel %vm49, %v4472, 0
  %v4524 = vsel %vm49, %v4473, 0
  %v4527 = vsel %vm49, %v4474, 0
  %v4530 = vsel %vm49, %v4475, 0
  %4532 = vmatprep.subr.mxu0 0.0
  %4533 = vmatpush1.msra.mxu0 %v4476
  %4534 = vmatprep.subr.mxu0 0.0
  %4535 = vmatpush1.msra.mxu0 %v4477
  %4536 = vmatprep.subr.mxu0 0.0
  %4537 = vmatpush1.msra.mxu0 %v4478
  %4538 = vmatprep.subr.mxu0 0.0
  %4539 = vmatpush1.msra.mxu0 %v4479
  %4540 = vmatprep.subr.mxu0 0.0
  %4541 = vmatpush1.msra.mxu0 0.0
  %4542 = vmatprep.subr.mxu0 0.0
  %4543 = vmatpush1.msra.mxu0 0.0
  %4544 = vmatprep.subr.mxu0 0.0
  %4545 = vmatpush1.msra.mxu0 0.0
  %4546 = vmatprep.subr.mxu0 0.0
  %4547 = vmatpush1.msra.mxu0 0.0
  %4548 = vmatprep.subr.mxu0 0.0
  %4549 = vmatpush1.msra.mxu0 0.0
  %4550 = vmatprep.subr.mxu0 0.0
  %4551 = vmatpush1.msra.mxu0 0.0
  %4552 = vmatprep.subr.mxu0 0.0
  %4553 = vmatpush1.msra.mxu0 0.0
  %4554 = vmatprep.subr.mxu0 0.0
  %4555 = vmatpush1.msra.mxu0 0.0
  %4556 = vmatprep.subr.mxu0 0.0
  %4557 = vmatpush1.msra.mxu0 0.0
  %4558 = vmatprep.subr.mxu0 0.0
  %4559 = vmatpush1.msra.mxu0 0.0
  %4560 = vmatprep.subr.mxu0 0.0
  %4561 = vmatpush1.msra.mxu0 0.0
  %4562 = vmatprep.subr.mxu0 0.0
  %4563 = vmatpush1.msra.mxu0 0.0
  %4564 = vmatprep.subr.mxu0 0.0
  %4565 = vmatpush1.msra.mxu0 0.0
  %4566 = vmatprep.subr.mxu0 0.0
  %4567 = vmatpush1.msra.mxu0 0.0
  %4568 = vmatprep.subr.mxu0 0.0
  %4569 = vmatpush1.msra.mxu0 0.0
  %4570 = vmatprep.subr.mxu0 0.0
  %4571 = vmatpush1.msra.mxu0 0.0
  %4572 = vmatprep.subr.mxu0 0.0
  %4573 = vmatpush1.msra.mxu0 0.0
  %4574 = vmatprep.subr.mxu0 0.0
  %4575 = vmatpush1.msra.mxu0 0.0
  %4576 = vmatprep.subr.mxu0 0.0
  %4577 = vmatpush1.msra.mxu0 0.0
  %4578 = vmatprep.subr.mxu0 0.0
  %4579 = vmatpush1.msra.mxu0 0.0
  %4580 = vmatprep.subr.mxu0 0.0
  %4581 = vmatpush1.msra.mxu0 0.0
  %4582 = vmatprep.subr.mxu0 0.0
  %4583 = vmatpush1.msra.mxu0 0.0
  %4584 = vmatprep.subr.mxu0 0.0
  %4585 = vmatpush1.msra.mxu0 0.0
  %4586 = vmatprep.subr.mxu0 0.0
  %4587 = vmatpush1.msra.mxu0 0.0
  %4588 = vmatprep.subr.mxu0 0.0
  %4589 = vmatpush1.msra.mxu0 0.0
  %4590 = vmatprep.subr.mxu0 0.0
  %4591 = vmatpush1.msra.mxu0 0.0
  %4592 = vmatprep.subr.mxu0 0.0
  %4593 = vmatpush1.msra.mxu0 0.0
  %4594 = vmatprep.subr.mxu0 0.0
  %4595 = vmatpush1.msra.mxu0 0.0
  %4596 = vmatprep.mubr.f32.mxu0 0.0
  %4597 = vmatmul.mubr.f32.gmra.mrb[0].mxu0 %v4485
  %v4598 = vpop.f32.mrb[0].mxu0
  %v4599 = vadd.f32 %v4483, %v4598
  %v4600 = vpop.f32.mrb[0].mxu0
  %4601 = vmatprep.mubr.f32.mxu0 0.0
  %4602 = vmatmul.mubr.f32.gmra.mrb[0].mxu0 %v4488
  %v4603 = vpop.f32.mrb[0].mxu0
  %v4604 = vadd.f32 %v4483, %v4603
  %v4605 = vpop.f32.mrb[0].mxu0
  %4606 = vmatprep.mubr.f32.mxu0 0.0
  %4607 = vmatmul.mubr.f32.gmra.mrb[0].mxu0 %v4491
  %v4608 = vpop.f32.mrb[0].mxu0
  %v4609 = vadd.f32 %v4483, %v4608
  %v4610 = vpop.f32.mrb[0].mxu0
  %4611 = vmatprep.mubr.f32.mxu0 0.0
  %4612 = vmatmul.mubr.f32.gmra.mrb[0].mxu0 %v4494
  %v4613 = vpop.f32.mrb[0].mxu0
  %v4614 = vadd.f32 %v4483, %v4613
  %v4615 = vpop.f32.mrb[0].mxu0
  %4616 = vmatprep.mubr.f32.mxu0 0.0
  %4617 = vmatmul.mubr.f32.gmra.mrb[0].mxu0 %v4497
  %v4618 = vpop.f32.mrb[0].mxu0
  %v4619 = vadd.f32 %v4483, %v4618
  %v4620 = vpop.f32.mrb[0].mxu0
  %4621 = vmatprep.mubr.f32.mxu0 0.0
  %4622 = vmatmul.mubr.f32.gmra.mrb[0].mxu0 %v4500
  %v4623 = vpop.f32.mrb[0].mxu0
  %v4624 = vadd.f32 %v4483, %v4623
  %v4625 = vpop.f32.mrb[0].mxu0
  %4626 = vmatprep.mubr.f32.mxu0 0.0
  %4627 = vmatmul.mubr.f32.gmra.mrb[0].mxu0 %v4503
  %v4628 = vpop.f32.mrb[0].mxu0
  %v4629 = vadd.f32 %v4483, %v4628
  %v4630 = vpop.f32.mrb[0].mxu0
  %4631 = vmatprep.mubr.f32.mxu0 0.0
  %4632 = vmatmul.mubr.f32.gmra.mrb[0].mxu0 %v4506
  %v4633 = vpop.f32.mrb[0].mxu0
  %v4634 = vadd.f32 %v4483, %v4633
  %v4635 = vpop.f32.mrb[0].mxu0
  %4636 = vmatprep.mubr.f32.mxu0 0.0
  %4637 = vmatmul.mubr.f32.gmra.mrb[0].mxu0 %v4509
  %v4638 = vpop.f32.mrb[0].mxu0
  %v4639 = vadd.f32 %v4483, %v4638
  %v4640 = vpop.f32.mrb[0].mxu0
  %4641 = vmatprep.mubr.f32.mxu0 0.0
  %4642 = vmatmul.mubr.f32.gmra.mrb[0].mxu0 %v4512
  %v4643 = vpop.f32.mrb[0].mxu0
  %v4644 = vadd.f32 %v4483, %v4643
  %v4645 = vpop.f32.mrb[0].mxu0
  %4646 = vmatprep.mubr.f32.mxu0 0.0
  %4647 = vmatmul.mubr.f32.gmra.mrb[0].mxu0 %v4515
  %v4648 = vpop.f32.mrb[0].mxu0
  %v4649 = vadd.f32 %v4483, %v4648
  %v4650 = vpop.f32.mrb[0].mxu0
  %4651 = vmatprep.mubr.f32.mxu0 0.0
  %4652 = vmatmul.mubr.f32.gmra.mrb[0].mxu0 %v4518
  %v4653 = vpop.f32.mrb[0].mxu0
  %v4654 = vadd.f32 %v4483, %v4653
  %v4655 = vpop.f32.mrb[0].mxu0
  %4656 = vmatprep.mubr.f32.mxu0 0.0
  %4657 = vmatmul.mubr.f32.gmra.mrb[0].mxu0 %v4521
  %v4658 = vpop.f32.mrb[0].mxu0
  %v4659 = vadd.f32 %v4483, %v4658
  %v4660 = vpop.f32.mrb[0].mxu0
  %4661 = vmatprep.mubr.f32.mxu0 0.0
  %4662 = vmatmul.mubr.f32.gmra.mrb[0].mxu0 %v4524
  %v4663 = vpop.f32.mrb[0].mxu0
  %v4664 = vadd.f32 %v4483, %v4663
  %v4665 = vpop.f32.mrb[0].mxu0
  %4666 = vmatprep.mubr.f32.mxu0 0.0
  %4667 = vmatmul.mubr.f32.gmra.mrb[0].mxu0 %v4527
  %v4668 = vpop.f32.mrb[0].mxu0
  %v4669 = vadd.f32 %v4483, %v4668
  %v4670 = vpop.f32.mrb[0].mxu0
  %4671 = vmatprep.mubr.f32.mxu0 0.0
  %4672 = vmatmul.mubr.f32.gmra.mrb[0].mxu0 %v4530
  %v4673 = vpop.f32.mrb[0].mxu0
  %v4674 = vadd.f32 %v4483, %v4673
  %v4675 = vpop.f32.mrb[0].mxu0
  %4676 = vdwg.mxu0
  %v4677 = vmul.f32 %v4599, 0.5
  %v4678 = vmul.f32 %v4604, 0.5
  %v4679 = vmul.f32 %v4609, 0.5
  %v4680 = vmul.f32 %v4614, 0.5
  %v4681 = vmul.f32 %v4619, 0.5
  %v4682 = vmul.f32 %v4624, 0.5
  %v4683 = vmul.f32 %v4629, 0.5
  %v4684 = vmul.f32 %v4634, 0.5
  %v4685 = vmul.f32 %v4639, 0.5
  %v4686 = vmul.f32 %v4644, 0.5
  %v4687 = vmul.f32 %v4649, 0.5
  %v4688 = vmul.f32 %v4654, 0.5
  %v4689 = vmul.f32 %v4659, 0.5
  %v4690 = vmul.f32 %v4664, 0.5
  %v4691 = vmul.f32 %v4669, 0.5
  %v4692 = vmul.f32 %v4674, 0.5
  %v4693 = vmul.f32 %v4599, 0.70710677
  %v4694 = vmul.f32 %v4604, 0.70710677
  %v4695 = vmul.f32 %v4609, 0.70710677
  %v4696 = vmul.f32 %v4614, 0.70710677
  %v4697 = vmul.f32 %v4619, 0.70710677
  %v4698 = vmul.f32 %v4624, 0.70710677
  %v4699 = vmul.f32 %v4629, 0.70710677
  %v4700 = vmul.f32 %v4634, 0.70710677
  %v4701 = vmul.f32 %v4639, 0.70710677
  %v4702 = vmul.f32 %v4644, 0.70710677
  %v4703 = vmul.f32 %v4649, 0.70710677
  %v4704 = vmul.f32 %v4654, 0.70710677
  %v4705 = vmul.f32 %v4659, 0.70710677
  %v4706 = vmul.f32 %v4664, 0.70710677
  %v4707 = vmul.f32 %v4669, 0.70710677
  %v4708 = vmul.f32 %v4674, 0.70710677
  %v4709 = verf.f32.pop %v4693
  %v4710 = verf.f32.pop %v4694
  %v4711 = verf.f32.pop %v4695
  %v4712 = verf.f32.pop %v4696
  %v4713 = verf.f32.pop %v4697
  %v4714 = verf.f32.pop %v4698
  %v4715 = verf.f32.pop %v4699
  %v4716 = verf.f32.pop %v4700
  %v4717 = verf.f32.pop %v4701
  %v4718 = verf.f32.pop %v4702
  %v4719 = verf.f32.pop %v4703
  %v4720 = verf.f32.pop %v4704
  %v4721 = verf.f32.pop %v4705
  %v4722 = verf.f32.pop %v4706
  %v4723 = verf.f32.pop %v4707
  %v4724 = verf.f32.pop %v4708
  %v4725 = vadd.f32 %v4709, 1.0
  %v4726 = vadd.f32 %v4710, 1.0
  %v4727 = vadd.f32 %v4711, 1.0
  %v4728 = vadd.f32 %v4712, 1.0
  %v4729 = vadd.f32 %v4713, 1.0
  %v4730 = vadd.f32 %v4714, 1.0
  %v4731 = vadd.f32 %v4715, 1.0
  %v4732 = vadd.f32 %v4716, 1.0
  %v4733 = vadd.f32 %v4717, 1.0
  %v4734 = vadd.f32 %v4718, 1.0
  %v4735 = vadd.f32 %v4719, 1.0
  %v4736 = vadd.f32 %v4720, 1.0
  %v4737 = vadd.f32 %v4721, 1.0
  %v4738 = vadd.f32 %v4722, 1.0
  %v4739 = vadd.f32 %v4723, 1.0
  %v4740 = vadd.f32 %v4724, 1.0
  %v4741 = vmul.f32 %v4677, %v4725
  %v4742 = vmul.f32 %v4678, %v4726
  %v4743 = vmul.f32 %v4679, %v4727
  %v4744 = vmul.f32 %v4680, %v4728
  %v4745 = vmul.f32 %v4681, %v4729
  %v4746 = vmul.f32 %v4682, %v4730
  %v4747 = vmul.f32 %v4683, %v4731
  %v4748 = vmul.f32 %v4684, %v4732
  %v4749 = vmul.f32 %v4685, %v4733
  %v4750 = vmul.f32 %v4686, %v4734
  %v4751 = vmul.f32 %v4687, %v4735
  %v4752 = vmul.f32 %v4688, %v4736
  %v4753 = vmul.f32 %v4689, %v4737
  %v4754 = vmul.f32 %v4690, %v4738
  %v4755 = vmul.f32 %v4691, %v4739
  %v4756 = vmul.f32 %v4692, %v4740
  %v4757 = vld [vmem:[%s5] sm:$0xff]
  %v4758 = vld [vmem:[%s5 + $0x8] sm:$0xff]
  %v4759 = vld [vmem:[%s5 + $0x10] sm:$0xff]
  %v4760 = vld [vmem:[%s5 + $0x18] sm:$0xff]
  %v4761 = vlaneseq
  %v4762 = vshrl.u32 %v4761, 7
  %v4763 = vsub.s32 0, %v4762
  %v4764 = vrot.slane %v32, %v4763
  %v4766 = vsel %vm49, %v4741, 0
  %v4769 = vsel %vm49, %v4742, 0
  %v4772 = vsel %vm49, %v4743, 0
  %v4775 = vsel %vm49, %v4744, 0
  %v4778 = vsel %vm49, %v4745, 0
  %v4781 = vsel %vm49, %v4746, 0
  %v4784 = vsel %vm49, %v4747, 0
  %v4787 = vsel %vm49, %v4748, 0
  %v4790 = vsel %vm49, %v4749, 0
  %v4793 = vsel %vm49, %v4750, 0
  %v4796 = vsel %vm49, %v4751, 0
  %v4799 = vsel %vm49, %v4752, 0
  %v4802 = vsel %vm49, %v4753, 0
  %v4805 = vsel %vm49, %v4754, 0
  %v4808 = vsel %vm49, %v4755, 0
  %v4811 = vsel %vm49, %v4756, 0
  %4813 = vmatprep.subr.mxu0 0.0
  %4814 = vmatpush1.msra.mxu0 %v4757
  %4815 = vmatprep.subr.mxu0 0.0
  %4816 = vmatpush1.msra.mxu0 %v4758
  %4817 = vmatprep.subr.mxu0 0.0
  %4818 = vmatpush1.msra.mxu0 %v4759
  %4819 = vmatprep.subr.mxu0 0.0
  %4820 = vmatpush1.msra.mxu0 %v4760
  %4821 = vmatprep.subr.mxu0 0.0
  %4822 = vmatpush1.msra.mxu0 0.0
  %4823 = vmatprep.subr.mxu0 0.0
  %4824 = vmatpush1.msra.mxu0 0.0
  %4825 = vmatprep.subr.mxu0 0.0
  %4826 = vmatpush1.msra.mxu0 0.0
  %4827 = vmatprep.subr.mxu0 0.0
  %4828 = vmatpush1.msra.mxu0 0.0
  %4829 = vmatprep.subr.mxu0 0.0
  %4830 = vmatpush1.msra.mxu0 0.0
  %4831 = vmatprep.subr.mxu0 0.0
  %4832 = vmatpush1.msra.mxu0 0.0
  %4833 = vmatprep.subr.mxu0 0.0
  %4834 = vmatpush1.msra.mxu0 0.0
  %4835 = vmatprep.subr.mxu0 0.0
  %4836 = vmatpush1.msra.mxu0 0.0
  %4837 = vmatprep.subr.mxu0 0.0
  %4838 = vmatpush1.msra.mxu0 0.0
  %4839 = vmatprep.subr.mxu0 0.0
  %4840 = vmatpush1.msra.mxu0 0.0
  %4841 = vmatprep.subr.mxu0 0.0
  %4842 = vmatpush1.msra.mxu0 0.0
  %4843 = vmatprep.subr.mxu0 0.0
  %4844 = vmatpush1.msra.mxu0 0.0
  %4845 = vmatprep.subr.mxu0 0.0
  %4846 = vmatpush1.msra.mxu0 0.0
  %4847 = vmatprep.subr.mxu0 0.0
  %4848 = vmatpush1.msra.mxu0 0.0
  %4849 = vmatprep.subr.mxu0 0.0
  %4850 = vmatpush1.msra.mxu0 0.0
  %4851 = vmatprep.subr.mxu0 0.0
  %4852 = vmatpush1.msra.mxu0 0.0
  %4853 = vmatprep.subr.mxu0 0.0
  %4854 = vmatpush1.msra.mxu0 0.0
  %4855 = vmatprep.subr.mxu0 0.0
  %4856 = vmatpush1.msra.mxu0 0.0
  %4857 = vmatprep.subr.mxu0 0.0
  %4858 = vmatpush1.msra.mxu0 0.0
  %4859 = vmatprep.subr.mxu0 0.0
  %4860 = vmatpush1.msra.mxu0 0.0
  %4861 = vmatprep.subr.mxu0 0.0
  %4862 = vmatpush1.msra.mxu0 0.0
  %4863 = vmatprep.subr.mxu0 0.0
  %4864 = vmatpush1.msra.mxu0 0.0
  %4865 = vmatprep.subr.mxu0 0.0
  %4866 = vmatpush1.msra.mxu0 0.0
  %4867 = vmatprep.subr.mxu0 0.0
  %4868 = vmatpush1.msra.mxu0 0.0
  %4869 = vmatprep.subr.mxu0 0.0
  %4870 = vmatpush1.msra.mxu0 0.0
  %4871 = vmatprep.subr.mxu0 0.0
  %4872 = vmatpush1.msra.mxu0 0.0
  %4873 = vmatprep.subr.mxu0 0.0
  %4874 = vmatpush1.msra.mxu0 0.0
  %4875 = vmatprep.subr.mxu0 0.0
  %4876 = vmatpush1.msra.mxu0 0.0
  %4877 = vmatprep.mubr.f32.mxu0 0.0
  %4878 = vmatmul.mubr.f32.gmra.mrb[0].mxu0 %v4766
  %v4879 = vpop.f32.mrb[0].mxu0
  %v4880 = vadd.f32 %v4764, %v4879
  %v4881 = vpop.f32.mrb[0].mxu0
  %4882 = vmatprep.mubr.f32.mxu0 0.0
  %4883 = vmatmul.mubr.f32.gmra.mrb[0].mxu0 %v4769
  %v4884 = vpop.f32.mrb[0].mxu0
  %v4885 = vadd.f32 %v4764, %v4884
  %v4886 = vpop.f32.mrb[0].mxu0
  %4887 = vmatprep.mubr.f32.mxu0 0.0
  %4888 = vmatmul.mubr.f32.gmra.mrb[0].mxu0 %v4772
  %v4889 = vpop.f32.mrb[0].mxu0
  %v4890 = vadd.f32 %v4764, %v4889
  %v4891 = vpop.f32.mrb[0].mxu0
  %4892 = vmatprep.mubr.f32.mxu0 0.0
  %4893 = vmatmul.mubr.f32.gmra.mrb[0].mxu0 %v4775
  %v4894 = vpop.f32.mrb[0].mxu0
  %v4895 = vadd.f32 %v4764, %v4894
  %v4896 = vpop.f32.mrb[0].mxu0
  %4897 = vmatprep.mubr.f32.mxu0 0.0
  %4898 = vmatmul.mubr.f32.gmra.mrb[0].mxu0 %v4778
  %v4899 = vpop.f32.mrb[0].mxu0
  %v4900 = vadd.f32 %v4764, %v4899
  %v4901 = vpop.f32.mrb[0].mxu0
  %4902 = vmatprep.mubr.f32.mxu0 0.0
  %4903 = vmatmul.mubr.f32.gmra.mrb[0].mxu0 %v4781
  %v4904 = vpop.f32.mrb[0].mxu0
  %v4905 = vadd.f32 %v4764, %v4904
  %v4906 = vpop.f32.mrb[0].mxu0
  %4907 = vmatprep.mubr.f32.mxu0 0.0
  %4908 = vmatmul.mubr.f32.gmra.mrb[0].mxu0 %v4784
  %v4909 = vpop.f32.mrb[0].mxu0
  %v4910 = vadd.f32 %v4764, %v4909
  %v4911 = vpop.f32.mrb[0].mxu0
  %4912 = vmatprep.mubr.f32.mxu0 0.0
  %4913 = vmatmul.mubr.f32.gmra.mrb[0].mxu0 %v4787
  %v4914 = vpop.f32.mrb[0].mxu0
  %v4915 = vadd.f32 %v4764, %v4914
  %v4916 = vpop.f32.mrb[0].mxu0
  %4917 = vmatprep.mubr.f32.mxu0 0.0
  %4918 = vmatmul.mubr.f32.gmra.mrb[0].mxu0 %v4790
  %v4919 = vpop.f32.mrb[0].mxu0
  %v4920 = vadd.f32 %v4764, %v4919
  %v4921 = vpop.f32.mrb[0].mxu0
  %4922 = vmatprep.mubr.f32.mxu0 0.0
  %4923 = vmatmul.mubr.f32.gmra.mrb[0].mxu0 %v4793
  %v4924 = vpop.f32.mrb[0].mxu0
  %v4925 = vadd.f32 %v4764, %v4924
  %v4926 = vpop.f32.mrb[0].mxu0
  %4927 = vmatprep.mubr.f32.mxu0 0.0
  %4928 = vmatmul.mubr.f32.gmra.mrb[0].mxu0 %v4796
  %v4929 = vpop.f32.mrb[0].mxu0
  %v4930 = vadd.f32 %v4764, %v4929
  %v4931 = vpop.f32.mrb[0].mxu0
  %4932 = vmatprep.mubr.f32.mxu0 0.0
  %4933 = vmatmul.mubr.f32.gmra.mrb[0].mxu0 %v4799
  %v4934 = vpop.f32.mrb[0].mxu0
  %v4935 = vadd.f32 %v4764, %v4934
  %v4936 = vpop.f32.mrb[0].mxu0
  %4937 = vmatprep.mubr.f32.mxu0 0.0
  %4938 = vmatmul.mubr.f32.gmra.mrb[0].mxu0 %v4802
  %v4939 = vpop.f32.mrb[0].mxu0
  %v4940 = vadd.f32 %v4764, %v4939
  %v4941 = vpop.f32.mrb[0].mxu0
  %4942 = vmatprep.mubr.f32.mxu0 0.0
  %4943 = vmatmul.mubr.f32.gmra.mrb[0].mxu0 %v4805
  %v4944 = vpop.f32.mrb[0].mxu0
  %v4945 = vadd.f32 %v4764, %v4944
  %v4946 = vpop.f32.mrb[0].mxu0
  %4947 = vmatprep.mubr.f32.mxu0 0.0
  %4948 = vmatmul.mubr.f32.gmra.mrb[0].mxu0 %v4808
  %v4949 = vpop.f32.mrb[0].mxu0
  %v4950 = vadd.f32 %v4764, %v4949
  %v4951 = vpop.f32.mrb[0].mxu0
  %4952 = vmatprep.mubr.f32.mxu0 0.0
  %4953 = vmatmul.mubr.f32.gmra.mrb[0].mxu0 %v4811
  %v4954 = vpop.f32.mrb[0].mxu0
  %v4955 = vadd.f32 %v4764, %v4954
  %v4956 = vpop.f32.mrb[0].mxu0
  %4957 = vdwg.mxu0
  %v4958 = vadd.f32 %v4880, %v4212
  %v4959 = vadd.f32 %v4885, %v4213
  %v4960 = vadd.f32 %v4890, %v4214
  %v4961 = vadd.f32 %v4895, %v4215
  %v4962 = vadd.f32 %v4900, %v4216
  %v4963 = vadd.f32 %v4905, %v4217
  %v4964 = vadd.f32 %v4910, %v4218
  %v4965 = vadd.f32 %v4915, %v4219
  %v4966 = vadd.f32 %v4920, %v4220
  %v4967 = vadd.f32 %v4925, %v4221
  %v4968 = vadd.f32 %v4930, %v4222
  %v4969 = vadd.f32 %v4935, %v4223
  %v4970 = vadd.f32 %v4940, %v4224
  %v4971 = vadd.f32 %v4945, %v4225
  %v4972 = vadd.f32 %v4950, %v4226
  %v4973 = vadd.f32 %v4955, %v4227
  %4974 = vst.msk [vmem:[%s7] sm:$0xff] %vm49, %v4958
  %4975 = vst.msk [vmem:[%s7 + $0x8] sm:$0xff] %vm49, %v4959
  %4976 = vst.msk [vmem:[%s7 + $0x10] sm:$0xff] %vm49, %v4960
  %4977 = vst.msk [vmem:[%s7 + $0x18] sm:$0xff] %vm49, %v4961
  %4978 = vst.msk [vmem:[%s7 + $0x20] sm:$0xff] %vm49, %v4962
  %4979 = vst.msk [vmem:[%s7 + $0x28] sm:$0xff] %vm49, %v4963
  %4980 = vst.msk [vmem:[%s7 + $0x30] sm:$0xff] %vm49, %v4964
  %4981 = vst.msk [vmem:[%s7 + $0x38] sm:$0xff] %vm49, %v4965
  %4982 = vst.msk [vmem:[%s7 + $0x40] sm:$0xff] %vm49, %v4966
  %4983 = vst.msk [vmem:[%s7 + $0x48] sm:$0xff] %vm49, %v4967
  %4984 = vst.msk [vmem:[%s7 + $0x50] sm:$0xff] %vm49, %v4968
  %4985 = vst.msk [vmem:[%s7 + $0x58] sm:$0xff] %vm49, %v4969
  %4986 = vst.msk [vmem:[%s7 + $0x60] sm:$0xff] %vm49, %v4970
  %4987 = vst.msk [vmem:[%s7 + $0x68] sm:$0xff] %vm49, %v4971
  %4988 = vst.msk [vmem:[%s7 + $0x70] sm:$0xff] %vm49, %v4972
  %4989 = vst.msk [vmem:[%s7 + $0x78] sm:$0xff] %vm49, %v4973
  // Predicated region
  $region30: #{tpu_custom_call.1} parent=0 // pred_check
    _
  $region31: #{tpu_custom_call.1} parent=0 // pred_check_branch
    %4991 = sbr.rel (0) target = $region33
  $region32: #{tpu_custom_call.1} parent=0 // pred_region
    _
  $region33: #{tpu_custom_call.1} parent=0 // pred_fallthru
    _
  // Predicated region
  $region34: #{tpu_custom_call.1} parent=0 // pred_check
    _
  $region35: #{tpu_custom_call.1} parent=0 // pred_check_branch
    %4993 = sbr.rel (0) target = $region37
  $region36: #{tpu_custom_call.1} parent=0 // pred_region
    _
  $region37: #{tpu_custom_call.1} parent=0 // pred_fallthru
    _

</llo_original>
